<compile_context>
chip_gen: v7x
topology: tpu7x:2x2x1
jax: 0.10.0
libtpu: 0.0.40
codegen_flags: <defaults>
</compile_context>

<pallas_src>
import functools

import jax
import jax.numpy as jnp
from jax.experimental import pallas as pl
from jax.experimental.pallas import tpu as pltpu


# ----------------------------------------------------------------------------- #
# Small helpers
# ----------------------------------------------------------------------------- #
def _round_up(n, m):
    return ((n + m - 1) // m) * m


def _pad_to(x, rows, cols):
    pr, pc = rows - x.shape[0], cols - x.shape[1]
    if pr == 0 and pc == 0:
        return x
    return jnp.pad(x, ((0, pr), (0, pc)))


# ----------------------------------------------------------------------------- #
# Pallas kernels
# ----------------------------------------------------------------------------- #
def _matmul_bias_stats_kernel(a_ref, b_ref, bias_ref, o_ref, sum_ref, sq_ref,
                              *, relu, m_valid, tm):
    """out = (relu?)(A @ B + bias); also emits per-channel partial sum / sum-sq.

    A/B are bf16 (native MXU path), the accumulator and statistics are f32.
    The whole K dimension is resident in the block, so there is no K grid axis
    and no accumulator scratch.
    """
    acc = jnp.dot(a_ref[...], b_ref[...], preferred_element_type=jnp.float32)
    out = acc + bias_ref[...]
    if relu:
        out = jnp.maximum(out, 0.0)
    o_ref[...] = out.astype(o_ref.dtype)

    # Fused BatchNorm (training-mode) statistics: mask padded rows so they do
    # not pollute the channel sums (padded A rows are zero -> out == relu(bias)).
    if m_valid % tm != 0:
        row = pl.program_id(0) * tm + jax.lax.broadcasted_iota(
            jnp.int32, out.shape, 0)
        out = jnp.where(row < m_valid, out, 0.0)
    sum_ref[...] = jnp.sum(out, axis=0, keepdims=True)[None]
    sq_ref[...] = jnp.sum(out * out, axis=0, keepdims=True)[None]


def _channel_affine_kernel(x_ref, scale_ref, shift_ref, o_ref, *, relu_out):
    """y = x * scale + shift (+ optional ReLU); per-channel scale/shift in f32."""
    y = x_ref[...].astype(jnp.float32) * scale_ref[...] + shift_ref[...]
    if relu_out:
        y = jnp.maximum(y, 0.0)
    o_ref[...] = y.astype(o_ref.dtype)


# ----------------------------------------------------------------------------- #
# Pallas wrappers
# ----------------------------------------------------------------------------- #
def pallas_matmul_bias_stats(a, b, bias, *, relu, tm_max=512, tn=128):
    """C = (relu?)(A @ B + bias) plus per-channel sum / sum-of-squares of C.

    Returns the padded bf16 output (Mp, Np), (M, N), the f32 channel sums and
    sums-of-squares (length N), and the row tile tm (reused by the affine pass).
    """
    M, K = a.shape
    K2, N = b.shape
    assert K == K2
    Kp = _round_up(K, 128)
    Np = _round_up(N, tn)
    tm = min(tm_max, _round_up(M, 128))
    Mp = _round_up(M, tm)

    a_p = _pad_to(a.astype(jnp.bfloat16), Mp, Kp)
    b_p = _pad_to(b.astype(jnp.bfloat16), Kp, Np)
    bias_p = _pad_to(bias.astype(jnp.float32).reshape(1, -1), 1, Np)

    n_i, n_j = Mp // tm, Np // tn
    out, psum, psq = pl.pallas_call(
        functools.partial(_matmul_bias_stats_kernel,
                          relu=relu, m_valid=M, tm=tm),
        out_shape=(
            jax.ShapeDtypeStruct((Mp, Np), jnp.bfloat16),
            jax.ShapeDtypeStruct((n_i, 1, Np), jnp.float32),
            jax.ShapeDtypeStruct((n_i, 1, Np), jnp.float32),
        ),
        grid_spec=pltpu.PrefetchScalarGridSpec(
            num_scalar_prefetch=0,
            grid=(n_i, n_j),
            in_specs=[
                pl.BlockSpec((tm, Kp), lambda i, j: (i, 0)),
                pl.BlockSpec((Kp, tn), lambda i, j: (0, j)),
                pl.BlockSpec((1, tn), lambda i, j: (0, j)),
            ],
            out_specs=[
                pl.BlockSpec((tm, tn), lambda i, j: (i, j)),
                pl.BlockSpec((1, 1, tn), lambda i, j: (i, 0, j)),
                pl.BlockSpec((1, 1, tn), lambda i, j: (i, 0, j)),
            ],
        ),
        compiler_params=pltpu.CompilerParams(
            dimension_semantics=("parallel", "parallel")),
    )(a_p, b_p, bias_p)

    ch_sum = jnp.sum(psum[:, 0, :N], axis=0)
    ch_sq = jnp.sum(psq[:, 0, :N], axis=0)
    return out, (M, N), ch_sum, ch_sq, tm


def pallas_channel_affine(x_pad, scale, shift, *, relu_out, tr, tc=128):
    """y = x * scale + shift (+ ReLU) on an already-padded channel-last matrix."""
    Rp, Cp = x_pad.shape
    assert Rp % tr == 0 and Cp % tc == 0
    sc_p = _pad_to(scale.astype(jnp.float32).reshape(1, -1), 1, Cp)
    sh_p = _pad_to(shift.astype(jnp.float32).reshape(1, -1), 1, Cp)

    return pl.pallas_call(
        functools.partial(_channel_affine_kernel, relu_out=relu_out),
        out_shape=jax.ShapeDtypeStruct((Rp, Cp), jnp.bfloat16),
        grid_spec=pltpu.PrefetchScalarGridSpec(
            num_scalar_prefetch=0,
            grid=(Rp // tr, Cp // tc),
            in_specs=[
                pl.BlockSpec((tr, tc), lambda i, j: (i, j)),
                pl.BlockSpec((1, tc), lambda i, j: (0, j)),
                pl.BlockSpec((1, tc), lambda i, j: (0, j)),
            ],
            out_specs=pl.BlockSpec((tr, tc), lambda i, j: (i, j)),
        ),
        compiler_params=pltpu.CompilerParams(
            dimension_semantics=("parallel", "parallel")),
    )(x_pad, sc_p, sh_p)


def _matmul_bn_block(A, w2d, bias, gamma, beta, *, relu_before_bn, relu_after_bn,
                     eps=1e-5):
    """(relu?)(BN((relu?)(A @ w2d + bias))) with BN batch statistics (training mode)."""
    y_pad, (M, N), s1, s2, tm = pallas_matmul_bias_stats(
        A, w2d, bias, relu=relu_before_bn)
    mean = s1 / M
    var = jnp.maximum(s2 / M - mean * mean, 0.0)   # biased variance, as PyTorch BN
    scale = gamma * jax.lax.rsqrt(var + eps)
    shift = beta - mean * scale
    y_pad = pallas_channel_affine(y_pad, scale, shift, relu_out=relu_after_bn, tr=tm)
    return y_pad[:M, :N]


# ----------------------------------------------------------------------------- #
# JAX glue: channel-last im2col, 1D-conv branches, pooling
# ----------------------------------------------------------------------------- #
def im2col3d_cl(xcl):
    """channel-last x:[B,D,H,W,C] -> patches [B*OD*OH*OW, C*27] (k=3, s=2, p=1)."""
    B, D, H, W, C = xcl.shape
    OD, OH, OW = (D - 1) // 2 + 1, (H - 1) // 2 + 1, (W - 1) // 2 + 1
    xp = jnp.pad(xcl, ((0, 0), (1, 1), (1, 1), (1, 1), (0, 0)))
    pats = []
    for kd in range(3):
        for kh in range(3):
            for kw in range(3):
                pats.append(xp[:, kd:kd + 2 * OD:2, kh:kh + 2 * OH:2,
                               kw:kw + 2 * OW:2, :])
    p = jnp.stack(pats, axis=-1)                      # [B,OD,OH,OW,C,27]  (cols = (c,k))
    return p.reshape(B * OD * OH * OW, C * 27), (OD, OH, OW)


def conv3d_relu_bn(xcl, w, b, gamma, beta):
    """bn(relu(conv3d(x))) on a channel-last activation; returns channel-last bf16."""
    B = xcl.shape[0]
    Cout = w.shape[0]
    # TODO(synk): im2col patches are still materialized in HBM (27x, in bf16); streaming
    # the stride-2 taps from the padded activation inside the matmul grid would remove it.
    A, (OD, OH, OW) = im2col3d_cl(xcl.astype(jnp.bfloat16))
    y = _matmul_bn_block(A, w.reshape(Cout, -1).T, b, gamma, beta,
                         relu_before_bn=True, relu_after_bn=False)
    return y.reshape(B, OD, OH, OW, Cout)


def conv1d_bn_relu_branch(ucl, w, b, gamma, beta):
    """relu(bn(conv1d(.))) along the second-to-last axis of a channel-last tensor.

    ucl: [B, R1, R2, L, C] (conv over L, k=3, pad=1).  Returns [B*R1*R2, Cout, L]."""
    B, R1, R2, L, C = ucl.shape
    Cout = w.shape[0]
    xp = jnp.pad(ucl.astype(jnp.bfloat16), ((0, 0), (0, 0), (0, 0), (1, 1), (0, 0)))
    pats = jnp.stack([xp[:, :, :, k:k + L, :] for k in range(3)], axis=-1)
    A = pats.reshape(B * R1 * R2 * L, C * 3)                    # cols = (c, k)
    y = _matmul_bn_block(A, w.reshape(Cout, -1).T, b, gamma, beta,
                         relu_before_bn=False, relu_after_bn=True)
    # The module's flat `.view(B,128,D,H,W)` expects a contiguous [N, Cout, L] buffer.
    return jnp.transpose(y.reshape(B * R1 * R2, L, Cout), (0, 2, 1))


def maxpool3d_2(x):
    # TODO(synk): the 3-way branch add + 2x2x2 maxpool is left to XLA (elementwise +
    # window-reduce fuse there); a dedicated Pallas kernel would save one more HBM pass.
    B, C, D, H, W = x.shape
    return x.reshape(B, C, D // 2, 2, H // 2, 2, W // 2, 2).max(axis=(3, 5, 7))


# ----------------------------------------------------------------------------- #
# Full forward pass
# ----------------------------------------------------------------------------- #
def forward(params, x):
    B = x.shape[0]
    xcl = jnp.transpose(x, (0, 2, 3, 4, 1))           # NCDHW -> channel-last (3 ch, cheap)

    # First / second conv blocks: bn(relu(conv3d(.))), kept channel-last between blocks.
    out = conv3d_relu_bn(xcl, params['conv1_w'], params['conv1_b'],
                         params['bn1_g'], params['bn1_b'])
    out = conv3d_relu_bn(out, params['conv2_w'], params['conv2_b'],
                         params['bn2_g'], params['bn2_b'])

    def tri_branch(ucl, pre):
        """Three directional conv1d branches of one block; ucl is channel-last."""
        Bq, S1, S2, S3, _ = ucl.shape
        shp = (Bq, 128, S1, S2, S3)

        def run(u_t, name):
            y = conv1d_bn_relu_branch(u_t,
                                      params[f'{pre}_{name}_w'],
                                      params[f'{pre}_{name}_b'],
                                      params[f'bn{pre[4:]}_{name}_g'],
                                      params[f'bn{pre[4:]}_{name}_b'])
            return y.reshape(shp)                       # flat re-view, as in the module

        o = run(ucl, 'h')                                       # permute(0,2,3,1,4)
        o = o + run(jnp.transpose(ucl, (0, 1, 3, 2, 4)), 'w')   # permute(0,2,4,1,3)
        o = o + run(jnp.transpose(ucl, (0, 2, 3, 1, 4)), 'l')   # permute(0,3,4,1,2)
        return o

    # Third conv block: branches consume the channel-last conv2 output directly.
    out2 = tri_branch(out, 'conv3')                     # [B,128,D2,H2,W2] flat-view layout
    # F.relu before maxpool is a no-op (sum of already-ReLU'd branches is >= 0).
    out = maxpool3d_2(out2)

    # Fourth conv block: input is in the module's NCDHW flat-view layout; go
    # channel-last once, then branch.
    ucl4 = jnp.transpose(out, (0, 2, 3, 4, 1))
    out2 = tri_branch(ucl4, 'conv4')
    out = maxpool3d_2(out2)

    # Classification head: N=1 matmul is bandwidth-bound -> plain XLA dot.
    flat = out.reshape(B, -1).astype(jnp.float32)
    logits = flat @ params['fc_w'].T.astype(jnp.float32) + params['fc_b']
    return jax.nn.sigmoid(logits)


# ----------------------------------------------------------------------------- #
# Deterministic parameter init
# ----------------------------------------------------------------------------- #
def init_params(key, fc_in):
    ks = jax.random.split(key, 16)

    def w(k, shape, fan_in):
        return jax.random.normal(k, shape, jnp.float32) / jnp.sqrt(float(fan_in))

    p = {}
    p['conv1_w'] = w(ks[0], (64, 3, 3, 3, 3), 3 * 27)
    p['conv1_b'] = jnp.zeros((64,), jnp.float32)
    p['conv2_w'] = w(ks[1], (64, 64, 3, 3, 3), 64 * 27)
    p['conv2_b'] = jnp.zeros((64,), jnp.float32)
    for i, name in enumerate(['_h', '_w', '_l']):
        p['conv3' + name + '_w'] = w(ks[2 + i], (128, 64, 3), 64 * 3)
        p['conv3' + name + '_b'] = jnp.zeros((128,), jnp.float32)
        p['conv4' + name + '_w'] = w(ks[5 + i], (128, 128, 3), 128 * 3)
        p['conv4' + name + '_b'] = jnp.zeros((128,), jnp.float32)
    for bn, c in [('bn1', 64), ('bn2', 64),
                  ('bn3_h', 128), ('bn3_w', 128), ('bn3_l', 128),
                  ('bn4_h', 128), ('bn4_w', 128), ('bn4_l', 128)]:
        p[bn + '_g'] = jnp.ones((c,), jnp.float32)
        p[bn + '_b'] = jnp.zeros((c,), jnp.float32)
    p['fc_w'] = w(ks[10], (1, fc_in), fc_in)
    p['fc_b'] = jnp.zeros((1,), jnp.float32)
    return p


# ----------------------------------------------------------------------------- #
if __name__ == "__main__":
    key = jax.random.PRNGKey(0)
    k_param, k_x = jax.random.split(key)

    # Small demo volume (original module assumes 240x224x224; semantics are identical).
    B, D0, H0, W0 = 2, 16, 16, 16
    fc_in = 128 * (D0 // 16) * (H0 // 16) * (W0 // 16)

    params = init_params(k_param, fc_in)
    x = jax.random.normal(k_x, (B, 3, D0, H0, W0), jnp.float32)

    fwd = jax.jit(forward)
    y = fwd(params, x)
    jax.block_until_ready(y)

    assert y.shape == (B, 1), y.shape
    assert bool(jnp.all(jnp.isfinite(y))) and bool(jnp.all((y >= 0) & (y <= 1)))
    print("KERNEL_OK")
</pallas_src>

<mosaic_0001>
module attributes {stable_mosaic.version = 11 : i64} {
  func.func @_channel_affine_kernel(%arg0: i32, %arg1: i32, %arg2: memref<512x128xbf16, #tpu.memory_space<vmem>>, %arg3: memref<1x128xf32, #tpu.memory_space<vmem>>, %arg4: memref<1x128xf32, #tpu.memory_space<vmem>>, %arg5: memref<512x128xbf16, #tpu.memory_space<vmem>>) attributes {dimension_semantics = [#tpu.dimension_semantics<parallel>, #tpu.dimension_semantics<parallel>], iteration_bounds = array<i64: 2, 1>, scalar_prefetch = 0 : i64, scratch_operands = 0 : i64, tpu.core_type = #tpu.core_type<tc>, window_params = [{transform_indices = @transform_0, window_bounds = array<i64: 512, 128>}, {transform_indices = @transform_1, window_bounds = array<i64: 1, 128>}, {transform_indices = @transform_2, window_bounds = array<i64: 1, 128>}, {transform_indices = @transform_3, window_bounds = array<i64: 512, 128>}]} {
    %c0 = arith.constant 0 : index
    %c0_0 = arith.constant 0 : index
    %0 = vector.load %arg2[%c0, %c0_0] : memref<512x128xbf16, #tpu.memory_space<vmem>>, vector<512x128xbf16>
    %1 = arith.extf %0 : vector<512x128xbf16> to vector<512x128xf32>
    %c0_1 = arith.constant 0 : index
    %c0_2 = arith.constant 0 : index
    %2 = vector.load %arg3[%c0_1, %c0_2] : memref<1x128xf32, #tpu.memory_space<vmem>>, vector<1x128xf32>
    %3 = vector.broadcast %2 : vector<1x128xf32> to vector<512x128xf32>
    %4 = arith.mulf %1, %3 : vector<512x128xf32>
    %c0_3 = arith.constant 0 : index
    %c0_4 = arith.constant 0 : index
    %5 = vector.load %arg4[%c0_3, %c0_4] : memref<1x128xf32, #tpu.memory_space<vmem>>, vector<1x128xf32>
    %6 = vector.broadcast %5 : vector<1x128xf32> to vector<512x128xf32>
    %7 = arith.addf %4, %6 : vector<512x128xf32>
    %8 = arith.truncf %7 : vector<512x128xf32> to vector<512x128xbf16>
    %c0_5 = arith.constant 0 : index
    %c0_6 = arith.constant 0 : index
    %9 = vector.load %arg5[%c0_5, %c0_6] : memref<512x128xbf16, #tpu.memory_space<vmem>>, vector<512x128xbf16>
    tpu.vector_store %arg5[%c0_5, %c0_6], %8 {strides = array<i32>} : memref<512x128xbf16, #tpu.memory_space<vmem>>, vector<512x128xbf16>,
    return
  }
  func.func @transform_0(%arg0: i32, %arg1: i32) -> (i32, i32) {
    %c0_i32 = arith.constant 0 : i32
    return %arg0, %arg1 : i32, i32
  }
  func.func @transform_1(%arg0: i32, %arg1: i32) -> (i32, i32) {
    %c0_i32 = arith.constant 0 : i32
    %c0_i32_0 = arith.constant 0 : i32
    return %c0_i32, %arg1 : i32, i32
  }
  func.func @transform_2(%arg0: i32, %arg1: i32) -> (i32, i32) {
    %c0_i32 = arith.constant 0 : i32
    %c0_i32_0 = arith.constant 0 : i32
    return %c0_i32, %arg1 : i32, i32
  }
  func.func @transform_3(%arg0: i32, %arg1: i32) -> (i32, i32) {
    %c0_i32 = arith.constant 0 : i32
    return %arg0, %arg1 : i32, i32
  }
}

module attributes {stable_mosaic.version = 11 : i64} {
  func.func @_matmul_bias_stats_kernel(%arg0: i32, %arg1: i32, %arg2: memref<512x128xbf16, #tpu.memory_space<vmem>>, %arg3: memref<128x128xbf16, #tpu.memory_space<vmem>>, %arg4: memref<1x128xf32, #tpu.memory_space<vmem>>, %arg5: memref<512x128xbf16, #tpu.memory_space<vmem>>, %arg6: memref<1x1x128xf32, #tpu.memory_space<vmem>>, %arg7: memref<1x1x128xf32, #tpu.memory_space<vmem>>) attributes {dimension_semantics = [#tpu.dimension_semantics<parallel>, #tpu.dimension_semantics<parallel>], iteration_bounds = array<i64: 2, 1>, scalar_prefetch = 0 : i64, scratch_operands = 0 : i64, tpu.core_type = #tpu.core_type<tc>, window_params = [{transform_indices = @transform_0, window_bounds = array<i64: 512, 128>}, {transform_indices = @transform_1, window_bounds = array<i64: 128, 128>}, {transform_indices = @transform_2, window_bounds = array<i64: 1, 128>}, {transform_indices = @transform_3, window_bounds = array<i64: 512, 128>}, {transform_indices = @transform_4, window_bounds = array<i64: 1, 1, 128>}, {transform_indices = @transform_5, window_bounds = array<i64: 1, 1, 128>}]} {
    %c0 = arith.constant 0 : index
    %c0_0 = arith.constant 0 : index
    %0 = vector.load %arg2[%c0, %c0_0] : memref<512x128xbf16, #tpu.memory_space<vmem>>, vector<512x128xbf16>
    %c0_1 = arith.constant 0 : index
    %c0_2 = arith.constant 0 : index
    %1 = vector.load %arg3[%c0_1, %c0_2] : memref<128x128xbf16, #tpu.memory_space<vmem>>, vector<128x128xbf16>
    %cst = arith.constant dense<0.000000e+00> : vector<512x128xf32>
    %2 = tpu.matmul %0, %1, %cst {dimension_numbers = #tpu.dot_dimension_numbers<[1], [0], [0], [1], [0, 0, 1, 1], [], []>} : vector<512x128xbf16>, vector<128x128xbf16>, vector<512x128xf32> -> vector<512x128xf32>
    %c0_3 = arith.constant 0 : index
    %c0_4 = arith.constant 0 : index
    %3 = vector.load %arg4[%c0_3, %c0_4] : memref<1x128xf32, #tpu.memory_space<vmem>>, vector<1x128xf32>
    %4 = vector.broadcast %3 : vector<1x128xf32> to vector<512x128xf32>
    %5 = arith.addf %2, %4 : vector<512x128xf32>
    %cst_5 = arith.constant 0.000000e+00 : f32
    %6 = vector.broadcast %cst_5 : f32 to vector<512x128xf32>
    %7 = arith.maximumf %5, %6 : vector<512x128xf32>
    %8 = arith.truncf %7 : vector<512x128xf32> to vector<512x128xbf16>
    %c0_6 = arith.constant 0 : index
    %c0_7 = arith.constant 0 : index
    %9 = vector.load %arg5[%c0_6, %c0_7] : memref<512x128xbf16, #tpu.memory_space<vmem>>, vector<512x128xbf16>
    tpu.vector_store %arg5[%c0_6, %c0_7], %8 {strides = array<i32>} : memref<512x128xbf16, #tpu.memory_space<vmem>>, vector<512x128xbf16>,
    %cst_8 = arith.constant dense<0.000000e+00> : vector<128xf32>
    %10 = vector.multi_reduction <add>, %7, %cst_8 [0] : vector<512x128xf32> to vector<128xf32>
    %11 = vector.shape_cast %10 : vector<128xf32> to vector<1x128xf32>
    %12 = vector.shape_cast %11 : vector<1x128xf32> to vector<1x1x128xf32>
    %c0_9 = arith.constant 0 : index
    %c0_10 = arith.constant 0 : index
    %c0_11 = arith.constant 0 : index
    %13 = vector.load %arg6[%c0_9, %c0_10, %c0_11] : memref<1x1x128xf32, #tpu.memory_space<vmem>>, vector<1x1x128xf32>
    tpu.vector_store %arg6[%c0_9, %c0_10, %c0_11], %12 {strides = array<i32>} : memref<1x1x128xf32, #tpu.memory_space<vmem>>, vector<1x1x128xf32>,
    %14 = arith.mulf %7, %7 : vector<512x128xf32>
    %cst_12 = arith.constant dense<0.000000e+00> : vector<128xf32>
    %15 = vector.multi_reduction <add>, %14, %cst_12 [0] : vector<512x128xf32> to vector<128xf32>
    %16 = vector.shape_cast %15 : vector<128xf32> to vector<1x128xf32>
    %17 = vector.shape_cast %16 : vector<1x128xf32> to vector<1x1x128xf32>
    %c0_13 = arith.constant 0 : index
    %c0_14 = arith.constant 0 : index
    %c0_15 = arith.constant 0 : index
    %18 = vector.load %arg7[%c0_13, %c0_14, %c0_15] : memref<1x1x128xf32, #tpu.memory_space<vmem>>, vector<1x1x128xf32>
    tpu.vector_store %arg7[%c0_13, %c0_14, %c0_15], %17 {strides = array<i32>} : memref<1x1x128xf32, #tpu.memory_space<vmem>>, vector<1x1x128xf32>,
    return
  }
  func.func @transform_0(%arg0: i32, %arg1: i32) -> (i32, i32) {
    %c0_i32 = arith.constant 0 : i32
    %c0_i32_0 = arith.constant 0 : i32
    return %arg0, %c0_i32 : i32, i32
  }
  func.func @transform_1(%arg0: i32, %arg1: i32) -> (i32, i32) {
    %c0_i32 = arith.constant 0 : i32
    %c0_i32_0 = arith.constant 0 : i32
    return %c0_i32, %arg1 : i32, i32
  }
  func.func @transform_2(%arg0: i32, %arg1: i32) -> (i32, i32) {
    %c0_i32 = arith.constant 0 : i32
    %c0_i32_0 = arith.constant 0 : i32
    return %c0_i32, %arg1 : i32, i32
  }
  func.func @transform_3(%arg0: i32, %arg1: i32) -> (i32, i32) {
    %c0_i32 = arith.constant 0 : i32
    return %arg0, %arg1 : i32, i32
  }
  func.func @transform_4(%arg0: i32, %arg1: i32) -> (i32, i32, i32) {
    %c0_i32 = arith.constant 0 : i32
    %c0_i32_0 = arith.constant 0 : i32
    return %arg0, %c0_i32, %arg1 : i32, i32, i32
  }
  func.func @transform_5(%arg0: i32, %arg1: i32) -> (i32, i32, i32) {
    %c0_i32 = arith.constant 0 : i32
    %c0_i32_0 = arith.constant 0 : i32
    return %arg0, %c0_i32, %arg1 : i32, i32, i32
  }
}

module attributes {stable_mosaic.version = 11 : i64} {
  func.func @_matmul_bias_stats_kernel(%arg0: i32, %arg1: i32, %arg2: memref<128x1792xbf16, #tpu.memory_space<vmem>>, %arg3: memref<1792x128xbf16, #tpu.memory_space<vmem>>, %arg4: memref<1x128xf32, #tpu.memory_space<vmem>>, %arg5: memref<128x128xbf16, #tpu.memory_space<vmem>>, %arg6: memref<1x1x128xf32, #tpu.memory_space<vmem>>, %arg7: memref<1x1x128xf32, #tpu.memory_space<vmem>>) attributes {dimension_semantics = [#tpu.dimension_semantics<parallel>, #tpu.dimension_semantics<parallel>], iteration_bounds = array<i64: 1, 1>, scalar_prefetch = 0 : i64, scratch_operands = 0 : i64, tpu.core_type = #tpu.core_type<tc>, window_params = [{transform_indices = @transform_0, window_bounds = array<i64: 128, 1792>}, {transform_indices = @transform_1, window_bounds = array<i64: 1792, 128>}, {transform_indices = @transform_2, window_bounds = array<i64: 1, 128>}, {transform_indices = @transform_3, window_bounds = array<i64: 128, 128>}, {transform_indices = @transform_4, window_bounds = array<i64: 1, 1, 128>}, {transform_indices = @transform_5, window_bounds = array<i64: 1, 1, 128>}]} {
    %c0 = arith.constant 0 : index
    %c0_0 = arith.constant 0 : index
    %0 = vector.load %arg2[%c0, %c0_0] : memref<128x1792xbf16, #tpu.memory_space<vmem>>, vector<128x1792xbf16>
    %c0_1 = arith.constant 0 : index
    %c0_2 = arith.constant 0 : index
    %1 = vector.load %arg3[%c0_1, %c0_2] : memref<1792x128xbf16, #tpu.memory_space<vmem>>, vector<1792x128xbf16>
    %cst = arith.constant dense<0.000000e+00> : vector<128x128xf32>
    %2 = tpu.matmul %0, %1, %cst {dimension_numbers = #tpu.dot_dimension_numbers<[1], [0], [0], [1], [0, 0, 1, 1], [], []>} : vector<128x1792xbf16>, vector<1792x128xbf16>, vector<128x128xf32> -> vector<128x128xf32>
    %c0_3 = arith.constant 0 : index
    %c0_4 = arith.constant 0 : index
    %3 = vector.load %arg4[%c0_3, %c0_4] : memref<1x128xf32, #tpu.memory_space<vmem>>, vector<1x128xf32>
    %4 = vector.broadcast %3 : vector<1x128xf32> to vector<128x128xf32>
    %5 = arith.addf %2, %4 : vector<128x128xf32>
    %cst_5 = arith.constant 0.000000e+00 : f32
    %6 = vector.broadcast %cst_5 : f32 to vector<128x128xf32>
    %7 = arith.maximumf %5, %6 : vector<128x128xf32>
    %8 = arith.truncf %7 : vector<128x128xf32> to vector<128x128xbf16>
    %c0_6 = arith.constant 0 : index
    %c0_7 = arith.constant 0 : index
    %9 = vector.load %arg5[%c0_6, %c0_7] : memref<128x128xbf16, #tpu.memory_space<vmem>>, vector<128x128xbf16>
    tpu.vector_store %arg5[%c0_6, %c0_7], %8 {strides = array<i32>} : memref<128x128xbf16, #tpu.memory_space<vmem>>, vector<128x128xbf16>,
    %cst_8 = arith.constant dense<0.000000e+00> : vector<128xf32>
    %10 = vector.multi_reduction <add>, %7, %cst_8 [0] : vector<128x128xf32> to vector<128xf32>
    %11 = vector.shape_cast %10 : vector<128xf32> to vector<1x128xf32>
    %12 = vector.shape_cast %11 : vector<1x128xf32> to vector<1x1x128xf32>
    %c0_9 = arith.constant 0 : index
    %c0_10 = arith.constant 0 : index
    %c0_11 = arith.constant 0 : index
    %13 = vector.load %arg6[%c0_9, %c0_10, %c0_11] : memref<1x1x128xf32, #tpu.memory_space<vmem>>, vector<1x1x128xf32>
    tpu.vector_store %arg6[%c0_9, %c0_10, %c0_11], %12 {strides = array<i32>} : memref<1x1x128xf32, #tpu.memory_space<vmem>>, vector<1x1x128xf32>,
    %14 = arith.mulf %7, %7 : vector<128x128xf32>
    %cst_12 = arith.constant dense<0.000000e+00> : vector<128xf32>
    %15 = vector.multi_reduction <add>, %14, %cst_12 [0] : vector<128x128xf32> to vector<128xf32>
    %16 = vector.shape_cast %15 : vector<128xf32> to vector<1x128xf32>
    %17 = vector.shape_cast %16 : vector<1x128xf32> to vector<1x1x128xf32>
    %c0_13 = arith.constant 0 : index
    %c0_14 = arith.constant 0 : index
    %c0_15 = arith.constant 0 : index
    %18 = vector.load %arg7[%c0_13, %c0_14, %c0_15] : memref<1x1x128xf32, #tpu.memory_space<vmem>>, vector<1x1x128xf32>
    tpu.vector_store %arg7[%c0_13, %c0_14, %c0_15], %17 {strides = array<i32>} : memref<1x1x128xf32, #tpu.memory_space<vmem>>, vector<1x1x128xf32>,
    return
  }
  func.func @transform_0(%arg0: i32, %arg1: i32) -> (i32, i32) {
    %c0_i32 = arith.constant 0 : i32
    %c0_i32_0 = arith.constant 0 : i32
    return %arg0, %c0_i32 : i32, i32
  }
  func.func @transform_1(%arg0: i32, %arg1: i32) -> (i32, i32) {
    %c0_i32 = arith.constant 0 : i32
    %c0_i32_0 = arith.constant 0 : i32
    return %c0_i32, %arg1 : i32, i32
  }
  func.func @transform_2(%arg0: i32, %arg1: i32) -> (i32, i32) {
    %c0_i32 = arith.constant 0 : i32
    %c0_i32_0 = arith.constant 0 : i32
    return %c0_i32, %arg1 : i32, i32
  }
  func.func @transform_3(%arg0: i32, %arg1: i32) -> (i32, i32) {
    %c0_i32 = arith.constant 0 : i32
    return %arg0, %arg1 : i32, i32
  }
  func.func @transform_4(%arg0: i32, %arg1: i32) -> (i32, i32, i32) {
    %c0_i32 = arith.constant 0 : i32
    %c0_i32_0 = arith.constant 0 : i32
    return %arg0, %c0_i32, %arg1 : i32, i32, i32
  }
  func.func @transform_5(%arg0: i32, %arg1: i32) -> (i32, i32, i32) {
    %c0_i32 = arith.constant 0 : i32
    %c0_i32_0 = arith.constant 0 : i32
    return %arg0, %c0_i32, %arg1 : i32, i32, i32
  }
}

module attributes {stable_mosaic.version = 11 : i64} {
  func.func @_channel_affine_kernel(%arg0: i32, %arg1: i32, %arg2: memref<128x128xbf16, #tpu.memory_space<vmem>>, %arg3: memref<1x128xf32, #tpu.memory_space<vmem>>, %arg4: memref<1x128xf32, #tpu.memory_space<vmem>>, %arg5: memref<128x128xbf16, #tpu.memory_space<vmem>>) attributes {dimension_semantics = [#tpu.dimension_semantics<parallel>, #tpu.dimension_semantics<parallel>], iteration_bounds = array<i64: 1, 1>, scalar_prefetch = 0 : i64, scratch_operands = 0 : i64, tpu.core_type = #tpu.core_type<tc>, window_params = [{transform_indices = @transform_0, window_bounds = array<i64: 128, 128>}, {transform_indices = @transform_1, window_bounds = array<i64: 1, 128>}, {transform_indices = @transform_2, window_bounds = array<i64: 1, 128>}, {transform_indices = @transform_3, window_bounds = array<i64: 128, 128>}]} {
    %c0 = arith.constant 0 : index
    %c0_0 = arith.constant 0 : index
    %0 = vector.load %arg2[%c0, %c0_0] : memref<128x128xbf16, #tpu.memory_space<vmem>>, vector<128x128xbf16>
    %1 = arith.extf %0 : vector<128x128xbf16> to vector<128x128xf32>
    %c0_1 = arith.constant 0 : index
    %c0_2 = arith.constant 0 : index
    %2 = vector.load %arg3[%c0_1, %c0_2] : memref<1x128xf32, #tpu.memory_space<vmem>>, vector<1x128xf32>
    %3 = vector.broadcast %2 : vector<1x128xf32> to vector<128x128xf32>
    %4 = arith.mulf %1, %3 : vector<128x128xf32>
    %c0_3 = arith.constant 0 : index
    %c0_4 = arith.constant 0 : index
    %5 = vector.load %arg4[%c0_3, %c0_4] : memref<1x128xf32, #tpu.memory_space<vmem>>, vector<1x128xf32>
    %6 = vector.broadcast %5 : vector<1x128xf32> to vector<128x128xf32>
    %7 = arith.addf %4, %6 : vector<128x128xf32>
    %8 = arith.truncf %7 : vector<128x128xf32> to vector<128x128xbf16>
    %c0_5 = arith.constant 0 : index
    %c0_6 = arith.constant 0 : index
    %9 = vector.load %arg5[%c0_5, %c0_6] : memref<128x128xbf16, #tpu.memory_space<vmem>>, vector<128x128xbf16>
    tpu.vector_store %arg5[%c0_5, %c0_6], %8 {strides = array<i32>} : memref<128x128xbf16, #tpu.memory_space<vmem>>, vector<128x128xbf16>,
    return
  }
  func.func @transform_0(%arg0: i32, %arg1: i32) -> (i32, i32) {
    %c0_i32 = arith.constant 0 : i32
    return %arg0, %arg1 : i32, i32
  }
  func.func @transform_1(%arg0: i32, %arg1: i32) -> (i32, i32) {
    %c0_i32 = arith.constant 0 : i32
    %c0_i32_0 = arith.constant 0 : i32
    return %c0_i32, %arg1 : i32, i32
  }
  func.func @transform_2(%arg0: i32, %arg1: i32) -> (i32, i32) {
    %c0_i32 = arith.constant 0 : i32
    %c0_i32_0 = arith.constant 0 : i32
    return %c0_i32, %arg1 : i32, i32
  }
  func.func @transform_3(%arg0: i32, %arg1: i32) -> (i32, i32) {
    %c0_i32 = arith.constant 0 : i32
    return %arg0, %arg1 : i32, i32
  }
}

module attributes {stable_mosaic.version = 11 : i64} {
  func.func @_matmul_bias_stats_kernel(%arg0: i32, %arg1: i32, %arg2: memref<128x256xbf16, #tpu.memory_space<vmem>>, %arg3: memref<256x128xbf16, #tpu.memory_space<vmem>>, %arg4: memref<1x128xf32, #tpu.memory_space<vmem>>, %arg5: memref<128x128xbf16, #tpu.memory_space<vmem>>, %arg6: memref<1x1x128xf32, #tpu.memory_space<vmem>>, %arg7: memref<1x1x128xf32, #tpu.memory_space<vmem>>) attributes {dimension_semantics = [#tpu.dimension_semantics<parallel>, #tpu.dimension_semantics<parallel>], iteration_bounds = array<i64: 1, 1>, scalar_prefetch = 0 : i64, scratch_operands = 0 : i64, tpu.core_type = #tpu.core_type<tc>, window_params = [{transform_indices = @transform_0, window_bounds = array<i64: 128, 256>}, {transform_indices = @transform_1, window_bounds = array<i64: 256, 128>}, {transform_indices = @transform_2, window_bounds = array<i64: 1, 128>}, {transform_indices = @transform_3, window_bounds = array<i64: 128, 128>}, {transform_indices = @transform_4, window_bounds = array<i64: 1, 1, 128>}, {transform_indices = @transform_5, window_bounds = array<i64: 1, 1, 128>}]} {
    %c0 = arith.constant 0 : index
    %c0_0 = arith.constant 0 : index
    %0 = vector.load %arg2[%c0, %c0_0] : memref<128x256xbf16, #tpu.memory_space<vmem>>, vector<128x256xbf16>
    %c0_1 = arith.constant 0 : index
    %c0_2 = arith.constant 0 : index
    %1 = vector.load %arg3[%c0_1, %c0_2] : memref<256x128xbf16, #tpu.memory_space<vmem>>, vector<256x128xbf16>
    %cst = arith.constant dense<0.000000e+00> : vector<128x128xf32>
    %2 = tpu.matmul %0, %1, %cst {dimension_numbers = #tpu.dot_dimension_numbers<[1], [0], [0], [1], [0, 0, 1, 1], [], []>} : vector<128x256xbf16>, vector<256x128xbf16>, vector<128x128xf32> -> vector<128x128xf32>
    %c0_3 = arith.constant 0 : index
    %c0_4 = arith.constant 0 : index
    %3 = vector.load %arg4[%c0_3, %c0_4] : memref<1x128xf32, #tpu.memory_space<vmem>>, vector<1x128xf32>
    %4 = vector.broadcast %3 : vector<1x128xf32> to vector<128x128xf32>
    %5 = arith.addf %2, %4 : vector<128x128xf32>
    %6 = arith.truncf %5 : vector<128x128xf32> to vector<128x128xbf16>
    %c0_5 = arith.constant 0 : index
    %c0_6 = arith.constant 0 : index
    %7 = vector.load %arg5[%c0_5, %c0_6] : memref<128x128xbf16, #tpu.memory_space<vmem>>, vector<128x128xbf16>
    tpu.vector_store %arg5[%c0_5, %c0_6], %6 {strides = array<i32>} : memref<128x128xbf16, #tpu.memory_space<vmem>>, vector<128x128xbf16>,
    %cst_7 = arith.constant dense<0.000000e+00> : vector<128xf32>
    %8 = vector.multi_reduction <add>, %5, %cst_7 [0] : vector<128x128xf32> to vector<128xf32>
    %9 = vector.shape_cast %8 : vector<128xf32> to vector<1x128xf32>
    %10 = vector.shape_cast %9 : vector<1x128xf32> to vector<1x1x128xf32>
    %c0_8 = arith.constant 0 : index
    %c0_9 = arith.constant 0 : index
    %c0_10 = arith.constant 0 : index
    %11 = vector.load %arg6[%c0_8, %c0_9, %c0_10] : memref<1x1x128xf32, #tpu.memory_space<vmem>>, vector<1x1x128xf32>
    tpu.vector_store %arg6[%c0_8, %c0_9, %c0_10], %10 {strides = array<i32>} : memref<1x1x128xf32, #tpu.memory_space<vmem>>, vector<1x1x128xf32>,
    %12 = arith.mulf %5, %5 : vector<128x128xf32>
    %cst_11 = arith.constant dense<0.000000e+00> : vector<128xf32>
    %13 = vector.multi_reduction <add>, %12, %cst_11 [0] : vector<128x128xf32> to vector<128xf32>
    %14 = vector.shape_cast %13 : vector<128xf32> to vector<1x128xf32>
    %15 = vector.shape_cast %14 : vector<1x128xf32> to vector<1x1x128xf32>
    %c0_12 = arith.constant 0 : index
    %c0_13 = arith.constant 0 : index
    %c0_14 = arith.constant 0 : index
    %16 = vector.load %arg7[%c0_12, %c0_13, %c0_14] : memref<1x1x128xf32, #tpu.memory_space<vmem>>, vector<1x1x128xf32>
    tpu.vector_store %arg7[%c0_12, %c0_13, %c0_14], %15 {strides = array<i32>} : memref<1x1x128xf32, #tpu.memory_space<vmem>>, vector<1x1x128xf32>,
    return
  }
  func.func @transform_0(%arg0: i32, %arg1: i32) -> (i32, i32) {
    %c0_i32 = arith.constant 0 : i32
    %c0_i32_0 = arith.constant 0 : i32
    return %arg0, %c0_i32 : i32, i32
  }
  func.func @transform_1(%arg0: i32, %arg1: i32) -> (i32, i32) {
    %c0_i32 = arith.constant 0 : i32
    %c0_i32_0 = arith.constant 0 : i32
    return %c0_i32, %arg1 : i32, i32
  }
  func.func @transform_2(%arg0: i32, %arg1: i32) -> (i32, i32) {
    %c0_i32 = arith.constant 0 : i32
    %c0_i32_0 = arith.constant 0 : i32
    return %c0_i32, %arg1 : i32, i32
  }
  func.func @transform_3(%arg0: i32, %arg1: i32) -> (i32, i32) {
    %c0_i32 = arith.constant 0 : i32
    return %arg0, %arg1 : i32, i32
  }
  func.func @transform_4(%arg0: i32, %arg1: i32) -> (i32, i32, i32) {
    %c0_i32 = arith.constant 0 : i32
    %c0_i32_0 = arith.constant 0 : i32
    return %arg0, %c0_i32, %arg1 : i32, i32, i32
  }
  func.func @transform_5(%arg0: i32, %arg1: i32) -> (i32, i32, i32) {
    %c0_i32 = arith.constant 0 : i32
    %c0_i32_0 = arith.constant 0 : i32
    return %arg0, %c0_i32, %arg1 : i32, i32, i32
  }
}

module attributes {stable_mosaic.version = 11 : i64} {
  func.func @_channel_affine_kernel(%arg0: i32, %arg1: i32, %arg2: memref<128x128xbf16, #tpu.memory_space<vmem>>, %arg3: memref<1x128xf32, #tpu.memory_space<vmem>>, %arg4: memref<1x128xf32, #tpu.memory_space<vmem>>, %arg5: memref<128x128xbf16, #tpu.memory_space<vmem>>) attributes {dimension_semantics = [#tpu.dimension_semantics<parallel>, #tpu.dimension_semantics<parallel>], iteration_bounds = array<i64: 1, 1>, scalar_prefetch = 0 : i64, scratch_operands = 0 : i64, tpu.core_type = #tpu.core_type<tc>, window_params = [{transform_indices = @transform_0, window_bounds = array<i64: 128, 128>}, {transform_indices = @transform_1, window_bounds = array<i64: 1, 128>}, {transform_indices = @transform_2, window_bounds = array<i64: 1, 128>}, {transform_indices = @transform_3, window_bounds = array<i64: 128, 128>}]} {
    %c0 = arith.constant 0 : index
    %c0_0 = arith.constant 0 : index
    %0 = vector.load %arg2[%c0, %c0_0] : memref<128x128xbf16, #tpu.memory_space<vmem>>, vector<128x128xbf16>
    %1 = arith.extf %0 : vector<128x128xbf16> to vector<128x128xf32>
    %c0_1 = arith.constant 0 : index
    %c0_2 = arith.constant 0 : index
    %2 = vector.load %arg3[%c0_1, %c0_2] : memref<1x128xf32, #tpu.memory_space<vmem>>, vector<1x128xf32>
    %3 = vector.broadcast %2 : vector<1x128xf32> to vector<128x128xf32>
    %4 = arith.mulf %1, %3 : vector<128x128xf32>
    %c0_3 = arith.constant 0 : index
    %c0_4 = arith.constant 0 : index
    %5 = vector.load %arg4[%c0_3, %c0_4] : memref<1x128xf32, #tpu.memory_space<vmem>>, vector<1x128xf32>
    %6 = vector.broadcast %5 : vector<1x128xf32> to vector<128x128xf32>
    %7 = arith.addf %4, %6 : vector<128x128xf32>
    %cst = arith.constant 0.000000e+00 : f32
    %8 = vector.broadcast %cst : f32 to vector<128x128xf32>
    %9 = arith.maximumf %7, %8 : vector<128x128xf32>
    %10 = arith.truncf %9 : vector<128x128xf32> to vector<128x128xbf16>
    %c0_5 = arith.constant 0 : index
    %c0_6 = arith.constant 0 : index
    %11 = vector.load %arg5[%c0_5, %c0_6] : memref<128x128xbf16, #tpu.memory_space<vmem>>, vector<128x128xbf16>
    tpu.vector_store %arg5[%c0_5, %c0_6], %10 {strides = array<i32>} : memref<128x128xbf16, #tpu.memory_space<vmem>>, vector<128x128xbf16>,
    return
  }
  func.func @transform_0(%arg0: i32, %arg1: i32) -> (i32, i32) {
    %c0_i32 = arith.constant 0 : i32
    return %arg0, %arg1 : i32, i32
  }
  func.func @transform_1(%arg0: i32, %arg1: i32) -> (i32, i32) {
    %c0_i32 = arith.constant 0 : i32
    %c0_i32_0 = arith.constant 0 : i32
    return %c0_i32, %arg1 : i32, i32
  }
  func.func @transform_2(%arg0: i32, %arg1: i32) -> (i32, i32) {
    %c0_i32 = arith.constant 0 : i32
    %c0_i32_0 = arith.constant 0 : i32
    return %c0_i32, %arg1 : i32, i32
  }
  func.func @transform_3(%arg0: i32, %arg1: i32) -> (i32, i32) {
    %c0_i32 = arith.constant 0 : i32
    return %arg0, %arg1 : i32, i32
  }
}

module attributes {stable_mosaic.version = 11 : i64} {
  func.func @_matmul_bias_stats_kernel(%arg0: i32, %arg1: i32, %arg2: memref<128x384xbf16, #tpu.memory_space<vmem>>, %arg3: memref<384x128xbf16, #tpu.memory_space<vmem>>, %arg4: memref<1x128xf32, #tpu.memory_space<vmem>>, %arg5: memref<128x128xbf16, #tpu.memory_space<vmem>>, %arg6: memref<1x1x128xf32, #tpu.memory_space<vmem>>, %arg7: memref<1x1x128xf32, #tpu.memory_space<vmem>>) attributes {dimension_semantics = [#tpu.dimension_semantics<parallel>, #tpu.dimension_semantics<parallel>], iteration_bounds = array<i64: 1, 1>, scalar_prefetch = 0 : i64, scratch_operands = 0 : i64, tpu.core_type = #tpu.core_type<tc>, window_params = [{transform_indices = @transform_0, window_bounds = array<i64: 128, 384>}, {transform_indices = @transform_1, window_bounds = array<i64: 384, 128>}, {transform_indices = @transform_2, window_bounds = array<i64: 1, 128>}, {transform_indices = @transform_3, window_bounds = array<i64: 128, 128>}, {transform_indices = @transform_4, window_bounds = array<i64: 1, 1, 128>}, {transform_indices = @transform_5, window_bounds = array<i64: 1, 1, 128>}]} {
    %c0 = arith.constant 0 : index
    %c0_0 = arith.constant 0 : index
    %0 = vector.load %arg2[%c0, %c0_0] : memref<128x384xbf16, #tpu.memory_space<vmem>>, vector<128x384xbf16>
    %c0_1 = arith.constant 0 : index
    %c0_2 = arith.constant 0 : index
    %1 = vector.load %arg3[%c0_1, %c0_2] : memref<384x128xbf16, #tpu.memory_space<vmem>>, vector<384x128xbf16>
    %cst = arith.constant dense<0.000000e+00> : vector<128x128xf32>
    %2 = tpu.matmul %0, %1, %cst {dimension_numbers = #tpu.dot_dimension_numbers<[1], [0], [0], [1], [0, 0, 1, 1], [], []>} : vector<128x384xbf16>, vector<384x128xbf16>, vector<128x128xf32> -> vector<128x128xf32>
    %c0_3 = arith.constant 0 : index
    %c0_4 = arith.constant 0 : index
    %3 = vector.load %arg4[%c0_3, %c0_4] : memref<1x128xf32, #tpu.memory_space<vmem>>, vector<1x128xf32>
    %4 = vector.broadcast %3 : vector<1x128xf32> to vector<128x128xf32>
    %5 = arith.addf %2, %4 : vector<128x128xf32>
    %6 = arith.truncf %5 : vector<128x128xf32> to vector<128x128xbf16>
    %c0_5 = arith.constant 0 : index
    %c0_6 = arith.constant 0 : index
    %7 = vector.load %arg5[%c0_5, %c0_6] : memref<128x128xbf16, #tpu.memory_space<vmem>>, vector<128x128xbf16>
    tpu.vector_store %arg5[%c0_5, %c0_6], %6 {strides = array<i32>} : memref<128x128xbf16, #tpu.memory_space<vmem>>, vector<128x128xbf16>,
    %c128_i32 = arith.constant 128 : i32
    %8 = arith.muli %arg0, %c128_i32 : i32
    %9 = tpu.iota {dimensions = array<i32: 0>} : vector<128x128xi32>
    %10 = vector.broadcast %8 : i32 to vector<128x128xi32>
    %11 = arith.addi %10, %9 : vector<128x128xi32>
    %c16_i32 = arith.constant 16 : i32
    %12 = vector.broadcast %c16_i32 : i32 to vector<128x128xi32>
    %13 = arith.cmpi slt, %11, %12 : vector<128x128xi32>
    %cst_7 = arith.constant 0.000000e+00 : f32
    %14 = vector.broadcast %cst_7 : f32 to vector<128x128xf32>
    %15 = arith.select %13, %5, %14 : vector<128x128xi1>, vector<128x128xf32>
    %cst_8 = arith.constant dense<0.000000e+00> : vector<128xf32>
    %16 = vector.multi_reduction <add>, %15, %cst_8 [0] : vector<128x128xf32> to vector<128xf32>
    %17 = vector.shape_cast %16 : vector<128xf32> to vector<1x128xf32>
    %18 = vector.shape_cast %17 : vector<1x128xf32> to vector<1x1x128xf32>
    %c0_9 = arith.constant 0 : index
    %c0_10 = arith.constant 0 : index
    %c0_11 = arith.constant 0 : index
    %19 = vector.load %arg6[%c0_9, %c0_10, %c0_11] : memref<1x1x128xf32, #tpu.memory_space<vmem>>, vector<1x1x128xf32>
    tpu.vector_store %arg6[%c0_9, %c0_10, %c0_11], %18 {strides = array<i32>} : memref<1x1x128xf32, #tpu.memory_space<vmem>>, vector<1x1x128xf32>,
    %20 = arith.mulf %15, %15 : vector<128x128xf32>
    %cst_12 = arith.constant dense<0.000000e+00> : vector<128xf32>
    %21 = vector.multi_reduction <add>, %20, %cst_12 [0] : vector<128x128xf32> to vector<128xf32>
    %22 = vector.shape_cast %21 : vector<128xf32> to vector<1x128xf32>
    %23 = vector.shape_cast %22 : vector<1x128xf32> to vector<1x1x128xf32>
    %c0_13 = arith.constant 0 : index
    %c0_14 = arith.constant 0 : index
    %c0_15 = arith.constant 0 : index
    %24 = vector.load %arg7[%c0_13, %c0_14, %c0_15] : memref<1x1x128xf32, #tpu.memory_space<vmem>>, vector<1x1x128xf32>
    tpu.vector_store %arg7[%c0_13, %c0_14, %c0_15], %23 {strides = array<i32>} : memref<1x1x128xf32, #tpu.memory_space<vmem>>, vector<1x1x128xf32>,
    return
  }
  func.func @transform_0(%arg0: i32, %arg1: i32) -> (i32, i32) {
    %c0_i32 = arith.constant 0 : i32
    %c0_i32_0 = arith.constant 0 : i32
    return %arg0, %c0_i32 : i32, i32
  }
  func.func @transform_1(%arg0: i32, %arg1: i32) -> (i32, i32) {
    %c0_i32 = arith.constant 0 : i32
    %c0_i32_0 = arith.constant 0 : i32
    return %c0_i32, %arg1 : i32, i32
  }
  func.func @transform_2(%arg0: i32, %arg1: i32) -> (i32, i32) {
    %c0_i32 = arith.constant 0 : i32
    %c0_i32_0 = arith.constant 0 : i32
    return %c0_i32, %arg1 : i32, i32
  }
  func.func @transform_3(%arg0: i32, %arg1: i32) -> (i32, i32) {
    %c0_i32 = arith.constant 0 : i32
    return %arg0, %arg1 : i32, i32
  }
  func.func @transform_4(%arg0: i32, %arg1: i32) -> (i32, i32, i32) {
    %c0_i32 = arith.constant 0 : i32
    %c0_i32_0 = arith.constant 0 : i32
    return %arg0, %c0_i32, %arg1 : i32, i32, i32
  }
  func.func @transform_5(%arg0: i32, %arg1: i32) -> (i32, i32, i32) {
    %c0_i32 = arith.constant 0 : i32
    %c0_i32_0 = arith.constant 0 : i32
    return %arg0, %c0_i32, %arg1 : i32, i32, i32
  }
}

</mosaic_0001>

<llo_original>
// kernel: forward.17
$region0: #{forward.17}
  #allocation0 [shape = 'u32[]', space=smem, size = 0x4, offset = 0x4, fixed_abs, tag = 'smem constant byte address 0x4 - core index']
  #allocation1 [shape = 'u32[144,128]{1,0:T(1,128)}', space=vmem, size = 0x12000, scoped, tag = 'internal scratch']
  %s0 = inlined_call_operand.vmem [shape: bf16[1024,128], index: 0, kind: input, shape index: {}]
  %s1 = inlined_call_operand.vmem [shape: f32[1,128], index: 1, kind: input, shape index: {}]
  %s2 = inlined_call_operand.vmem [shape: f32[1,128], index: 2, kind: input, shape index: {}]
  %s3 = inlined_call_operand.vmem [shape: bf16[1024,128], index: 3, kind: output, shape index: {}]
  %s4 = sld [smem:[#allocation0]]
  $region45: #{forward.17} parent=0
    _
  %s6 = ssub.s32 1, %s4
  %s7 = scalar_select 0, %s6, %s4
  loop: start=0, step=1, limit=4
  $region2: #{forward.17} parent=0 // loop_pre_header
    _
  $region3: #{forward.17} parent=0 // loop_header
    %s9 = sphi 0, %s13
    %p10 = scmp.ge.s32.totalorder %s9, 4
    %s16 = sphi 0, %s28
    %s17 = sphi 0, %s24
    %s18 = sphi 0, %s16
    %s19 = sphi 0, %s17
    %s20 = sphi 0, %s18
    %s21 = sphi 0, %s19
    %s33 = sphi 0, %s35
    %s36 = sphi 0, %s33
    %s37 = sphi 0, %s36
    %s53 = sphi 0, %s37
    %s59 = sphi 0, %s61
    %s62 = sphi 0, %s59
    %s63 = sphi 0, %s62
    %s79 = sphi 0, %s63
    %s85 = sphi 0, %s87
    %s88 = sphi 0, %s85
    %s89 = sphi 0, %s88
    %s105 = sphi 0, %s89
    %s113 = sphi 0, %s115
    %s116 = sphi 0, %s113
    %s117 = sphi 0, %s116
    %s133 = sphi 0, %s117
  $region4: #{forward.17} parent=0 // loop_header_branch
    %12 = sbr.rel (%p10) target = $region8
  $region5: #{forward.17} parent=0 // loop_body
    %s14 = ssub.s32 %s9, 1
    %s15 = ssub.s32 %s9, 2
    %s22 = sadd.s32 1, %s17
    %p23 = scmp.ge.s32.totalorder %s22, 1
    %s24 = scalar_select %p23, 0, %s22
    %s25 = sadd.s32 1, %s16
    %s26 = scalar_select %p23, %s25, %s16
    %p27 = scmp.ge.s32.totalorder %s26, 2
    %s28 = scalar_select %p27, 0, %s26
    %s29 = ssub.s32 %s16, %s28
    %s30 = ssub.s32 %s17, %s24
    %s31 = sor.u32 %s29, %s30
    %p32 = scmp.eq.s32.totalorder %s31, 0
    %s34 = sadd.s32 %s33, 1
    %s35 = scalar_select %p32, %s33, %s34
    %p38 = pneg %p32
    %p39 = scmp.eq.s32.totalorder %s9, 1
    %p40 = por %p38, %p39
    %p41 = scmp.ne.s32.totalorder %s33, %s36
    %p42 = scmp.eq.s32.totalorder %s9, 0
    %p43 = por %p41, %p42
    %p44 = scmp.ne.s32.totalorder %s33, %s36
    %p45 = scmp.eq.s32.totalorder %s14, 1
    %p46 = por %p44, %p45
    %p47 = scmp.ne.s32.totalorder %s36, %s37
    %p48 = scmp.eq.s32.totalorder %s14, 0
    %p49 = por %p47, %p48
    %p50 = scmp.ne.s32.totalorder %s36, %s37
    %p51 = scmp.eq.s32.totalorder %s15, 1
    %p52 = por %p50, %p51
    %p54 = scmp.ne.s32.totalorder %s37, %s53
    %p55 = scmp.eq.s32.totalorder %s15, 0
    %p56 = por %p54, %p55
    %s57 = ssub.s32 %s17, %s24
    %p58 = scmp.eq.s32.totalorder %s57, 0
    %s60 = sadd.s32 %s59, 1
    %s61 = scalar_select %p58, %s59, %s60
    %p64 = pneg %p58
    %p65 = scmp.eq.s32.totalorder %s9, 1
    %p66 = por %p64, %p65
    %p67 = scmp.ne.s32.totalorder %s59, %s62
    %p68 = scmp.eq.s32.totalorder %s9, 0
    %p69 = por %p67, %p68
    %p70 = scmp.ne.s32.totalorder %s59, %s62
    %p71 = scmp.eq.s32.totalorder %s14, 1
    %p72 = por %p70, %p71
    %p73 = scmp.ne.s32.totalorder %s62, %s63
    %p74 = scmp.eq.s32.totalorder %s14, 0
    %p75 = por %p73, %p74
    %p76 = scmp.ne.s32.totalorder %s62, %s63
    %p77 = scmp.eq.s32.totalorder %s15, 1
    %p78 = por %p76, %p77
    %p80 = scmp.ne.s32.totalorder %s63, %s79
    %p81 = scmp.eq.s32.totalorder %s15, 0
    %p82 = por %p80, %p81
    %s83 = ssub.s32 %s17, %s24
    %p84 = scmp.eq.s32.totalorder %s83, 0
    %s86 = sadd.s32 %s85, 1
    %s87 = scalar_select %p84, %s85, %s86
    %p90 = pneg %p84
    %p91 = scmp.eq.s32.totalorder %s9, 1
    %p92 = por %p90, %p91
    %p93 = scmp.ne.s32.totalorder %s85, %s88
    %p94 = scmp.eq.s32.totalorder %s9, 0
    %p95 = por %p93, %p94
    %p96 = scmp.ne.s32.totalorder %s85, %s88
    %p97 = scmp.eq.s32.totalorder %s14, 1
    %p98 = por %p96, %p97
    %p99 = scmp.ne.s32.totalorder %s88, %s89
    %p100 = scmp.eq.s32.totalorder %s14, 0
    %p101 = por %p99, %p100
    %p102 = scmp.ne.s32.totalorder %s88, %s89
    %p103 = scmp.eq.s32.totalorder %s15, 1
    %p104 = por %p102, %p103
    %p106 = scmp.ne.s32.totalorder %s89, %s105
    %p107 = scmp.eq.s32.totalorder %s15, 0
    %p108 = por %p106, %p107
    %s109 = ssub.s32 %s16, %s28
    %s110 = ssub.s32 %s17, %s24
    %s111 = sor.u32 %s109, %s110
    %p112 = scmp.eq.s32.totalorder %s111, 0
    %s114 = sadd.s32 %s113, 1
    %s115 = scalar_select %p112, %s113, %s114
    %p118 = pneg %p112
    %p119 = scmp.eq.s32.totalorder %s9, 1
    %p120 = por %p118, %p119
    %p121 = scmp.ne.s32.totalorder %s113, %s116
    %p122 = scmp.eq.s32.totalorder %s9, 0
    %p123 = por %p121, %p122
    %p124 = scmp.ne.s32.totalorder %s113, %s116
    %p125 = scmp.eq.s32.totalorder %s14, 1
    %p126 = por %p124, %p125
    %p127 = scmp.ne.s32.totalorder %s116, %s117
    %p128 = scmp.eq.s32.totalorder %s14, 0
    %p129 = por %p127, %p128
    %p130 = scmp.ne.s32.totalorder %s116, %s117
    %p131 = scmp.eq.s32.totalorder %s15, 1
    %p132 = por %p130, %p131
    %p134 = scmp.ne.s32.totalorder %s117, %s133
    %p135 = scmp.eq.s32.totalorder %s15, 0
    %p136 = por %p134, %p135
    %p137 = scmp.le.s32.totalorder 1, %s9
    %p138 = scmp.lt.s32.totalorder %s9, 3
    %p139 = pnand %p137, %p138
    %p140 = pneg %p139
    // Predicated region
    $region9: #{forward.17} parent=5 // pred_check
      _
    $region10: #{forward.17} parent=5 // pred_check_branch
      %142 = sbr.rel (%p139) target = $region12
    $region11: #{forward.17} parent=5 // pred_region
      %s143 = ssub.s32 %s9, 1
      // Predicated region
      $region13: #{forward.17} parent=11 // pred_check
        %p144 = pneg %p75
      $region14: #{forward.17} parent=11 // pred_check_branch
        %146 = sbr.rel (%p144) target = $region16
      $region15: #{forward.17} parent=11 // pred_region
        %p147 = scmp.lt.s32.totalorder %s19, 0
        %s148 = scalar_select %p147, %s19, 0
        %s149 = scalar_lea.vmem %s1, %s148
      $region16: #{forward.17} parent=11 // pred_fallthru
        _
      // Predicated region
      $region17: #{forward.17} parent=11 // pred_check
        %p150 = pneg %p101
      $region18: #{forward.17} parent=11 // pred_check_branch
        %152 = sbr.rel (%p150) target = $region20
      $region19: #{forward.17} parent=11 // pred_region
        %p153 = scmp.lt.s32.totalorder %s19, 0
        %s154 = scalar_select %p153, %s19, 0
        %s155 = scalar_lea.vmem %s2, %s154
      $region20: #{forward.17} parent=11 // pred_fallthru
        _
    $region12: #{forward.17} parent=5 // pred_fallthru
      _
    %p156 = scmp.lt.s32.totalorder %s9, 2
    // Predicated region
    $region21: #{forward.17} parent=5 // pred_check
      %p157 = pneg %p156
    $region22: #{forward.17} parent=5 // pred_check_branch
      %159 = sbr.rel (%p157) target = $region24
    $region23: #{forward.17} parent=5 // pred_region
      // Predicated region
      $region25: #{forward.17} parent=23 // pred_check
        %p160 = pneg %p43
      $region26: #{forward.17} parent=23 // pred_check_branch
        %162 = sbr.rel (%p160) target = $region28
      $region27: #{forward.17} parent=23 // pred_region
        %s163 = smul.u32 64, %s16
        %p164 = scmp.lt.s32.totalorder %s163, 127
        %s165 = scalar_select %p164, %s163, 127
        %p166 = scmp.lt.s32.totalorder %s17, 0
        %s167 = scalar_select %p166, %s17, 0
        %s168 = sadd.s32 %s167, %s165
        %s169 = smul.addr %s168, 4
        %s170 = scalar_lea.vmem %s0, %s169
        %s171 = smul.u32 64, %s16
      $region28: #{forward.17} parent=23 // pred_fallthru
        _
    $region24: #{forward.17} parent=5 // pred_fallthru
      _
    %p172 = scmp.le.s32.totalorder 1, %s9
    %p173 = scmp.lt.s32.totalorder %s9, 3
    %p174 = pnand %p172, %p173
    %p175 = pneg %p174
    // Predicated region
    $region29: #{forward.17} parent=5 // pred_check
      _
    $region30: #{forward.17} parent=5 // pred_check_branch
      %177 = sbr.rel (%p174) target = $region32
    $region31: #{forward.17} parent=5 // pred_region
      %s178 = ssub.s32 %s9, 1
      %s179 = smul.u32 64, %s18
      %p180 = scmp.lt.s32.totalorder %s179, 127
      %s181 = scalar_select %p180, %s179, 127
      %p182 = scmp.lt.s32.totalorder %s19, 0
      %s183 = scalar_select %p182, %s19, 0
      %s184 = sadd.s32 %s183, %s181
      %s185 = smul.addr %s184, 4
      %s186 = scalar_lea.vmem %s0, %s185
      %p187 = pneg %p49
      %p188 = pneg %p46
      %p189 = scmp.lt.s32.totalorder %s19, 0
      %s190 = scalar_select %p189, %s19, 0
      %s191 = scalar_lea.vmem %s1, %s190
      %p192 = pneg %p75
      %p193 = pneg %p72
      %p194 = scmp.lt.s32.totalorder %s19, 0
      %s195 = scalar_select %p194, %s19, 0
      %s196 = scalar_lea.vmem %s2, %s195
      %p197 = pneg %p101
      %p198 = pneg %p98
      %p199 = pneg %p129
      %p200 = pneg %p126
      %s201 = smul.u32 64, %s18
      %p202 = scmp.lt.s32.totalorder %s201, 127
      %s203 = scalar_select %p202, %s201, 127
      %p204 = scmp.lt.s32.totalorder %s19, 0
      %s205 = scalar_select %p204, %s19, 0
      %s206 = sadd.s32 %s205, %s203
      %s207 = smul.addr %s206, 4
      %s208 = scalar_lea.vmem %s3, %s207
      %s209 = smul.u32 64, %s18
      %p210 = scmp.lt.s32.totalorder %s209, 127
      %s211 = scalar_select %p210, %s209, 127
      %p212 = scmp.lt.s32.totalorder %s19, 0
      %s213 = scalar_select %p212, %s19, 0
      %s214 = sadd.s32 %s213, %s211
      %s215 = smul.addr %s214, 4
      %s216 = scalar_lea.vmem %s0, %s215
      %s217 = smul.u32 64, %s18
      %p218 = scmp.lt.s32.totalorder %s19, 0
      %s219 = scalar_select %p218, %s19, 0
      %s220 = scalar_lea.vmem %s1, %s219
      %p221 = scmp.lt.s32.totalorder %s19, 0
      %s222 = scalar_select %p221, %s19, 0
      %s223 = scalar_lea.vmem %s2, %s222
      %s224 = smul.u32 64, %s18
      %p225 = scmp.lt.s32.totalorder %s224, 127
      %s226 = scalar_select %p225, %s224, 127
      %p227 = scmp.lt.s32.totalorder %s19, 0
      %s228 = scalar_select %p227, %s19, 0
      %s229 = sadd.s32 %s228, %s226
      %s230 = smul.addr %s229, 4
      %s231 = scalar_lea.vmem %s3, %s230
      %s232 = smul.u32 64, %s18
      %v233 = vld [vmem:[%s216] sm:$0xf]
      %v234 = vld [vmem:[%s216 + $0x4] sm:$0xf]
      %v235 = vld [vmem:[%s216 + $0x8] sm:$0xf]
      %v236 = vld [vmem:[%s216 + $0xc] sm:$0xf]
      %v237 = vld [vmem:[%s216 + $0x10] sm:$0xf]
      %v238 = vld [vmem:[%s216 + $0x14] sm:$0xf]
      %v239 = vld [vmem:[%s216 + $0x18] sm:$0xf]
      %v240 = vld [vmem:[%s216 + $0x1c] sm:$0xf]
      %v241 = vld [vmem:[%s216 + $0x20] sm:$0xf]
      %v242 = vld [vmem:[%s216 + $0x24] sm:$0xf]
      %v243 = vld [vmem:[%s216 + $0x28] sm:$0xf]
      %v244 = vld [vmem:[%s216 + $0x2c] sm:$0xf]
      %v245 = vld [vmem:[%s216 + $0x30] sm:$0xf]
      %v246 = vld [vmem:[%s216 + $0x34] sm:$0xf]
      %v247 = vld [vmem:[%s216 + $0x38] sm:$0xf]
      %v248 = vld [vmem:[%s216 + $0x3c] sm:$0xf]
      %v249 = vld [vmem:[%s216 + $0x40] sm:$0xf]
      %v250 = vld [vmem:[%s216 + $0x44] sm:$0xf]
      %v251 = vld [vmem:[%s216 + $0x48] sm:$0xf]
      %v252 = vld [vmem:[%s216 + $0x4c] sm:$0xf]
      %v253 = vld [vmem:[%s216 + $0x50] sm:$0xf]
      %v254 = vld [vmem:[%s216 + $0x54] sm:$0xf]
      %v255 = vld [vmem:[%s216 + $0x58] sm:$0xf]
      %v256 = vld [vmem:[%s216 + $0x5c] sm:$0xf]
      %v257 = vld [vmem:[%s216 + $0x60] sm:$0xf]
      %v258 = vld [vmem:[%s216 + $0x64] sm:$0xf]
      %v259 = vld [vmem:[%s216 + $0x68] sm:$0xf]
      %v260 = vld [vmem:[%s216 + $0x6c] sm:$0xf]
      %v261 = vld [vmem:[%s216 + $0x70] sm:$0xf]
      %v262 = vld [vmem:[%s216 + $0x74] sm:$0xf]
      %v263 = vld [vmem:[%s216 + $0x78] sm:$0xf]
      %v264 = vld [vmem:[%s216 + $0x7c] sm:$0xf]
      %v265 = vld [vmem:[%s216 + $0x80] sm:$0xf]
      %v266 = vld [vmem:[%s216 + $0x84] sm:$0xf]
      %v267 = vld [vmem:[%s216 + $0x88] sm:$0xf]
      %v268 = vld [vmem:[%s216 + $0x8c] sm:$0xf]
      %v269 = vld [vmem:[%s216 + $0x90] sm:$0xf]
      %v270 = vld [vmem:[%s216 + $0x94] sm:$0xf]
      %v271 = vld [vmem:[%s216 + $0x98] sm:$0xf]
      %v272 = vld [vmem:[%s216 + $0x9c] sm:$0xf]
      %v273 = vld [vmem:[%s216 + $0xa0] sm:$0xf]
      %v274 = vld [vmem:[%s216 + $0xa4] sm:$0xf]
      %v275 = vld [vmem:[%s216 + $0xa8] sm:$0xf]
      %v276 = vld [vmem:[%s216 + $0xac] sm:$0xf]
      %v277 = vld [vmem:[%s216 + $0xb0] sm:$0xf]
      %v278 = vld [vmem:[%s216 + $0xb4] sm:$0xf]
      %v279 = vld [vmem:[%s216 + $0xb8] sm:$0xf]
      %v280 = vld [vmem:[%s216 + $0xbc] sm:$0xf]
      %v281 = vld [vmem:[%s216 + $0xc0] sm:$0xf]
      %v282 = vld [vmem:[%s216 + $0xc4] sm:$0xf]
      %v283 = vld [vmem:[%s216 + $0xc8] sm:$0xf]
      %v284 = vld [vmem:[%s216 + $0xcc] sm:$0xf]
      %v285 = vld [vmem:[%s216 + $0xd0] sm:$0xf]
      %v286 = vld [vmem:[%s216 + $0xd4] sm:$0xf]
      %v287 = vld [vmem:[%s216 + $0xd8] sm:$0xf]
      %v288 = vld [vmem:[%s216 + $0xdc] sm:$0xf]
      %v289 = vld [vmem:[%s216 + $0xe0] sm:$0xf]
      %v290 = vld [vmem:[%s216 + $0xe4] sm:$0xf]
      %v291 = vld [vmem:[%s216 + $0xe8] sm:$0xf]
      %v292 = vld [vmem:[%s216 + $0xec] sm:$0xf]
      %v293 = vld [vmem:[%s216 + $0xf0] sm:$0xf]
      %v294 = vld [vmem:[%s216 + $0xf4] sm:$0xf]
      %v295 = vld [vmem:[%s216 + $0xf8] sm:$0xf]
      %v296 = vld [vmem:[%s216 + $0xfc] sm:$0xf]
      %v297 = vunpack.c.l.bf16 %v233
      %v298 = vunpack.c.l.bf16 %v234
      %v299 = vunpack.c.l.bf16 %v235
      %v300 = vunpack.c.l.bf16 %v236
      %v301 = vunpack.c.l.bf16 %v237
      %v302 = vunpack.c.l.bf16 %v238
      %v303 = vunpack.c.l.bf16 %v239
      %v304 = vunpack.c.l.bf16 %v240
      %v305 = vunpack.c.l.bf16 %v241
      %v306 = vunpack.c.l.bf16 %v242
      %v307 = vunpack.c.l.bf16 %v243
      %v308 = vunpack.c.l.bf16 %v244
      %v309 = vunpack.c.l.bf16 %v245
      %v310 = vunpack.c.l.bf16 %v246
      %v311 = vunpack.c.l.bf16 %v247
      %v312 = vunpack.c.l.bf16 %v248
      %v313 = vunpack.c.l.bf16 %v249
      %v314 = vunpack.c.l.bf16 %v250
      %v315 = vunpack.c.l.bf16 %v251
      %v316 = vunpack.c.l.bf16 %v252
      %v317 = vunpack.c.l.bf16 %v253
      %v318 = vunpack.c.l.bf16 %v254
      %v319 = vunpack.c.l.bf16 %v255
      %v320 = vunpack.c.l.bf16 %v256
      %v321 = vunpack.c.l.bf16 %v257
      %v322 = vunpack.c.l.bf16 %v258
      %v323 = vunpack.c.l.bf16 %v259
      %v324 = vunpack.c.l.bf16 %v260
      %v325 = vunpack.c.l.bf16 %v261
      %v326 = vunpack.c.l.bf16 %v262
      %v327 = vunpack.c.l.bf16 %v263
      %v328 = vunpack.c.l.bf16 %v264
      %v329 = vunpack.c.l.bf16 %v265
      %v330 = vunpack.c.l.bf16 %v266
      %v331 = vunpack.c.l.bf16 %v267
      %v332 = vunpack.c.l.bf16 %v268
      %v333 = vunpack.c.l.bf16 %v269
      %v334 = vunpack.c.l.bf16 %v270
      %v335 = vunpack.c.l.bf16 %v271
      %v336 = vunpack.c.l.bf16 %v272
      %v337 = vunpack.c.l.bf16 %v273
      %v338 = vunpack.c.l.bf16 %v274
      %v339 = vunpack.c.l.bf16 %v275
      %v340 = vunpack.c.l.bf16 %v276
      %v341 = vunpack.c.l.bf16 %v277
      %v342 = vunpack.c.l.bf16 %v278
      %v343 = vunpack.c.l.bf16 %v279
      %v344 = vunpack.c.l.bf16 %v280
      %v345 = vunpack.c.l.bf16 %v281
      %v346 = vunpack.c.l.bf16 %v282
      %v347 = vunpack.c.l.bf16 %v283
      %v348 = vunpack.c.l.bf16 %v284
      %v349 = vunpack.c.l.bf16 %v285
      %v350 = vunpack.c.l.bf16 %v286
      %v351 = vunpack.c.l.bf16 %v287
      %v352 = vunpack.c.l.bf16 %v288
      %v353 = vunpack.c.l.bf16 %v289
      %v354 = vunpack.c.l.bf16 %v290
      %v355 = vunpack.c.l.bf16 %v291
      %v356 = vunpack.c.l.bf16 %v292
      %v357 = vunpack.c.l.bf16 %v293
      %v358 = vunpack.c.l.bf16 %v294
      %v359 = vunpack.c.l.bf16 %v295
      %v360 = vunpack.c.l.bf16 %v296
      %v361 = vld [vmem:[%s220] sm:$0x1]
      %v363 = vlaneseq
      %v364 = vshrl.u32 %v363, 7
      %v365 = vsub.s32 0, %v364
      %v366 = vrot.slane %v361, %v365
      %v368 = vmul.f32 %v297, %v366
      %v369 = vmul.f32 %v298, %v366
      %v370 = vmul.f32 %v299, %v366
      %v371 = vmul.f32 %v300, %v366
      %v372 = vmul.f32 %v301, %v366
      %v373 = vmul.f32 %v302, %v366
      %v374 = vmul.f32 %v303, %v366
      %v375 = vmul.f32 %v304, %v366
      %v376 = vmul.f32 %v305, %v366
      %v377 = vmul.f32 %v306, %v366
      %v378 = vmul.f32 %v307, %v366
      %v379 = vmul.f32 %v308, %v366
      %v380 = vmul.f32 %v309, %v366
      %v381 = vmul.f32 %v310, %v366
      %v382 = vmul.f32 %v311, %v366
      %v383 = vmul.f32 %v312, %v366
      %v384 = vmul.f32 %v313, %v366
      %v385 = vmul.f32 %v314, %v366
      %v386 = vmul.f32 %v315, %v366
      %v387 = vmul.f32 %v316, %v366
      %v388 = vmul.f32 %v317, %v366
      %v389 = vmul.f32 %v318, %v366
      %v390 = vmul.f32 %v319, %v366
      %v391 = vmul.f32 %v320, %v366
      %v392 = vmul.f32 %v321, %v366
      %v393 = vmul.f32 %v322, %v366
      %v394 = vmul.f32 %v323, %v366
      %v395 = vmul.f32 %v324, %v366
      %v396 = vmul.f32 %v325, %v366
      %v397 = vmul.f32 %v326, %v366
      %v398 = vmul.f32 %v327, %v366
      %v399 = vmul.f32 %v328, %v366
      %v400 = vmul.f32 %v329, %v366
      %v401 = vmul.f32 %v330, %v366
      %v402 = vmul.f32 %v331, %v366
      %v403 = vmul.f32 %v332, %v366
      %v404 = vmul.f32 %v333, %v366
      %v405 = vmul.f32 %v334, %v366
      %v406 = vmul.f32 %v335, %v366
      %v407 = vmul.f32 %v336, %v366
      %v408 = vmul.f32 %v337, %v366
      %v409 = vmul.f32 %v338, %v366
      %v410 = vmul.f32 %v339, %v366
      %v411 = vmul.f32 %v340, %v366
      %v412 = vmul.f32 %v341, %v366
      %v413 = vmul.f32 %v342, %v366
      %v414 = vmul.f32 %v343, %v366
      %v415 = vmul.f32 %v344, %v366
      %v416 = vmul.f32 %v345, %v366
      %v417 = vmul.f32 %v346, %v366
      %v418 = vmul.f32 %v347, %v366
      %v419 = vmul.f32 %v348, %v366
      %v420 = vmul.f32 %v349, %v366
      %v421 = vmul.f32 %v350, %v366
      %v422 = vmul.f32 %v351, %v366
      %v423 = vmul.f32 %v352, %v366
      %v424 = vmul.f32 %v353, %v366
      %v425 = vmul.f32 %v354, %v366
      %v426 = vmul.f32 %v355, %v366
      %v427 = vmul.f32 %v356, %v366
      %v428 = vmul.f32 %v357, %v366
      %v429 = vmul.f32 %v358, %v366
      %v430 = vmul.f32 %v359, %v366
      %v431 = vmul.f32 %v360, %v366
      %v432 = vld [vmem:[%s223] sm:$0x1]
      %v434 = vlaneseq
      %v435 = vshrl.u32 %v434, 7
      %v436 = vsub.s32 0, %v435
      %v437 = vrot.slane %v432, %v436
      %v439 = vadd.f32 %v368, %v437
      %v440 = vadd.f32 %v369, %v437
      %v441 = vadd.f32 %v370, %v437
      %v442 = vadd.f32 %v371, %v437
      %v443 = vadd.f32 %v372, %v437
      %v444 = vadd.f32 %v373, %v437
      %v445 = vadd.f32 %v374, %v437
      %v446 = vadd.f32 %v375, %v437
      %v447 = vadd.f32 %v376, %v437
      %v448 = vadd.f32 %v377, %v437
      %v449 = vadd.f32 %v378, %v437
      %v450 = vadd.f32 %v379, %v437
      %v451 = vadd.f32 %v380, %v437
      %v452 = vadd.f32 %v381, %v437
      %v453 = vadd.f32 %v382, %v437
      %v454 = vadd.f32 %v383, %v437
      %v455 = vadd.f32 %v384, %v437
      %v456 = vadd.f32 %v385, %v437
      %v457 = vadd.f32 %v386, %v437
      %v458 = vadd.f32 %v387, %v437
      %v459 = vadd.f32 %v388, %v437
      %v460 = vadd.f32 %v389, %v437
      %v461 = vadd.f32 %v390, %v437
      %v462 = vadd.f32 %v391, %v437
      %v463 = vadd.f32 %v392, %v437
      %v464 = vadd.f32 %v393, %v437
      %v465 = vadd.f32 %v394, %v437
      %v466 = vadd.f32 %v395, %v437
      %v467 = vadd.f32 %v396, %v437
      %v468 = vadd.f32 %v397, %v437
      %v469 = vadd.f32 %v398, %v437
      %v470 = vadd.f32 %v399, %v437
      %v471 = vadd.f32 %v400, %v437
      %v472 = vadd.f32 %v401, %v437
      %v473 = vadd.f32 %v402, %v437
      %v474 = vadd.f32 %v403, %v437
      %v475 = vadd.f32 %v404, %v437
      %v476 = vadd.f32 %v405, %v437
      %v477 = vadd.f32 %v406, %v437
      %v478 = vadd.f32 %v407, %v437
      %v479 = vadd.f32 %v408, %v437
      %v480 = vadd.f32 %v409, %v437
      %v481 = vadd.f32 %v410, %v437
      %v482 = vadd.f32 %v411, %v437
      %v483 = vadd.f32 %v412, %v437
      %v484 = vadd.f32 %v413, %v437
      %v485 = vadd.f32 %v414, %v437
      %v486 = vadd.f32 %v415, %v437
      %v487 = vadd.f32 %v416, %v437
      %v488 = vadd.f32 %v417, %v437
      %v489 = vadd.f32 %v418, %v437
      %v490 = vadd.f32 %v419, %v437
      %v491 = vadd.f32 %v420, %v437
      %v492 = vadd.f32 %v421, %v437
      %v493 = vadd.f32 %v422, %v437
      %v494 = vadd.f32 %v423, %v437
      %v495 = vadd.f32 %v424, %v437
      %v496 = vadd.f32 %v425, %v437
      %v497 = vadd.f32 %v426, %v437
      %v498 = vadd.f32 %v427, %v437
      %v499 = vadd.f32 %v428, %v437
      %v500 = vadd.f32 %v429, %v437
      %v501 = vadd.f32 %v430, %v437
      %v502 = vadd.f32 %v431, %v437
      %v503 = vpack.c.bf16 %v440, %v439
      %v504 = vpack.c.bf16 %v442, %v441
      %v505 = vpack.c.bf16 %v444, %v443
      %v506 = vpack.c.bf16 %v446, %v445
      %v507 = vpack.c.bf16 %v448, %v447
      %v508 = vpack.c.bf16 %v450, %v449
      %v509 = vpack.c.bf16 %v452, %v451
      %v510 = vpack.c.bf16 %v454, %v453
      %v511 = vpack.c.bf16 %v456, %v455
      %v512 = vpack.c.bf16 %v458, %v457
      %v513 = vpack.c.bf16 %v460, %v459
      %v514 = vpack.c.bf16 %v462, %v461
      %v515 = vpack.c.bf16 %v464, %v463
      %v516 = vpack.c.bf16 %v466, %v465
      %v517 = vpack.c.bf16 %v468, %v467
      %v518 = vpack.c.bf16 %v470, %v469
      %v519 = vpack.c.bf16 %v472, %v471
      %v520 = vpack.c.bf16 %v474, %v473
      %v521 = vpack.c.bf16 %v476, %v475
      %v522 = vpack.c.bf16 %v478, %v477
      %v523 = vpack.c.bf16 %v480, %v479
      %v524 = vpack.c.bf16 %v482, %v481
      %v525 = vpack.c.bf16 %v484, %v483
      %v526 = vpack.c.bf16 %v486, %v485
      %v527 = vpack.c.bf16 %v488, %v487
      %v528 = vpack.c.bf16 %v490, %v489
      %v529 = vpack.c.bf16 %v492, %v491
      %v530 = vpack.c.bf16 %v494, %v493
      %v531 = vpack.c.bf16 %v496, %v495
      %v532 = vpack.c.bf16 %v498, %v497
      %v533 = vpack.c.bf16 %v500, %v499
      %v534 = vpack.c.bf16 %v502, %v501
      %v567 = vunpack.c.l.b16 %v503
      %v568 = vunpack.c.h.b16 %v503
      %v569 = vunpack.c.l.b16 %v504
      %v570 = vunpack.c.h.b16 %v504
      %v571 = vunpack.c.l.b16 %v505
      %v572 = vunpack.c.h.b16 %v505
      %v573 = vunpack.c.l.b16 %v506
      %v574 = vunpack.c.h.b16 %v506
      %v575 = vunpack.c.l.b16 %v507
      %v576 = vunpack.c.h.b16 %v507
      %v577 = vunpack.c.l.b16 %v508
      %v578 = vunpack.c.h.b16 %v508
      %v579 = vunpack.c.l.b16 %v509
      %v580 = vunpack.c.h.b16 %v509
      %v581 = vunpack.c.l.b16 %v510
      %v582 = vunpack.c.h.b16 %v510
      %v583 = vunpack.c.l.b16 %v511
      %v584 = vunpack.c.h.b16 %v511
      %v585 = vunpack.c.l.b16 %v512
      %v586 = vunpack.c.h.b16 %v512
      %v587 = vunpack.c.l.b16 %v513
      %v588 = vunpack.c.h.b16 %v513
      %v589 = vunpack.c.l.b16 %v514
      %v590 = vunpack.c.h.b16 %v514
      %v591 = vunpack.c.l.b16 %v515
      %v592 = vunpack.c.h.b16 %v515
      %v593 = vunpack.c.l.b16 %v516
      %v594 = vunpack.c.h.b16 %v516
      %v595 = vunpack.c.l.b16 %v517
      %v596 = vunpack.c.h.b16 %v517
      %v597 = vunpack.c.l.b16 %v518
      %v598 = vunpack.c.h.b16 %v518
      %v599 = vunpack.c.l.b16 %v519
      %v600 = vunpack.c.h.b16 %v519
      %v601 = vunpack.c.l.b16 %v520
      %v602 = vunpack.c.h.b16 %v520
      %v603 = vunpack.c.l.b16 %v521
      %v604 = vunpack.c.h.b16 %v521
      %v605 = vunpack.c.l.b16 %v522
      %v606 = vunpack.c.h.b16 %v522
      %v607 = vunpack.c.l.b16 %v523
      %v608 = vunpack.c.h.b16 %v523
      %v609 = vunpack.c.l.b16 %v524
      %v610 = vunpack.c.h.b16 %v524
      %v611 = vunpack.c.l.b16 %v525
      %v612 = vunpack.c.h.b16 %v525
      %v613 = vunpack.c.l.b16 %v526
      %v614 = vunpack.c.h.b16 %v526
      %v615 = vunpack.c.l.b16 %v527
      %v616 = vunpack.c.h.b16 %v527
      %v617 = vunpack.c.l.b16 %v528
      %v618 = vunpack.c.h.b16 %v528
      %v619 = vunpack.c.l.b16 %v529
      %v620 = vunpack.c.h.b16 %v529
      %v621 = vunpack.c.l.b16 %v530
      %v622 = vunpack.c.h.b16 %v530
      %v623 = vunpack.c.l.b16 %v531
      %v624 = vunpack.c.h.b16 %v531
      %v625 = vunpack.c.l.b16 %v532
      %v626 = vunpack.c.h.b16 %v532
      %v627 = vunpack.c.l.b16 %v533
      %v628 = vunpack.c.h.b16 %v533
      %v629 = vunpack.c.l.b16 %v534
      %v630 = vunpack.c.h.b16 %v534
      %v631 = vpack.c.b16 %v567, %v567
      %v632 = vpack.c.b16 %v568, %v568
      %v633 = vpack.c.b16 %v569, %v569
      %v634 = vpack.c.b16 %v570, %v570
      %v635 = vpack.c.b16 %v571, %v571
      %v636 = vpack.c.b16 %v572, %v572
      %v637 = vpack.c.b16 %v573, %v573
      %v638 = vpack.c.b16 %v574, %v574
      %v639 = vpack.c.b16 %v575, %v575
      %v640 = vpack.c.b16 %v576, %v576
      %v641 = vpack.c.b16 %v577, %v577
      %v642 = vpack.c.b16 %v578, %v578
      %v643 = vpack.c.b16 %v579, %v579
      %v644 = vpack.c.b16 %v580, %v580
      %v645 = vpack.c.b16 %v581, %v581
      %v646 = vpack.c.b16 %v582, %v582
      %v647 = vpack.c.b16 %v583, %v583
      %v648 = vpack.c.b16 %v584, %v584
      %v649 = vpack.c.b16 %v585, %v585
      %v650 = vpack.c.b16 %v586, %v586
      %v651 = vpack.c.b16 %v587, %v587
      %v652 = vpack.c.b16 %v588, %v588
      %v653 = vpack.c.b16 %v589, %v589
      %v654 = vpack.c.b16 %v590, %v590
      %v655 = vpack.c.b16 %v591, %v591
      %v656 = vpack.c.b16 %v592, %v592
      %v657 = vpack.c.b16 %v593, %v593
      %v658 = vpack.c.b16 %v594, %v594
      %v659 = vpack.c.b16 %v595, %v595
      %v660 = vpack.c.b16 %v596, %v596
      %v661 = vpack.c.b16 %v597, %v597
      %v662 = vpack.c.b16 %v598, %v598
      %v663 = vpack.c.b16 %v599, %v599
      %v664 = vpack.c.b16 %v600, %v600
      %v665 = vpack.c.b16 %v601, %v601
      %v666 = vpack.c.b16 %v602, %v602
      %v667 = vpack.c.b16 %v603, %v603
      %v668 = vpack.c.b16 %v604, %v604
      %v669 = vpack.c.b16 %v605, %v605
      %v670 = vpack.c.b16 %v606, %v606
      %v671 = vpack.c.b16 %v607, %v607
      %v672 = vpack.c.b16 %v608, %v608
      %v673 = vpack.c.b16 %v609, %v609
      %v674 = vpack.c.b16 %v610, %v610
      %v675 = vpack.c.b16 %v611, %v611
      %v676 = vpack.c.b16 %v612, %v612
      %v677 = vpack.c.b16 %v613, %v613
      %v678 = vpack.c.b16 %v614, %v614
      %v679 = vpack.c.b16 %v615, %v615
      %v680 = vpack.c.b16 %v616, %v616
      %v681 = vpack.c.b16 %v617, %v617
      %v682 = vpack.c.b16 %v618, %v618
      %v683 = vpack.c.b16 %v619, %v619
      %v684 = vpack.c.b16 %v620, %v620
      %v685 = vpack.c.b16 %v621, %v621
      %v686 = vpack.c.b16 %v622, %v622
      %v687 = vpack.c.b16 %v623, %v623
      %v688 = vpack.c.b16 %v624, %v624
      %v689 = vpack.c.b16 %v625, %v625
      %v690 = vpack.c.b16 %v626, %v626
      %v691 = vpack.c.b16 %v627, %v627
      %v692 = vpack.c.b16 %v628, %v628
      %v693 = vpack.c.b16 %v629, %v629
      %v694 = vpack.c.b16 %v630, %v630
      %759 = vst [vmem:[%s231] sm:$0xf] %v631
      %760 = vst [vmem:[%s231 + $0x4] sm:$0xf] %v632
      %761 = vst [vmem:[%s231 + $0x8] sm:$0xf] %v633
      %762 = vst [vmem:[%s231 + $0xc] sm:$0xf] %v634
      %763 = vst [vmem:[%s231 + $0x10] sm:$0xf] %v635
      %764 = vst [vmem:[%s231 + $0x14] sm:$0xf] %v636
      %765 = vst [vmem:[%s231 + $0x18] sm:$0xf] %v637
      %766 = vst [vmem:[%s231 + $0x1c] sm:$0xf] %v638
      %767 = vst [vmem:[%s231 + $0x20] sm:$0xf] %v639
      %768 = vst [vmem:[%s231 + $0x24] sm:$0xf] %v640
      %769 = vst [vmem:[%s231 + $0x28] sm:$0xf] %v641
      %770 = vst [vmem:[%s231 + $0x2c] sm:$0xf] %v642
      %771 = vst [vmem:[%s231 + $0x30] sm:$0xf] %v643
      %772 = vst [vmem:[%s231 + $0x34] sm:$0xf] %v644
      %773 = vst [vmem:[%s231 + $0x38] sm:$0xf] %v645
      %774 = vst [vmem:[%s231 + $0x3c] sm:$0xf] %v646
      %775 = vst [vmem:[%s231 + $0x40] sm:$0xf] %v647
      %776 = vst [vmem:[%s231 + $0x44] sm:$0xf] %v648
      %777 = vst [vmem:[%s231 + $0x48] sm:$0xf] %v649
      %778 = vst [vmem:[%s231 + $0x4c] sm:$0xf] %v650
      %779 = vst [vmem:[%s231 + $0x50] sm:$0xf] %v651
      %780 = vst [vmem:[%s231 + $0x54] sm:$0xf] %v652
      %781 = vst [vmem:[%s231 + $0x58] sm:$0xf] %v653
      %782 = vst [vmem:[%s231 + $0x5c] sm:$0xf] %v654
      %783 = vst [vmem:[%s231 + $0x60] sm:$0xf] %v655
      %784 = vst [vmem:[%s231 + $0x64] sm:$0xf] %v656
      %785 = vst [vmem:[%s231 + $0x68] sm:$0xf] %v657
      %786 = vst [vmem:[%s231 + $0x6c] sm:$0xf] %v658
      %787 = vst [vmem:[%s231 + $0x70] sm:$0xf] %v659
      %788 = vst [vmem:[%s231 + $0x74] sm:$0xf] %v660
      %789 = vst [vmem:[%s231 + $0x78] sm:$0xf] %v661
      %790 = vst [vmem:[%s231 + $0x7c] sm:$0xf] %v662
      %791 = vst [vmem:[%s231 + $0x80] sm:$0xf] %v663
      %792 = vst [vmem:[%s231 + $0x84] sm:$0xf] %v664
      %793 = vst [vmem:[%s231 + $0x88] sm:$0xf] %v665
      %794 = vst [vmem:[%s231 + $0x8c] sm:$0xf] %v666
      %795 = vst [vmem:[%s231 + $0x90] sm:$0xf] %v667
      %796 = vst [vmem:[%s231 + $0x94] sm:$0xf] %v668
      %797 = vst [vmem:[%s231 + $0x98] sm:$0xf] %v669
      %798 = vst [vmem:[%s231 + $0x9c] sm:$0xf] %v670
      %799 = vst [vmem:[%s231 + $0xa0] sm:$0xf] %v671
      %800 = vst [vmem:[%s231 + $0xa4] sm:$0xf] %v672
      %801 = vst [vmem:[%s231 + $0xa8] sm:$0xf] %v673
      %802 = vst [vmem:[%s231 + $0xac] sm:$0xf] %v674
      %803 = vst [vmem:[%s231 + $0xb0] sm:$0xf] %v675
      %804 = vst [vmem:[%s231 + $0xb4] sm:$0xf] %v676
      %805 = vst [vmem:[%s231 + $0xb8] sm:$0xf] %v677
      %806 = vst [vmem:[%s231 + $0xbc] sm:$0xf] %v678
      %807 = vst [vmem:[%s231 + $0xc0] sm:$0xf] %v679
      %808 = vst [vmem:[%s231 + $0xc4] sm:$0xf] %v680
      %809 = vst [vmem:[%s231 + $0xc8] sm:$0xf] %v681
      %810 = vst [vmem:[%s231 + $0xcc] sm:$0xf] %v682
      %811 = vst [vmem:[%s231 + $0xd0] sm:$0xf] %v683
      %812 = vst [vmem:[%s231 + $0xd4] sm:$0xf] %v684
      %813 = vst [vmem:[%s231 + $0xd8] sm:$0xf] %v685
      %814 = vst [vmem:[%s231 + $0xdc] sm:$0xf] %v686
      %815 = vst [vmem:[%s231 + $0xe0] sm:$0xf] %v687
      %816 = vst [vmem:[%s231 + $0xe4] sm:$0xf] %v688
      %817 = vst [vmem:[%s231 + $0xe8] sm:$0xf] %v689
      %818 = vst [vmem:[%s231 + $0xec] sm:$0xf] %v690
      %819 = vst [vmem:[%s231 + $0xf0] sm:$0xf] %v691
      %820 = vst [vmem:[%s231 + $0xf4] sm:$0xf] %v692
      %821 = vst [vmem:[%s231 + $0xf8] sm:$0xf] %v693
      %822 = vst [vmem:[%s231 + $0xfc] sm:$0xf] %v694
      %s823 = smul.u32 64, %s18
      %p824 = scmp.lt.s32.totalorder %s823, 127
      %s825 = scalar_select %p824, %s823, 127
      %p826 = scmp.lt.s32.totalorder %s19, 0
      %s827 = scalar_select %p826, %s19, 0
      %s828 = sadd.s32 %s827, %s825
      %s829 = smul.addr %s828, 4
      %s830 = scalar_lea.vmem %s3, %s829
      // Predicated region
      $region33: #{forward.17} parent=31 // pred_check
        %p831 = pneg %p126
      $region34: #{forward.17} parent=31 // pred_check_branch
        %833 = sbr.rel (%p831) target = $region36
      $region35: #{forward.17} parent=31 // pred_region
        %s834 = smul.u32 64, %s18
      $region36: #{forward.17} parent=31 // pred_fallthru
        _
    $region32: #{forward.17} parent=5 // pred_fallthru
      _
    %p835 = scmp.le.s32.totalorder 2, %s9
    // Predicated region
    $region37: #{forward.17} parent=5 // pred_check
      %p836 = pneg %p835
    $region38: #{forward.17} parent=5 // pred_check_branch
      %838 = sbr.rel (%p836) target = $region40
    $region39: #{forward.17} parent=5 // pred_region
      %s839 = ssub.s32 %s9, 2
      // Predicated region
      $region41: #{forward.17} parent=39 // pred_check
        %p840 = pneg %p132
      $region42: #{forward.17} parent=39 // pred_check_branch
        %842 = sbr.rel (%p840) target = $region44
      $region43: #{forward.17} parent=39 // pred_region
        %s843 = smul.u32 64, %s20
        %p844 = scmp.lt.s32.totalorder %s843, 127
        %s845 = scalar_select %p844, %s843, 127
        %p846 = scmp.lt.s32.totalorder %s21, 0
        %s847 = scalar_select %p846, %s21, 0
        %s848 = sadd.s32 %s847, %s845
        %s849 = smul.addr %s848, 4
        %s850 = scalar_lea.vmem %s3, %s849
      $region44: #{forward.17} parent=39 // pred_fallthru
        _
    $region40: #{forward.17} parent=5 // pred_fallthru
      _
  $region6: #{forward.17} parent=0 // loop_footer
    %s13 = sadd.s32 1, %s9
  $region7: #{forward.17} parent=0 // loop_footer_branch
    %8 = sbr.rel target = $region3
  $region8: #{forward.17} parent=0 // loop_exit
    _

// kernel: forward.16
$region0: #{forward.16}
  #allocation0 [shape = 'u32[]', space=smem, size = 0x4, offset = 0x4, fixed_abs, tag = 'smem constant byte address 0x4 - core index']
  #allocation1 [shape = 'u32[144,128]{1,0:T(1,128)}', space=vmem, size = 0x12000, scoped, tag = 'internal scratch']
  %s0 = inlined_call_operand.vmem [shape: bf16[1024,128], index: 0, kind: input, shape index: {}]
  %s1 = inlined_call_operand.vmem [shape: bf16[128,128], index: 1, kind: input, shape index: {}]
  %s2 = inlined_call_operand.vmem [shape: f32[1,128], index: 2, kind: input, shape index: {}]
  %s3 = inlined_call_operand.vmem [shape: bf16[1024,128], index: 3, kind: output, shape index: {0}]
  %s4 = inlined_call_operand.vmem [shape: f32[2,1,128], index: 4, kind: output, shape index: {1}]
  %s5 = inlined_call_operand.vmem [shape: f32[2,1,128], index: 5, kind: output, shape index: {2}]
  %6 = xla_tuple %s3, %s4, %s5
  %s7 = sld [smem:[#allocation0]]
  $region61: #{forward.16} parent=0
    _
  %s9 = ssub.s32 1, %s7
  %s10 = scalar_select 0, %s9, %s7
  loop: start=0, step=1, limit=4
  $region2: #{forward.16} parent=0 // loop_pre_header
    _
  $region3: #{forward.16} parent=0 // loop_header
    %s12 = sphi 0, %s16
    %p13 = scmp.ge.s32.totalorder %s12, 4
    %s19 = sphi 0, %s31
    %s20 = sphi 0, %s27
    %s21 = sphi 0, %s19
    %s22 = sphi 0, %s20
    %s23 = sphi 0, %s21
    %s24 = sphi 0, %s22
    %s34 = sphi 0, %s36
    %s37 = sphi 0, %s34
    %s38 = sphi 0, %s37
    %s54 = sphi 0, %s38
    %s60 = sphi 0, %s62
    %s63 = sphi 0, %s60
    %s64 = sphi 0, %s63
    %s80 = sphi 0, %s64
    %s86 = sphi 0, %s88
    %s89 = sphi 0, %s86
    %s90 = sphi 0, %s89
    %s106 = sphi 0, %s90
    %s114 = sphi 0, %s116
    %s117 = sphi 0, %s114
    %s118 = sphi 0, %s117
    %s134 = sphi 0, %s118
    %s142 = sphi 0, %s144
    %s145 = sphi 0, %s142
    %s146 = sphi 0, %s145
    %s162 = sphi 0, %s146
    %s170 = sphi 0, %s172
    %s173 = sphi 0, %s170
    %s174 = sphi 0, %s173
    %s190 = sphi 0, %s174
  $region4: #{forward.16} parent=0 // loop_header_branch
    %15 = sbr.rel (%p13) target = $region8
  $region5: #{forward.16} parent=0 // loop_body
    %s17 = ssub.s32 %s12, 1
    %s18 = ssub.s32 %s12, 2
    %s25 = sadd.s32 1, %s20
    %p26 = scmp.ge.s32.totalorder %s25, 1
    %s27 = scalar_select %p26, 0, %s25
    %s28 = sadd.s32 1, %s19
    %s29 = scalar_select %p26, %s28, %s19
    %p30 = scmp.ge.s32.totalorder %s29, 2
    %s31 = scalar_select %p30, 0, %s29
    %s32 = ssub.s32 %s19, %s31
    %p33 = scmp.eq.s32.totalorder %s32, 0
    %s35 = sadd.s32 %s34, 1
    %s36 = scalar_select %p33, %s34, %s35
    %p39 = pneg %p33
    %p40 = scmp.eq.s32.totalorder %s12, 1
    %p41 = por %p39, %p40
    %p42 = scmp.ne.s32.totalorder %s34, %s37
    %p43 = scmp.eq.s32.totalorder %s12, 0
    %p44 = por %p42, %p43
    %p45 = scmp.ne.s32.totalorder %s34, %s37
    %p46 = scmp.eq.s32.totalorder %s17, 1
    %p47 = por %p45, %p46
    %p48 = scmp.ne.s32.totalorder %s37, %s38
    %p49 = scmp.eq.s32.totalorder %s17, 0
    %p50 = por %p48, %p49
    %p51 = scmp.ne.s32.totalorder %s37, %s38
    %p52 = scmp.eq.s32.totalorder %s18, 1
    %p53 = por %p51, %p52
    %p55 = scmp.ne.s32.totalorder %s38, %s54
    %p56 = scmp.eq.s32.totalorder %s18, 0
    %p57 = por %p55, %p56
    %s58 = ssub.s32 %s20, %s27
    %p59 = scmp.eq.s32.totalorder %s58, 0
    %s61 = sadd.s32 %s60, 1
    %s62 = scalar_select %p59, %s60, %s61
    %p65 = pneg %p59
    %p66 = scmp.eq.s32.totalorder %s12, 1
    %p67 = por %p65, %p66
    %p68 = scmp.ne.s32.totalorder %s60, %s63
    %p69 = scmp.eq.s32.totalorder %s12, 0
    %p70 = por %p68, %p69
    %p71 = scmp.ne.s32.totalorder %s60, %s63
    %p72 = scmp.eq.s32.totalorder %s17, 1
    %p73 = por %p71, %p72
    %p74 = scmp.ne.s32.totalorder %s63, %s64
    %p75 = scmp.eq.s32.totalorder %s17, 0
    %p76 = por %p74, %p75
    %p77 = scmp.ne.s32.totalorder %s63, %s64
    %p78 = scmp.eq.s32.totalorder %s18, 1
    %p79 = por %p77, %p78
    %p81 = scmp.ne.s32.totalorder %s64, %s80
    %p82 = scmp.eq.s32.totalorder %s18, 0
    %p83 = por %p81, %p82
    %s84 = ssub.s32 %s20, %s27
    %p85 = scmp.eq.s32.totalorder %s84, 0
    %s87 = sadd.s32 %s86, 1
    %s88 = scalar_select %p85, %s86, %s87
    %p91 = pneg %p85
    %p92 = scmp.eq.s32.totalorder %s12, 1
    %p93 = por %p91, %p92
    %p94 = scmp.ne.s32.totalorder %s86, %s89
    %p95 = scmp.eq.s32.totalorder %s12, 0
    %p96 = por %p94, %p95
    %p97 = scmp.ne.s32.totalorder %s86, %s89
    %p98 = scmp.eq.s32.totalorder %s17, 1
    %p99 = por %p97, %p98
    %p100 = scmp.ne.s32.totalorder %s89, %s90
    %p101 = scmp.eq.s32.totalorder %s17, 0
    %p102 = por %p100, %p101
    %p103 = scmp.ne.s32.totalorder %s89, %s90
    %p104 = scmp.eq.s32.totalorder %s18, 1
    %p105 = por %p103, %p104
    %p107 = scmp.ne.s32.totalorder %s90, %s106
    %p108 = scmp.eq.s32.totalorder %s18, 0
    %p109 = por %p107, %p108
    %s110 = ssub.s32 %s19, %s31
    %s111 = ssub.s32 %s20, %s27
    %s112 = sor.u32 %s110, %s111
    %p113 = scmp.eq.s32.totalorder %s112, 0
    %s115 = sadd.s32 %s114, 1
    %s116 = scalar_select %p113, %s114, %s115
    %p119 = pneg %p113
    %p120 = scmp.eq.s32.totalorder %s12, 1
    %p121 = por %p119, %p120
    %p122 = scmp.ne.s32.totalorder %s114, %s117
    %p123 = scmp.eq.s32.totalorder %s12, 0
    %p124 = por %p122, %p123
    %p125 = scmp.ne.s32.totalorder %s114, %s117
    %p126 = scmp.eq.s32.totalorder %s17, 1
    %p127 = por %p125, %p126
    %p128 = scmp.ne.s32.totalorder %s117, %s118
    %p129 = scmp.eq.s32.totalorder %s17, 0
    %p130 = por %p128, %p129
    %p131 = scmp.ne.s32.totalorder %s117, %s118
    %p132 = scmp.eq.s32.totalorder %s18, 1
    %p133 = por %p131, %p132
    %p135 = scmp.ne.s32.totalorder %s118, %s134
    %p136 = scmp.eq.s32.totalorder %s18, 0
    %p137 = por %p135, %p136
    %s138 = ssub.s32 %s19, %s31
    %s139 = ssub.s32 %s20, %s27
    %s140 = sor.u32 %s138, %s139
    %p141 = scmp.eq.s32.totalorder %s140, 0
    %s143 = sadd.s32 %s142, 1
    %s144 = scalar_select %p141, %s142, %s143
    %p147 = pneg %p141
    %p148 = scmp.eq.s32.totalorder %s12, 1
    %p149 = por %p147, %p148
    %p150 = scmp.ne.s32.totalorder %s142, %s145
    %p151 = scmp.eq.s32.totalorder %s12, 0
    %p152 = por %p150, %p151
    %p153 = scmp.ne.s32.totalorder %s142, %s145
    %p154 = scmp.eq.s32.totalorder %s17, 1
    %p155 = por %p153, %p154
    %p156 = scmp.ne.s32.totalorder %s145, %s146
    %p157 = scmp.eq.s32.totalorder %s17, 0
    %p158 = por %p156, %p157
    %p159 = scmp.ne.s32.totalorder %s145, %s146
    %p160 = scmp.eq.s32.totalorder %s18, 1
    %p161 = por %p159, %p160
    %p163 = scmp.ne.s32.totalorder %s146, %s162
    %p164 = scmp.eq.s32.totalorder %s18, 0
    %p165 = por %p163, %p164
    %s166 = ssub.s32 %s19, %s31
    %s167 = ssub.s32 %s20, %s27
    %s168 = sor.u32 %s166, %s167
    %p169 = scmp.eq.s32.totalorder %s168, 0
    %s171 = sadd.s32 %s170, 1
    %s172 = scalar_select %p169, %s170, %s171
    %p175 = pneg %p169
    %p176 = scmp.eq.s32.totalorder %s12, 1
    %p177 = por %p175, %p176
    %p178 = scmp.ne.s32.totalorder %s170, %s173
    %p179 = scmp.eq.s32.totalorder %s12, 0
    %p180 = por %p178, %p179
    %p181 = scmp.ne.s32.totalorder %s170, %s173
    %p182 = scmp.eq.s32.totalorder %s17, 1
    %p183 = por %p181, %p182
    %p184 = scmp.ne.s32.totalorder %s173, %s174
    %p185 = scmp.eq.s32.totalorder %s17, 0
    %p186 = por %p184, %p185
    %p187 = scmp.ne.s32.totalorder %s173, %s174
    %p188 = scmp.eq.s32.totalorder %s18, 1
    %p189 = por %p187, %p188
    %p191 = scmp.ne.s32.totalorder %s174, %s190
    %p192 = scmp.eq.s32.totalorder %s18, 0
    %p193 = por %p191, %p192
    %p194 = scmp.le.s32.totalorder 1, %s12
    %p195 = scmp.lt.s32.totalorder %s12, 3
    %p196 = pnand %p194, %p195
    %p197 = pneg %p196
    // Predicated region
    $region9: #{forward.16} parent=5 // pred_check
      _
    $region10: #{forward.16} parent=5 // pred_check_branch
      %199 = sbr.rel (%p196) target = $region12
    $region11: #{forward.16} parent=5 // pred_region
      %s200 = ssub.s32 %s12, 1
      // Predicated region
      $region13: #{forward.16} parent=11 // pred_check
        %p201 = pneg %p76
      $region14: #{forward.16} parent=11 // pred_check_branch
        %203 = sbr.rel (%p201) target = $region16
      $region15: #{forward.16} parent=11 // pred_region
        %p204 = scmp.lt.s32.totalorder %s22, 0
        %s205 = scalar_select %p204, %s22, 0
        %s206 = smul.addr %s205, 4
        %s207 = scalar_lea.vmem %s1, %s206
      $region16: #{forward.16} parent=11 // pred_fallthru
        _
      // Predicated region
      $region17: #{forward.16} parent=11 // pred_check
        %p208 = pneg %p102
      $region18: #{forward.16} parent=11 // pred_check_branch
        %210 = sbr.rel (%p208) target = $region20
      $region19: #{forward.16} parent=11 // pred_region
        %p211 = scmp.lt.s32.totalorder %s22, 0
        %s212 = scalar_select %p211, %s22, 0
        %s213 = scalar_lea.vmem %s2, %s212
      $region20: #{forward.16} parent=11 // pred_fallthru
        _
    $region12: #{forward.16} parent=5 // pred_fallthru
      _
    %p214 = scmp.lt.s32.totalorder %s12, 2
    // Predicated region
    $region21: #{forward.16} parent=5 // pred_check
      %p215 = pneg %p214
    $region22: #{forward.16} parent=5 // pred_check_branch
      %217 = sbr.rel (%p215) target = $region24
    $region23: #{forward.16} parent=5 // pred_region
      // Predicated region
      $region25: #{forward.16} parent=23 // pred_check
        %p218 = pneg %p44
      $region26: #{forward.16} parent=23 // pred_check_branch
        %220 = sbr.rel (%p218) target = $region28
      $region27: #{forward.16} parent=23 // pred_region
        %s221 = smul.u32 64, %s19
        %p222 = scmp.lt.s32.totalorder %s221, 127
        %s223 = scalar_select %p222, %s221, 127
        %s224 = smul.addr %s223, 4
        %s225 = scalar_lea.vmem %s0, %s224
        %s226 = smul.u32 64, %s19
      $region28: #{forward.16} parent=23 // pred_fallthru
        _
    $region24: #{forward.16} parent=5 // pred_fallthru
      _
    %p227 = scmp.le.s32.totalorder 1, %s12
    %p228 = scmp.lt.s32.totalorder %s12, 3
    %p229 = pnand %p227, %p228
    %p230 = pneg %p229
    // Predicated region
    $region29: #{forward.16} parent=5 // pred_check
      _
    $region30: #{forward.16} parent=5 // pred_check_branch
      %232 = sbr.rel (%p229) target = $region32
    $region31: #{forward.16} parent=5 // pred_region
      %s233 = ssub.s32 %s12, 1
      %s234 = smul.u32 64, %s21
      %p235 = scmp.lt.s32.totalorder %s234, 127
      %s236 = scalar_select %p235, %s234, 127
      %s237 = smul.addr %s236, 4
      %s238 = scalar_lea.vmem %s0, %s237
      %p239 = pneg %p50
      %p240 = pneg %p47
      %p241 = scmp.lt.s32.totalorder %s22, 0
      %s242 = scalar_select %p241, %s22, 0
      %s243 = smul.addr %s242, 4
      %s244 = scalar_lea.vmem %s1, %s243
      %p245 = pneg %p76
      %p246 = pneg %p73
      %p247 = scmp.lt.s32.totalorder %s22, 0
      %s248 = scalar_select %p247, %s22, 0
      %s249 = scalar_lea.vmem %s2, %s248
      %p250 = pneg %p102
      %p251 = pneg %p99
      %p252 = pneg %p130
      %p253 = pneg %p127
      %s254 = smul.u32 64, %s21
      %p255 = scmp.lt.s32.totalorder %s254, 127
      %s256 = scalar_select %p255, %s254, 127
      %p257 = scmp.lt.s32.totalorder %s22, 0
      %s258 = scalar_select %p257, %s22, 0
      %s259 = sadd.s32 %s258, %s256
      %s260 = smul.addr %s259, 4
      %s261 = scalar_lea.vmem %s3, %s260
      %p262 = pneg %p158
      %p263 = pneg %p155
      %p264 = scmp.lt.s32.totalorder %s21, 1
      %s265 = scalar_select %p264, %s21, 1
      %p266 = scmp.lt.s32.totalorder %s22, 0
      %s267 = scalar_select %p266, %s22, 0
      %s268 = sadd.s32 %s267, %s265
      %s269 = scalar_lea.vmem %s4, %s268
      %p270 = pneg %p186
      %p271 = pneg %p183
      %p272 = scmp.lt.s32.totalorder %s21, 1
      %s273 = scalar_select %p272, %s21, 1
      %p274 = scmp.lt.s32.totalorder %s22, 0
      %s275 = scalar_select %p274, %s22, 0
      %s276 = sadd.s32 %s275, %s273
      %s277 = scalar_lea.vmem %s5, %s276
      %s278 = smul.u32 64, %s21
      %p279 = scmp.lt.s32.totalorder %s278, 127
      %s280 = scalar_select %p279, %s278, 127
      %s281 = smul.addr %s280, 4
      %s282 = scalar_lea.vmem %s0, %s281
      %s283 = smul.u32 64, %s21
      %p284 = scmp.lt.s32.totalorder %s22, 0
      %s285 = scalar_select %p284, %s22, 0
      %s286 = smul.addr %s285, 4
      %s287 = scalar_lea.vmem %s1, %s286
      %p288 = scmp.lt.s32.totalorder %s22, 0
      %s289 = scalar_select %p288, %s22, 0
      %s290 = scalar_lea.vmem %s2, %s289
      %s291 = smul.u32 64, %s21
      %p292 = scmp.lt.s32.totalorder %s291, 127
      %s293 = scalar_select %p292, %s291, 127
      %p294 = scmp.lt.s32.totalorder %s22, 0
      %s295 = scalar_select %p294, %s22, 0
      %s296 = sadd.s32 %s295, %s293
      %s297 = smul.addr %s296, 4
      %s298 = scalar_lea.vmem %s3, %s297
      %s299 = smul.u32 64, %s21
      %p300 = scmp.lt.s32.totalorder %s21, 1
      %s301 = scalar_select %p300, %s21, 1
      %p302 = scmp.lt.s32.totalorder %s22, 0
      %s303 = scalar_select %p302, %s22, 0
      %s304 = sadd.s32 %s303, %s301
      %s305 = scalar_lea.vmem %s4, %s304
      %p306 = scmp.lt.s32.totalorder %s21, 1
      %s307 = scalar_select %p306, %s21, 1
      %p308 = scmp.lt.s32.totalorder %s22, 0
      %s309 = scalar_select %p308, %s22, 0
      %s310 = sadd.s32 %s309, %s307
      %s311 = scalar_lea.vmem %s5, %s310
      %v313 = vld [vmem:[%s282] sm:$0xf]
      %v314 = vld [vmem:[%s282 + $0x4] sm:$0xf]
      %v315 = vld [vmem:[%s282 + $0x8] sm:$0xf]
      %v316 = vld [vmem:[%s282 + $0xc] sm:$0xf]
      %v317 = vld [vmem:[%s282 + $0x10] sm:$0xf]
      %v318 = vld [vmem:[%s282 + $0x14] sm:$0xf]
      %v319 = vld [vmem:[%s282 + $0x18] sm:$0xf]
      %v320 = vld [vmem:[%s282 + $0x1c] sm:$0xf]
      %v321 = vld [vmem:[%s282 + $0x20] sm:$0xf]
      %v322 = vld [vmem:[%s282 + $0x24] sm:$0xf]
      %v323 = vld [vmem:[%s282 + $0x28] sm:$0xf]
      %v324 = vld [vmem:[%s282 + $0x2c] sm:$0xf]
      %v325 = vld [vmem:[%s282 + $0x30] sm:$0xf]
      %v326 = vld [vmem:[%s282 + $0x34] sm:$0xf]
      %v327 = vld [vmem:[%s282 + $0x38] sm:$0xf]
      %v328 = vld [vmem:[%s282 + $0x3c] sm:$0xf]
      %v329 = vld [vmem:[%s282 + $0x40] sm:$0xf]
      %v330 = vld [vmem:[%s282 + $0x44] sm:$0xf]
      %v331 = vld [vmem:[%s282 + $0x48] sm:$0xf]
      %v332 = vld [vmem:[%s282 + $0x4c] sm:$0xf]
      %v333 = vld [vmem:[%s282 + $0x50] sm:$0xf]
      %v334 = vld [vmem:[%s282 + $0x54] sm:$0xf]
      %v335 = vld [vmem:[%s282 + $0x58] sm:$0xf]
      %v336 = vld [vmem:[%s282 + $0x5c] sm:$0xf]
      %v337 = vld [vmem:[%s282 + $0x60] sm:$0xf]
      %v338 = vld [vmem:[%s282 + $0x64] sm:$0xf]
      %v339 = vld [vmem:[%s282 + $0x68] sm:$0xf]
      %v340 = vld [vmem:[%s282 + $0x6c] sm:$0xf]
      %v341 = vld [vmem:[%s282 + $0x70] sm:$0xf]
      %v342 = vld [vmem:[%s282 + $0x74] sm:$0xf]
      %v343 = vld [vmem:[%s282 + $0x78] sm:$0xf]
      %v344 = vld [vmem:[%s282 + $0x7c] sm:$0xf]
      %v345 = vld [vmem:[%s282 + $0x80] sm:$0xf]
      %v346 = vld [vmem:[%s282 + $0x84] sm:$0xf]
      %v347 = vld [vmem:[%s282 + $0x88] sm:$0xf]
      %v348 = vld [vmem:[%s282 + $0x8c] sm:$0xf]
      %v349 = vld [vmem:[%s282 + $0x90] sm:$0xf]
      %v350 = vld [vmem:[%s282 + $0x94] sm:$0xf]
      %v351 = vld [vmem:[%s282 + $0x98] sm:$0xf]
      %v352 = vld [vmem:[%s282 + $0x9c] sm:$0xf]
      %v353 = vld [vmem:[%s282 + $0xa0] sm:$0xf]
      %v354 = vld [vmem:[%s282 + $0xa4] sm:$0xf]
      %v355 = vld [vmem:[%s282 + $0xa8] sm:$0xf]
      %v356 = vld [vmem:[%s282 + $0xac] sm:$0xf]
      %v357 = vld [vmem:[%s282 + $0xb0] sm:$0xf]
      %v358 = vld [vmem:[%s282 + $0xb4] sm:$0xf]
      %v359 = vld [vmem:[%s282 + $0xb8] sm:$0xf]
      %v360 = vld [vmem:[%s282 + $0xbc] sm:$0xf]
      %v361 = vld [vmem:[%s282 + $0xc0] sm:$0xf]
      %v362 = vld [vmem:[%s282 + $0xc4] sm:$0xf]
      %v363 = vld [vmem:[%s282 + $0xc8] sm:$0xf]
      %v364 = vld [vmem:[%s282 + $0xcc] sm:$0xf]
      %v365 = vld [vmem:[%s282 + $0xd0] sm:$0xf]
      %v366 = vld [vmem:[%s282 + $0xd4] sm:$0xf]
      %v367 = vld [vmem:[%s282 + $0xd8] sm:$0xf]
      %v368 = vld [vmem:[%s282 + $0xdc] sm:$0xf]
      %v369 = vld [vmem:[%s282 + $0xe0] sm:$0xf]
      %v370 = vld [vmem:[%s282 + $0xe4] sm:$0xf]
      %v371 = vld [vmem:[%s282 + $0xe8] sm:$0xf]
      %v372 = vld [vmem:[%s282 + $0xec] sm:$0xf]
      %v373 = vld [vmem:[%s282 + $0xf0] sm:$0xf]
      %v374 = vld [vmem:[%s282 + $0xf4] sm:$0xf]
      %v375 = vld [vmem:[%s282 + $0xf8] sm:$0xf]
      %v376 = vld [vmem:[%s282 + $0xfc] sm:$0xf]
      %v377 = vld [vmem:[%s287] sm:$0xf]
      %v378 = vld [vmem:[%s287 + $0x4] sm:$0xf]
      %v379 = vld [vmem:[%s287 + $0x8] sm:$0xf]
      %v380 = vld [vmem:[%s287 + $0xc] sm:$0xf]
      %v381 = vld [vmem:[%s287 + $0x10] sm:$0xf]
      %v382 = vld [vmem:[%s287 + $0x14] sm:$0xf]
      %v383 = vld [vmem:[%s287 + $0x18] sm:$0xf]
      %v384 = vld [vmem:[%s287 + $0x1c] sm:$0xf]
      %v385 = vld [vmem:[%s287 + $0x20] sm:$0xf]
      %v386 = vld [vmem:[%s287 + $0x24] sm:$0xf]
      %v387 = vld [vmem:[%s287 + $0x28] sm:$0xf]
      %v388 = vld [vmem:[%s287 + $0x2c] sm:$0xf]
      %v389 = vld [vmem:[%s287 + $0x30] sm:$0xf]
      %v390 = vld [vmem:[%s287 + $0x34] sm:$0xf]
      %v391 = vld [vmem:[%s287 + $0x38] sm:$0xf]
      %v392 = vld [vmem:[%s287 + $0x3c] sm:$0xf]
      %v393 = vld [vmem:[%s290] sm:$0x1]
      %v395 = vlaneseq
      %v396 = vshrl.u32 %v395, 7
      %v397 = vsub.s32 0, %v396
      %v398 = vrot.slane %v393, %v397
      %v464 = vunpack.c.l.b16 %v313
      %v465 = vunpack.c.l.b16 %v314
      %v466 = vunpack.c.l.b16 %v315
      %v467 = vunpack.c.l.b16 %v316
      %v468 = vunpack.c.l.b16 %v317
      %v469 = vunpack.c.l.b16 %v318
      %v470 = vunpack.c.l.b16 %v319
      %v471 = vunpack.c.l.b16 %v320
      %v472 = vunpack.c.l.b16 %v321
      %v473 = vunpack.c.l.b16 %v322
      %v474 = vunpack.c.l.b16 %v323
      %v475 = vunpack.c.l.b16 %v324
      %v476 = vunpack.c.l.b16 %v325
      %v477 = vunpack.c.l.b16 %v326
      %v478 = vunpack.c.l.b16 %v327
      %v479 = vunpack.c.l.b16 %v328
      %v480 = vunpack.c.l.b16 %v329
      %v481 = vunpack.c.l.b16 %v330
      %v482 = vunpack.c.l.b16 %v331
      %v483 = vunpack.c.l.b16 %v332
      %v484 = vunpack.c.l.b16 %v333
      %v485 = vunpack.c.l.b16 %v334
      %v486 = vunpack.c.l.b16 %v335
      %v487 = vunpack.c.l.b16 %v336
      %v488 = vunpack.c.l.b16 %v337
      %v489 = vunpack.c.l.b16 %v338
      %v490 = vunpack.c.l.b16 %v339
      %v491 = vunpack.c.l.b16 %v340
      %v492 = vunpack.c.l.b16 %v341
      %v493 = vunpack.c.l.b16 %v342
      %v494 = vunpack.c.l.b16 %v343
      %v495 = vunpack.c.l.b16 %v344
      %v496 = vunpack.c.l.b16 %v345
      %v497 = vunpack.c.l.b16 %v346
      %v498 = vunpack.c.l.b16 %v347
      %v499 = vunpack.c.l.b16 %v348
      %v500 = vunpack.c.l.b16 %v349
      %v501 = vunpack.c.l.b16 %v350
      %v502 = vunpack.c.l.b16 %v351
      %v503 = vunpack.c.l.b16 %v352
      %v504 = vunpack.c.l.b16 %v353
      %v505 = vunpack.c.l.b16 %v354
      %v506 = vunpack.c.l.b16 %v355
      %v507 = vunpack.c.l.b16 %v356
      %v508 = vunpack.c.l.b16 %v357
      %v509 = vunpack.c.l.b16 %v358
      %v510 = vunpack.c.l.b16 %v359
      %v511 = vunpack.c.l.b16 %v360
      %v512 = vunpack.c.l.b16 %v361
      %v513 = vunpack.c.l.b16 %v362
      %v514 = vunpack.c.l.b16 %v363
      %v515 = vunpack.c.l.b16 %v364
      %v516 = vunpack.c.l.b16 %v365
      %v517 = vunpack.c.l.b16 %v366
      %v518 = vunpack.c.l.b16 %v367
      %v519 = vunpack.c.l.b16 %v368
      %v520 = vunpack.c.l.b16 %v369
      %v521 = vunpack.c.l.b16 %v370
      %v522 = vunpack.c.l.b16 %v371
      %v523 = vunpack.c.l.b16 %v372
      %v524 = vunpack.c.l.b16 %v373
      %v525 = vunpack.c.l.b16 %v374
      %v526 = vunpack.c.l.b16 %v375
      %v527 = vunpack.c.l.b16 %v376
      %v528 = vpack.c.b16 %v465, %v464
      %v529 = vpack.c.b16 %v467, %v466
      %v530 = vpack.c.b16 %v469, %v468
      %v531 = vpack.c.b16 %v471, %v470
      %v532 = vpack.c.b16 %v473, %v472
      %v533 = vpack.c.b16 %v475, %v474
      %v534 = vpack.c.b16 %v477, %v476
      %v535 = vpack.c.b16 %v479, %v478
      %v536 = vpack.c.b16 %v481, %v480
      %v537 = vpack.c.b16 %v483, %v482
      %v538 = vpack.c.b16 %v485, %v484
      %v539 = vpack.c.b16 %v487, %v486
      %v540 = vpack.c.b16 %v489, %v488
      %v541 = vpack.c.b16 %v491, %v490
      %v542 = vpack.c.b16 %v493, %v492
      %v543 = vpack.c.b16 %v495, %v494
      %v544 = vpack.c.b16 %v497, %v496
      %v545 = vpack.c.b16 %v499, %v498
      %v546 = vpack.c.b16 %v501, %v500
      %v547 = vpack.c.b16 %v503, %v502
      %v548 = vpack.c.b16 %v505, %v504
      %v549 = vpack.c.b16 %v507, %v506
      %v550 = vpack.c.b16 %v509, %v508
      %v551 = vpack.c.b16 %v511, %v510
      %v552 = vpack.c.b16 %v513, %v512
      %v553 = vpack.c.b16 %v515, %v514
      %v554 = vpack.c.b16 %v517, %v516
      %v555 = vpack.c.b16 %v519, %v518
      %v556 = vpack.c.b16 %v521, %v520
      %v557 = vpack.c.b16 %v523, %v522
      %v558 = vpack.c.b16 %v525, %v524
      %v559 = vpack.c.b16 %v527, %v526
      %v608 = vunpack.c.l.b16 %v377
      %v609 = vunpack.c.l.b16 %v378
      %v610 = vunpack.c.l.b16 %v379
      %v611 = vunpack.c.l.b16 %v380
      %v612 = vunpack.c.l.b16 %v381
      %v613 = vunpack.c.l.b16 %v382
      %v614 = vunpack.c.l.b16 %v383
      %v615 = vunpack.c.l.b16 %v384
      %v616 = vunpack.c.l.b16 %v385
      %v617 = vunpack.c.l.b16 %v386
      %v618 = vunpack.c.l.b16 %v387
      %v619 = vunpack.c.l.b16 %v388
      %v620 = vunpack.c.l.b16 %v389
      %v621 = vunpack.c.l.b16 %v390
      %v622 = vunpack.c.l.b16 %v391
      %v623 = vunpack.c.l.b16 %v392
      %v624 = vpack.c.b16 %v609, %v608
      %v625 = vpack.c.b16 %v611, %v610
      %v626 = vpack.c.b16 %v613, %v612
      %v627 = vpack.c.b16 %v615, %v614
      %v628 = vpack.c.b16 %v617, %v616
      %v629 = vpack.c.b16 %v619, %v618
      %v630 = vpack.c.b16 %v621, %v620
      %v631 = vpack.c.b16 %v623, %v622
      %640 = vmatprep.subr.bf16.mxu0 0
      %641 = vmatpush1.bf16.msra.mxu0 %v624
      %642 = vmatprep.subr.bf16.mxu0 0
      %643 = vmatpush1.bf16.msra.mxu0 %v625
      %644 = vmatprep.subr.bf16.mxu0 0
      %645 = vmatpush1.bf16.msra.mxu0 %v626
      %646 = vmatprep.subr.bf16.mxu0 0
      %647 = vmatpush1.bf16.msra.mxu0 %v627
      %648 = vmatprep.subr.bf16.mxu0 0
      %649 = vmatpush1.bf16.msra.mxu0 %v628
      %650 = vmatprep.subr.bf16.mxu0 0
      %651 = vmatpush1.bf16.msra.mxu0 %v629
      %652 = vmatprep.subr.bf16.mxu0 0
      %653 = vmatpush1.bf16.msra.mxu0 %v630
      %654 = vmatprep.subr.bf16.mxu0 0
      %655 = vmatpush1.bf16.msra.mxu0 %v631
      %656 = vmatprep.subr.bf16.mxu0 0
      %657 = vmatpush1.bf16.msra.mxu0 0
      %658 = vmatprep.subr.bf16.mxu0 0
      %659 = vmatpush1.bf16.msra.mxu0 0
      %660 = vmatprep.subr.bf16.mxu0 0
      %661 = vmatpush1.bf16.msra.mxu0 0
      %662 = vmatprep.subr.bf16.mxu0 0
      %663 = vmatpush1.bf16.msra.mxu0 0
      %664 = vmatprep.subr.bf16.mxu0 0
      %665 = vmatpush1.bf16.msra.mxu0 0
      %666 = vmatprep.subr.bf16.mxu0 0
      %667 = vmatpush1.bf16.msra.mxu0 0
      %668 = vmatprep.subr.bf16.mxu0 0
      %669 = vmatpush1.bf16.msra.mxu0 0
      %670 = vmatprep.subr.bf16.mxu0 0
      %671 = vmatpush1.bf16.msra.mxu0 0
      %672 = vmatprep.mubr.bf16.mxu0 0
      %673 = vmatmul.mubr.bf16.gmra.mrb[0].mxu0 %v528
      %v674 = vpop.f32.mrb[0].mxu0
      %v675 = vadd.f32 %v398, %v674
      %v676 = vpop.f32.mrb[0].mxu0
      %v677 = vpop.f32.mrb[0].mxu0
      %v678 = vadd.f32 %v398, %v677
      %v679 = vpop.f32.mrb[0].mxu0
      %680 = vmatprep.mubr.bf16.mxu0 0
      %681 = vmatmul.mubr.bf16.gmra.mrb[0].mxu0 %v529
      %v682 = vpop.f32.mrb[0].mxu0
      %v683 = vadd.f32 %v398, %v682
      %v684 = vpop.f32.mrb[0].mxu0
      %v685 = vpop.f32.mrb[0].mxu0
      %v686 = vadd.f32 %v398, %v685
      %v687 = vpop.f32.mrb[0].mxu0
      %688 = vmatprep.mubr.bf16.mxu0 0
      %689 = vmatmul.mubr.bf16.gmra.mrb[0].mxu0 %v530
      %v690 = vpop.f32.mrb[0].mxu0
      %v691 = vadd.f32 %v398, %v690
      %v692 = vpop.f32.mrb[0].mxu0
      %v693 = vpop.f32.mrb[0].mxu0
      %v694 = vadd.f32 %v398, %v693
      %v695 = vpop.f32.mrb[0].mxu0
      %696 = vmatprep.mubr.bf16.mxu0 0
      %697 = vmatmul.mubr.bf16.gmra.mrb[0].mxu0 %v531
      %v698 = vpop.f32.mrb[0].mxu0
      %v699 = vadd.f32 %v398, %v698
      %v700 = vpop.f32.mrb[0].mxu0
      %v701 = vpop.f32.mrb[0].mxu0
      %v702 = vadd.f32 %v398, %v701
      %v703 = vpop.f32.mrb[0].mxu0
      %704 = vmatprep.mubr.bf16.mxu0 0
      %705 = vmatmul.mubr.bf16.gmra.mrb[0].mxu0 %v532
      %v706 = vpop.f32.mrb[0].mxu0
      %v707 = vadd.f32 %v398, %v706
      %v708 = vpop.f32.mrb[0].mxu0
      %v709 = vpop.f32.mrb[0].mxu0
      %v710 = vadd.f32 %v398, %v709
      %v711 = vpop.f32.mrb[0].mxu0
      %712 = vmatprep.mubr.bf16.mxu0 0
      %713 = vmatmul.mubr.bf16.gmra.mrb[0].mxu0 %v533
      %v714 = vpop.f32.mrb[0].mxu0
      %v715 = vadd.f32 %v398, %v714
      %v716 = vpop.f32.mrb[0].mxu0
      %v717 = vpop.f32.mrb[0].mxu0
      %v718 = vadd.f32 %v398, %v717
      %v719 = vpop.f32.mrb[0].mxu0
      %720 = vmatprep.mubr.bf16.mxu0 0
      %721 = vmatmul.mubr.bf16.gmra.mrb[0].mxu0 %v534
      %v722 = vpop.f32.mrb[0].mxu0
      %v723 = vadd.f32 %v398, %v722
      %v724 = vpop.f32.mrb[0].mxu0
      %v725 = vpop.f32.mrb[0].mxu0
      %v726 = vadd.f32 %v398, %v725
      %v727 = vpop.f32.mrb[0].mxu0
      %728 = vmatprep.mubr.bf16.mxu0 0
      %729 = vmatmul.mubr.bf16.gmra.mrb[0].mxu0 %v535
      %v730 = vpop.f32.mrb[0].mxu0
      %v731 = vadd.f32 %v398, %v730
      %v732 = vpop.f32.mrb[0].mxu0
      %v733 = vpop.f32.mrb[0].mxu0
      %v734 = vadd.f32 %v398, %v733
      %v735 = vpop.f32.mrb[0].mxu0
      %736 = vmatprep.mubr.bf16.mxu0 0
      %737 = vmatmul.mubr.bf16.gmra.mrb[0].mxu0 %v536
      %v738 = vpop.f32.mrb[0].mxu0
      %v739 = vadd.f32 %v398, %v738
      %v740 = vpop.f32.mrb[0].mxu0
      %v741 = vpop.f32.mrb[0].mxu0
      %v742 = vadd.f32 %v398, %v741
      %v743 = vpop.f32.mrb[0].mxu0
      %744 = vmatprep.mubr.bf16.mxu0 0
      %745 = vmatmul.mubr.bf16.gmra.mrb[0].mxu0 %v537
      %v746 = vpop.f32.mrb[0].mxu0
      %v747 = vadd.f32 %v398, %v746
      %v748 = vpop.f32.mrb[0].mxu0
      %v749 = vpop.f32.mrb[0].mxu0
      %v750 = vadd.f32 %v398, %v749
      %v751 = vpop.f32.mrb[0].mxu0
      %752 = vmatprep.mubr.bf16.mxu0 0
      %753 = vmatmul.mubr.bf16.gmra.mrb[0].mxu0 %v538
      %v754 = vpop.f32.mrb[0].mxu0
      %v755 = vadd.f32 %v398, %v754
      %v756 = vpop.f32.mrb[0].mxu0
      %v757 = vpop.f32.mrb[0].mxu0
      %v758 = vadd.f32 %v398, %v757
      %v759 = vpop.f32.mrb[0].mxu0
      %760 = vmatprep.mubr.bf16.mxu0 0
      %761 = vmatmul.mubr.bf16.gmra.mrb[0].mxu0 %v539
      %v762 = vpop.f32.mrb[0].mxu0
      %v763 = vadd.f32 %v398, %v762
      %v764 = vpop.f32.mrb[0].mxu0
      %v765 = vpop.f32.mrb[0].mxu0
      %v766 = vadd.f32 %v398, %v765
      %v767 = vpop.f32.mrb[0].mxu0
      %768 = vmatprep.mubr.bf16.mxu0 0
      %769 = vmatmul.mubr.bf16.gmra.mrb[0].mxu0 %v540
      %v770 = vpop.f32.mrb[0].mxu0
      %v771 = vadd.f32 %v398, %v770
      %v772 = vpop.f32.mrb[0].mxu0
      %v773 = vpop.f32.mrb[0].mxu0
      %v774 = vadd.f32 %v398, %v773
      %v775 = vpop.f32.mrb[0].mxu0
      %776 = vmatprep.mubr.bf16.mxu0 0
      %777 = vmatmul.mubr.bf16.gmra.mrb[0].mxu0 %v541
      %v778 = vpop.f32.mrb[0].mxu0
      %v779 = vadd.f32 %v398, %v778
      %v780 = vpop.f32.mrb[0].mxu0
      %v781 = vpop.f32.mrb[0].mxu0
      %v782 = vadd.f32 %v398, %v781
      %v783 = vpop.f32.mrb[0].mxu0
      %784 = vmatprep.mubr.bf16.mxu0 0
      %785 = vmatmul.mubr.bf16.gmra.mrb[0].mxu0 %v542
      %v786 = vpop.f32.mrb[0].mxu0
      %v787 = vadd.f32 %v398, %v786
      %v788 = vpop.f32.mrb[0].mxu0
      %v789 = vpop.f32.mrb[0].mxu0
      %v790 = vadd.f32 %v398, %v789
      %v791 = vpop.f32.mrb[0].mxu0
      %792 = vmatprep.mubr.bf16.mxu0 0
      %793 = vmatmul.mubr.bf16.gmra.mrb[0].mxu0 %v543
      %v794 = vpop.f32.mrb[0].mxu0
      %v795 = vadd.f32 %v398, %v794
      %v796 = vpop.f32.mrb[0].mxu0
      %v797 = vpop.f32.mrb[0].mxu0
      %v798 = vadd.f32 %v398, %v797
      %v799 = vpop.f32.mrb[0].mxu0
      %800 = vmatprep.mubr.bf16.mxu0 0
      %801 = vmatmul.mubr.bf16.gmra.mrb[0].mxu0 %v544
      %v802 = vpop.f32.mrb[0].mxu0
      %v803 = vadd.f32 %v398, %v802
      %v804 = vpop.f32.mrb[0].mxu0
      %v805 = vpop.f32.mrb[0].mxu0
      %v806 = vadd.f32 %v398, %v805
      %v807 = vpop.f32.mrb[0].mxu0
      %808 = vmatprep.mubr.bf16.mxu0 0
      %809 = vmatmul.mubr.bf16.gmra.mrb[0].mxu0 %v545
      %v810 = vpop.f32.mrb[0].mxu0
      %v811 = vadd.f32 %v398, %v810
      %v812 = vpop.f32.mrb[0].mxu0
      %v813 = vpop.f32.mrb[0].mxu0
      %v814 = vadd.f32 %v398, %v813
      %v815 = vpop.f32.mrb[0].mxu0
      %816 = vmatprep.mubr.bf16.mxu0 0
      %817 = vmatmul.mubr.bf16.gmra.mrb[0].mxu0 %v546
      %v818 = vpop.f32.mrb[0].mxu0
      %v819 = vadd.f32 %v398, %v818
      %v820 = vpop.f32.mrb[0].mxu0
      %v821 = vpop.f32.mrb[0].mxu0
      %v822 = vadd.f32 %v398, %v821
      %v823 = vpop.f32.mrb[0].mxu0
      %824 = vmatprep.mubr.bf16.mxu0 0
      %825 = vmatmul.mubr.bf16.gmra.mrb[0].mxu0 %v547
      %v826 = vpop.f32.mrb[0].mxu0
      %v827 = vadd.f32 %v398, %v826
      %v828 = vpop.f32.mrb[0].mxu0
      %v829 = vpop.f32.mrb[0].mxu0
      %v830 = vadd.f32 %v398, %v829
      %v831 = vpop.f32.mrb[0].mxu0
      %832 = vmatprep.mubr.bf16.mxu0 0
      %833 = vmatmul.mubr.bf16.gmra.mrb[0].mxu0 %v548
      %v834 = vpop.f32.mrb[0].mxu0
      %v835 = vadd.f32 %v398, %v834
      %v836 = vpop.f32.mrb[0].mxu0
      %v837 = vpop.f32.mrb[0].mxu0
      %v838 = vadd.f32 %v398, %v837
      %v839 = vpop.f32.mrb[0].mxu0
      %840 = vmatprep.mubr.bf16.mxu0 0
      %841 = vmatmul.mubr.bf16.gmra.mrb[0].mxu0 %v549
      %v842 = vpop.f32.mrb[0].mxu0
      %v843 = vadd.f32 %v398, %v842
      %v844 = vpop.f32.mrb[0].mxu0
      %v845 = vpop.f32.mrb[0].mxu0
      %v846 = vadd.f32 %v398, %v845
      %v847 = vpop.f32.mrb[0].mxu0
      %848 = vmatprep.mubr.bf16.mxu0 0
      %849 = vmatmul.mubr.bf16.gmra.mrb[0].mxu0 %v550
      %v850 = vpop.f32.mrb[0].mxu0
      %v851 = vadd.f32 %v398, %v850
      %v852 = vpop.f32.mrb[0].mxu0
      %v853 = vpop.f32.mrb[0].mxu0
      %v854 = vadd.f32 %v398, %v853
      %v855 = vpop.f32.mrb[0].mxu0
      %856 = vmatprep.mubr.bf16.mxu0 0
      %857 = vmatmul.mubr.bf16.gmra.mrb[0].mxu0 %v551
      %v858 = vpop.f32.mrb[0].mxu0
      %v859 = vadd.f32 %v398, %v858
      %v860 = vpop.f32.mrb[0].mxu0
      %v861 = vpop.f32.mrb[0].mxu0
      %v862 = vadd.f32 %v398, %v861
      %v863 = vpop.f32.mrb[0].mxu0
      %864 = vmatprep.mubr.bf16.mxu0 0
      %865 = vmatmul.mubr.bf16.gmra.mrb[0].mxu0 %v552
      %v866 = vpop.f32.mrb[0].mxu0
      %v867 = vadd.f32 %v398, %v866
      %v868 = vpop.f32.mrb[0].mxu0
      %v869 = vpop.f32.mrb[0].mxu0
      %v870 = vadd.f32 %v398, %v869
      %v871 = vpop.f32.mrb[0].mxu0
      %872 = vmatprep.mubr.bf16.mxu0 0
      %873 = vmatmul.mubr.bf16.gmra.mrb[0].mxu0 %v553
      %v874 = vpop.f32.mrb[0].mxu0
      %v875 = vadd.f32 %v398, %v874
      %v876 = vpop.f32.mrb[0].mxu0
      %v877 = vpop.f32.mrb[0].mxu0
      %v878 = vadd.f32 %v398, %v877
      %v879 = vpop.f32.mrb[0].mxu0
      %880 = vmatprep.mubr.bf16.mxu0 0
      %881 = vmatmul.mubr.bf16.gmra.mrb[0].mxu0 %v554
      %v882 = vpop.f32.mrb[0].mxu0
      %v883 = vadd.f32 %v398, %v882
      %v884 = vpop.f32.mrb[0].mxu0
      %v885 = vpop.f32.mrb[0].mxu0
      %v886 = vadd.f32 %v398, %v885
      %v887 = vpop.f32.mrb[0].mxu0
      %888 = vmatprep.mubr.bf16.mxu0 0
      %889 = vmatmul.mubr.bf16.gmra.mrb[0].mxu0 %v555
      %v890 = vpop.f32.mrb[0].mxu0
      %v891 = vadd.f32 %v398, %v890
      %v892 = vpop.f32.mrb[0].mxu0
      %v893 = vpop.f32.mrb[0].mxu0
      %v894 = vadd.f32 %v398, %v893
      %v895 = vpop.f32.mrb[0].mxu0
      %896 = vmatprep.mubr.bf16.mxu0 0
      %897 = vmatmul.mubr.bf16.gmra.mrb[0].mxu0 %v556
      %v898 = vpop.f32.mrb[0].mxu0
      %v899 = vadd.f32 %v398, %v898
      %v900 = vpop.f32.mrb[0].mxu0
      %v901 = vpop.f32.mrb[0].mxu0
      %v902 = vadd.f32 %v398, %v901
      %v903 = vpop.f32.mrb[0].mxu0
      %904 = vmatprep.mubr.bf16.mxu0 0
      %905 = vmatmul.mubr.bf16.gmra.mrb[0].mxu0 %v557
      %v906 = vpop.f32.mrb[0].mxu0
      %v907 = vadd.f32 %v398, %v906
      %v908 = vpop.f32.mrb[0].mxu0
      %v909 = vpop.f32.mrb[0].mxu0
      %v910 = vadd.f32 %v398, %v909
      %v911 = vpop.f32.mrb[0].mxu0
      %912 = vmatprep.mubr.bf16.mxu0 0
      %913 = vmatmul.mubr.bf16.gmra.mrb[0].mxu0 %v558
      %v914 = vpop.f32.mrb[0].mxu0
      %v915 = vadd.f32 %v398, %v914
      %v916 = vpop.f32.mrb[0].mxu0
      %v917 = vpop.f32.mrb[0].mxu0
      %v918 = vadd.f32 %v398, %v917
      %v919 = vpop.f32.mrb[0].mxu0
      %920 = vmatprep.mubr.bf16.mxu0 0
      %921 = vmatmul.mubr.bf16.gmra.mrb[0].mxu0 %v559
      %v922 = vpop.f32.mrb[0].mxu0
      %v923 = vadd.f32 %v398, %v922
      %v924 = vpop.f32.mrb[0].mxu0
      %v925 = vpop.f32.mrb[0].mxu0
      %v926 = vadd.f32 %v398, %v925
      %v927 = vpop.f32.mrb[0].mxu0
      %928 = vdwg.mxu0
      %v929 = vmax.f32 %v675, 0.0
      %v930 = vmax.f32 %v678, 0.0
      %v931 = vmax.f32 %v683, 0.0
      %v932 = vmax.f32 %v686, 0.0
      %v933 = vmax.f32 %v691, 0.0
      %v934 = vmax.f32 %v694, 0.0
      %v935 = vmax.f32 %v699, 0.0
      %v936 = vmax.f32 %v702, 0.0
      %v937 = vmax.f32 %v707, 0.0
      %v938 = vmax.f32 %v710, 0.0
      %v939 = vmax.f32 %v715, 0.0
      %v940 = vmax.f32 %v718, 0.0
      %v941 = vmax.f32 %v723, 0.0
      %v942 = vmax.f32 %v726, 0.0
      %v943 = vmax.f32 %v731, 0.0
      %v944 = vmax.f32 %v734, 0.0
      %v945 = vmax.f32 %v739, 0.0
      %v946 = vmax.f32 %v742, 0.0
      %v947 = vmax.f32 %v747, 0.0
      %v948 = vmax.f32 %v750, 0.0
      %v949 = vmax.f32 %v755, 0.0
      %v950 = vmax.f32 %v758, 0.0
      %v951 = vmax.f32 %v763, 0.0
      %v952 = vmax.f32 %v766, 0.0
      %v953 = vmax.f32 %v771, 0.0
      %v954 = vmax.f32 %v774, 0.0
      %v955 = vmax.f32 %v779, 0.0
      %v956 = vmax.f32 %v782, 0.0
      %v957 = vmax.f32 %v787, 0.0
      %v958 = vmax.f32 %v790, 0.0
      %v959 = vmax.f32 %v795, 0.0
      %v960 = vmax.f32 %v798, 0.0
      %v961 = vmax.f32 %v803, 0.0
      %v962 = vmax.f32 %v806, 0.0
      %v963 = vmax.f32 %v811, 0.0
      %v964 = vmax.f32 %v814, 0.0
      %v965 = vmax.f32 %v819, 0.0
      %v966 = vmax.f32 %v822, 0.0
      %v967 = vmax.f32 %v827, 0.0
      %v968 = vmax.f32 %v830, 0.0
      %v969 = vmax.f32 %v835, 0.0
      %v970 = vmax.f32 %v838, 0.0
      %v971 = vmax.f32 %v843, 0.0
      %v972 = vmax.f32 %v846, 0.0
      %v973 = vmax.f32 %v851, 0.0
      %v974 = vmax.f32 %v854, 0.0
      %v975 = vmax.f32 %v859, 0.0
      %v976 = vmax.f32 %v862, 0.0
      %v977 = vmax.f32 %v867, 0.0
      %v978 = vmax.f32 %v870, 0.0
      %v979 = vmax.f32 %v875, 0.0
      %v980 = vmax.f32 %v878, 0.0
      %v981 = vmax.f32 %v883, 0.0
      %v982 = vmax.f32 %v886, 0.0
      %v983 = vmax.f32 %v891, 0.0
      %v984 = vmax.f32 %v894, 0.0
      %v985 = vmax.f32 %v899, 0.0
      %v986 = vmax.f32 %v902, 0.0
      %v987 = vmax.f32 %v907, 0.0
      %v988 = vmax.f32 %v910, 0.0
      %v989 = vmax.f32 %v915, 0.0
      %v990 = vmax.f32 %v918, 0.0
      %v991 = vmax.f32 %v923, 0.0
      %v992 = vmax.f32 %v926, 0.0
      %v993 = vpack.c.bf16 %v930, %v929
      %v994 = vpack.c.bf16 %v932, %v931
      %v995 = vpack.c.bf16 %v934, %v933
      %v996 = vpack.c.bf16 %v936, %v935
      %v997 = vpack.c.bf16 %v938, %v937
      %v998 = vpack.c.bf16 %v940, %v939
      %v999 = vpack.c.bf16 %v942, %v941
      %v1000 = vpack.c.bf16 %v944, %v943
      %v1001 = vpack.c.bf16 %v946, %v945
      %v1002 = vpack.c.bf16 %v948, %v947
      %v1003 = vpack.c.bf16 %v950, %v949
      %v1004 = vpack.c.bf16 %v952, %v951
      %v1005 = vpack.c.bf16 %v954, %v953
      %v1006 = vpack.c.bf16 %v956, %v955
      %v1007 = vpack.c.bf16 %v958, %v957
      %v1008 = vpack.c.bf16 %v960, %v959
      %v1009 = vpack.c.bf16 %v962, %v961
      %v1010 = vpack.c.bf16 %v964, %v963
      %v1011 = vpack.c.bf16 %v966, %v965
      %v1012 = vpack.c.bf16 %v968, %v967
      %v1013 = vpack.c.bf16 %v970, %v969
      %v1014 = vpack.c.bf16 %v972, %v971
      %v1015 = vpack.c.bf16 %v974, %v973
      %v1016 = vpack.c.bf16 %v976, %v975
      %v1017 = vpack.c.bf16 %v978, %v977
      %v1018 = vpack.c.bf16 %v980, %v979
      %v1019 = vpack.c.bf16 %v982, %v981
      %v1020 = vpack.c.bf16 %v984, %v983
      %v1021 = vpack.c.bf16 %v986, %v985
      %v1022 = vpack.c.bf16 %v988, %v987
      %v1023 = vpack.c.bf16 %v990, %v989
      %v1024 = vpack.c.bf16 %v992, %v991
      %v1057 = vunpack.c.l.b16 %v993
      %v1058 = vunpack.c.h.b16 %v993
      %v1059 = vunpack.c.l.b16 %v994
      %v1060 = vunpack.c.h.b16 %v994
      %v1061 = vunpack.c.l.b16 %v995
      %v1062 = vunpack.c.h.b16 %v995
      %v1063 = vunpack.c.l.b16 %v996
      %v1064 = vunpack.c.h.b16 %v996
      %v1065 = vunpack.c.l.b16 %v997
      %v1066 = vunpack.c.h.b16 %v997
      %v1067 = vunpack.c.l.b16 %v998
      %v1068 = vunpack.c.h.b16 %v998
      %v1069 = vunpack.c.l.b16 %v999
      %v1070 = vunpack.c.h.b16 %v999
      %v1071 = vunpack.c.l.b16 %v1000
      %v1072 = vunpack.c.h.b16 %v1000
      %v1073 = vunpack.c.l.b16 %v1001
      %v1074 = vunpack.c.h.b16 %v1001
      %v1075 = vunpack.c.l.b16 %v1002
      %v1076 = vunpack.c.h.b16 %v1002
      %v1077 = vunpack.c.l.b16 %v1003
      %v1078 = vunpack.c.h.b16 %v1003
      %v1079 = vunpack.c.l.b16 %v1004
      %v1080 = vunpack.c.h.b16 %v1004
      %v1081 = vunpack.c.l.b16 %v1005
      %v1082 = vunpack.c.h.b16 %v1005
      %v1083 = vunpack.c.l.b16 %v1006
      %v1084 = vunpack.c.h.b16 %v1006
      %v1085 = vunpack.c.l.b16 %v1007
      %v1086 = vunpack.c.h.b16 %v1007
      %v1087 = vunpack.c.l.b16 %v1008
      %v1088 = vunpack.c.h.b16 %v1008
      %v1089 = vunpack.c.l.b16 %v1009
      %v1090 = vunpack.c.h.b16 %v1009
      %v1091 = vunpack.c.l.b16 %v1010
      %v1092 = vunpack.c.h.b16 %v1010
      %v1093 = vunpack.c.l.b16 %v1011
      %v1094 = vunpack.c.h.b16 %v1011
      %v1095 = vunpack.c.l.b16 %v1012
      %v1096 = vunpack.c.h.b16 %v1012
      %v1097 = vunpack.c.l.b16 %v1013
      %v1098 = vunpack.c.h.b16 %v1013
      %v1099 = vunpack.c.l.b16 %v1014
      %v1100 = vunpack.c.h.b16 %v1014
      %v1101 = vunpack.c.l.b16 %v1015
      %v1102 = vunpack.c.h.b16 %v1015
      %v1103 = vunpack.c.l.b16 %v1016
      %v1104 = vunpack.c.h.b16 %v1016
      %v1105 = vunpack.c.l.b16 %v1017
      %v1106 = vunpack.c.h.b16 %v1017
      %v1107 = vunpack.c.l.b16 %v1018
      %v1108 = vunpack.c.h.b16 %v1018
      %v1109 = vunpack.c.l.b16 %v1019
      %v1110 = vunpack.c.h.b16 %v1019
      %v1111 = vunpack.c.l.b16 %v1020
      %v1112 = vunpack.c.h.b16 %v1020
      %v1113 = vunpack.c.l.b16 %v1021
      %v1114 = vunpack.c.h.b16 %v1021
      %v1115 = vunpack.c.l.b16 %v1022
      %v1116 = vunpack.c.h.b16 %v1022
      %v1117 = vunpack.c.l.b16 %v1023
      %v1118 = vunpack.c.h.b16 %v1023
      %v1119 = vunpack.c.l.b16 %v1024
      %v1120 = vunpack.c.h.b16 %v1024
      %v1121 = vpack.c.b16 %v1057, %v1057
      %v1122 = vpack.c.b16 %v1058, %v1058
      %v1123 = vpack.c.b16 %v1059, %v1059
      %v1124 = vpack.c.b16 %v1060, %v1060
      %v1125 = vpack.c.b16 %v1061, %v1061
      %v1126 = vpack.c.b16 %v1062, %v1062
      %v1127 = vpack.c.b16 %v1063, %v1063
      %v1128 = vpack.c.b16 %v1064, %v1064
      %v1129 = vpack.c.b16 %v1065, %v1065
      %v1130 = vpack.c.b16 %v1066, %v1066
      %v1131 = vpack.c.b16 %v1067, %v1067
      %v1132 = vpack.c.b16 %v1068, %v1068
      %v1133 = vpack.c.b16 %v1069, %v1069
      %v1134 = vpack.c.b16 %v1070, %v1070
      %v1135 = vpack.c.b16 %v1071, %v1071
      %v1136 = vpack.c.b16 %v1072, %v1072
      %v1137 = vpack.c.b16 %v1073, %v1073
      %v1138 = vpack.c.b16 %v1074, %v1074
      %v1139 = vpack.c.b16 %v1075, %v1075
      %v1140 = vpack.c.b16 %v1076, %v1076
      %v1141 = vpack.c.b16 %v1077, %v1077
      %v1142 = vpack.c.b16 %v1078, %v1078
      %v1143 = vpack.c.b16 %v1079, %v1079
      %v1144 = vpack.c.b16 %v1080, %v1080
      %v1145 = vpack.c.b16 %v1081, %v1081
      %v1146 = vpack.c.b16 %v1082, %v1082
      %v1147 = vpack.c.b16 %v1083, %v1083
      %v1148 = vpack.c.b16 %v1084, %v1084
      %v1149 = vpack.c.b16 %v1085, %v1085
      %v1150 = vpack.c.b16 %v1086, %v1086
      %v1151 = vpack.c.b16 %v1087, %v1087
      %v1152 = vpack.c.b16 %v1088, %v1088
      %v1153 = vpack.c.b16 %v1089, %v1089
      %v1154 = vpack.c.b16 %v1090, %v1090
      %v1155 = vpack.c.b16 %v1091, %v1091
      %v1156 = vpack.c.b16 %v1092, %v1092
      %v1157 = vpack.c.b16 %v1093, %v1093
      %v1158 = vpack.c.b16 %v1094, %v1094
      %v1159 = vpack.c.b16 %v1095, %v1095
      %v1160 = vpack.c.b16 %v1096, %v1096
      %v1161 = vpack.c.b16 %v1097, %v1097
      %v1162 = vpack.c.b16 %v1098, %v1098
      %v1163 = vpack.c.b16 %v1099, %v1099
      %v1164 = vpack.c.b16 %v1100, %v1100
      %v1165 = vpack.c.b16 %v1101, %v1101
      %v1166 = vpack.c.b16 %v1102, %v1102
      %v1167 = vpack.c.b16 %v1103, %v1103
      %v1168 = vpack.c.b16 %v1104, %v1104
      %v1169 = vpack.c.b16 %v1105, %v1105
      %v1170 = vpack.c.b16 %v1106, %v1106
      %v1171 = vpack.c.b16 %v1107, %v1107
      %v1172 = vpack.c.b16 %v1108, %v1108
      %v1173 = vpack.c.b16 %v1109, %v1109
      %v1174 = vpack.c.b16 %v1110, %v1110
      %v1175 = vpack.c.b16 %v1111, %v1111
      %v1176 = vpack.c.b16 %v1112, %v1112
      %v1177 = vpack.c.b16 %v1113, %v1113
      %v1178 = vpack.c.b16 %v1114, %v1114
      %v1179 = vpack.c.b16 %v1115, %v1115
      %v1180 = vpack.c.b16 %v1116, %v1116
      %v1181 = vpack.c.b16 %v1117, %v1117
      %v1182 = vpack.c.b16 %v1118, %v1118
      %v1183 = vpack.c.b16 %v1119, %v1119
      %v1184 = vpack.c.b16 %v1120, %v1120
      %1249 = vst [vmem:[%s298] sm:$0xf] %v1121
      %1250 = vst [vmem:[%s298 + $0x4] sm:$0xf] %v1122
      %1251 = vst [vmem:[%s298 + $0x8] sm:$0xf] %v1123
      %1252 = vst [vmem:[%s298 + $0xc] sm:$0xf] %v1124
      %1253 = vst [vmem:[%s298 + $0x10] sm:$0xf] %v1125
      %1254 = vst [vmem:[%s298 + $0x14] sm:$0xf] %v1126
      %1255 = vst [vmem:[%s298 + $0x18] sm:$0xf] %v1127
      %1256 = vst [vmem:[%s298 + $0x1c] sm:$0xf] %v1128
      %1257 = vst [vmem:[%s298 + $0x20] sm:$0xf] %v1129
      %1258 = vst [vmem:[%s298 + $0x24] sm:$0xf] %v1130
      %1259 = vst [vmem:[%s298 + $0x28] sm:$0xf] %v1131
      %1260 = vst [vmem:[%s298 + $0x2c] sm:$0xf] %v1132
      %1261 = vst [vmem:[%s298 + $0x30] sm:$0xf] %v1133
      %1262 = vst [vmem:[%s298 + $0x34] sm:$0xf] %v1134
      %1263 = vst [vmem:[%s298 + $0x38] sm:$0xf] %v1135
      %1264 = vst [vmem:[%s298 + $0x3c] sm:$0xf] %v1136
      %1265 = vst [vmem:[%s298 + $0x40] sm:$0xf] %v1137
      %1266 = vst [vmem:[%s298 + $0x44] sm:$0xf] %v1138
      %1267 = vst [vmem:[%s298 + $0x48] sm:$0xf] %v1139
      %1268 = vst [vmem:[%s298 + $0x4c] sm:$0xf] %v1140
      %1269 = vst [vmem:[%s298 + $0x50] sm:$0xf] %v1141
      %1270 = vst [vmem:[%s298 + $0x54] sm:$0xf] %v1142
      %1271 = vst [vmem:[%s298 + $0x58] sm:$0xf] %v1143
      %1272 = vst [vmem:[%s298 + $0x5c] sm:$0xf] %v1144
      %1273 = vst [vmem:[%s298 + $0x60] sm:$0xf] %v1145
      %1274 = vst [vmem:[%s298 + $0x64] sm:$0xf] %v1146
      %1275 = vst [vmem:[%s298 + $0x68] sm:$0xf] %v1147
      %1276 = vst [vmem:[%s298 + $0x6c] sm:$0xf] %v1148
      %1277 = vst [vmem:[%s298 + $0x70] sm:$0xf] %v1149
      %1278 = vst [vmem:[%s298 + $0x74] sm:$0xf] %v1150
      %1279 = vst [vmem:[%s298 + $0x78] sm:$0xf] %v1151
      %1280 = vst [vmem:[%s298 + $0x7c] sm:$0xf] %v1152
      %1281 = vst [vmem:[%s298 + $0x80] sm:$0xf] %v1153
      %1282 = vst [vmem:[%s298 + $0x84] sm:$0xf] %v1154
      %1283 = vst [vmem:[%s298 + $0x88] sm:$0xf] %v1155
      %1284 = vst [vmem:[%s298 + $0x8c] sm:$0xf] %v1156
      %1285 = vst [vmem:[%s298 + $0x90] sm:$0xf] %v1157
      %1286 = vst [vmem:[%s298 + $0x94] sm:$0xf] %v1158
      %1287 = vst [vmem:[%s298 + $0x98] sm:$0xf] %v1159
      %1288 = vst [vmem:[%s298 + $0x9c] sm:$0xf] %v1160
      %1289 = vst [vmem:[%s298 + $0xa0] sm:$0xf] %v1161
      %1290 = vst [vmem:[%s298 + $0xa4] sm:$0xf] %v1162
      %1291 = vst [vmem:[%s298 + $0xa8] sm:$0xf] %v1163
      %1292 = vst [vmem:[%s298 + $0xac] sm:$0xf] %v1164
      %1293 = vst [vmem:[%s298 + $0xb0] sm:$0xf] %v1165
      %1294 = vst [vmem:[%s298 + $0xb4] sm:$0xf] %v1166
      %1295 = vst [vmem:[%s298 + $0xb8] sm:$0xf] %v1167
      %1296 = vst [vmem:[%s298 + $0xbc] sm:$0xf] %v1168
      %1297 = vst [vmem:[%s298 + $0xc0] sm:$0xf] %v1169
      %1298 = vst [vmem:[%s298 + $0xc4] sm:$0xf] %v1170
      %1299 = vst [vmem:[%s298 + $0xc8] sm:$0xf] %v1171
      %1300 = vst [vmem:[%s298 + $0xcc] sm:$0xf] %v1172
      %1301 = vst [vmem:[%s298 + $0xd0] sm:$0xf] %v1173
      %1302 = vst [vmem:[%s298 + $0xd4] sm:$0xf] %v1174
      %1303 = vst [vmem:[%s298 + $0xd8] sm:$0xf] %v1175
      %1304 = vst [vmem:[%s298 + $0xdc] sm:$0xf] %v1176
      %1305 = vst [vmem:[%s298 + $0xe0] sm:$0xf] %v1177
      %1306 = vst [vmem:[%s298 + $0xe4] sm:$0xf] %v1178
      %1307 = vst [vmem:[%s298 + $0xe8] sm:$0xf] %v1179
      %1308 = vst [vmem:[%s298 + $0xec] sm:$0xf] %v1180
      %1309 = vst [vmem:[%s298 + $0xf0] sm:$0xf] %v1181
      %1310 = vst [vmem:[%s298 + $0xf4] sm:$0xf] %v1182
      %1311 = vst [vmem:[%s298 + $0xf8] sm:$0xf] %v1183
      %1312 = vst [vmem:[%s298 + $0xfc] sm:$0xf] %v1184
      %v1313 = vadd.f32 %v929, %v930
      %v1314 = vadd.f32 %v1313, %v931
      %v1315 = vadd.f32 %v1314, %v932
      %v1316 = vadd.f32 %v1315, %v933
      %v1317 = vadd.f32 %v1316, %v934
      %v1318 = vadd.f32 %v1317, %v935
      %v1319 = vadd.f32 %v1318, %v936
      %v1320 = vadd.f32 %v1319, %v937
      %v1321 = vadd.f32 %v1320, %v938
      %v1322 = vadd.f32 %v1321, %v939
      %v1323 = vadd.f32 %v1322, %v940
      %v1324 = vadd.f32 %v1323, %v941
      %v1325 = vadd.f32 %v1324, %v942
      %v1326 = vadd.f32 %v1325, %v943
      %v1327 = vadd.f32 %v1326, %v944
      %v1328 = vadd.f32 %v1327, %v945
      %v1329 = vadd.f32 %v1328, %v946
      %v1330 = vadd.f32 %v1329, %v947
      %v1331 = vadd.f32 %v1330, %v948
      %v1332 = vadd.f32 %v1331, %v949
      %v1333 = vadd.f32 %v1332, %v950
      %v1334 = vadd.f32 %v1333, %v951
      %v1335 = vadd.f32 %v1334, %v952
      %v1336 = vadd.f32 %v1335, %v953
      %v1337 = vadd.f32 %v1336, %v954
      %v1338 = vadd.f32 %v1337, %v955
      %v1339 = vadd.f32 %v1338, %v956
      %v1340 = vadd.f32 %v1339, %v957
      %v1341 = vadd.f32 %v1340, %v958
      %v1342 = vadd.f32 %v1341, %v959
      %v1343 = vadd.f32 %v1342, %v960
      %v1344 = vadd.f32 %v1343, %v961
      %v1345 = vadd.f32 %v1344, %v962
      %v1346 = vadd.f32 %v1345, %v963
      %v1347 = vadd.f32 %v1346, %v964
      %v1348 = vadd.f32 %v1347, %v965
      %v1349 = vadd.f32 %v1348, %v966
      %v1350 = vadd.f32 %v1349, %v967
      %v1351 = vadd.f32 %v1350, %v968
      %v1352 = vadd.f32 %v1351, %v969
      %v1353 = vadd.f32 %v1352, %v970
      %v1354 = vadd.f32 %v1353, %v971
      %v1355 = vadd.f32 %v1354, %v972
      %v1356 = vadd.f32 %v1355, %v973
      %v1357 = vadd.f32 %v1356, %v974
      %v1358 = vadd.f32 %v1357, %v975
      %v1359 = vadd.f32 %v1358, %v976
      %v1360 = vadd.f32 %v1359, %v977
      %v1361 = vadd.f32 %v1360, %v978
      %v1362 = vadd.f32 %v1361, %v979
      %v1363 = vadd.f32 %v1362, %v980
      %v1364 = vadd.f32 %v1363, %v981
      %v1365 = vadd.f32 %v1364, %v982
      %v1366 = vadd.f32 %v1365, %v983
      %v1367 = vadd.f32 %v1366, %v984
      %v1368 = vadd.f32 %v1367, %v985
      %v1369 = vadd.f32 %v1368, %v986
      %v1370 = vadd.f32 %v1369, %v987
      %v1371 = vadd.f32 %v1370, %v988
      %v1372 = vadd.f32 %v1371, %v989
      %v1373 = vadd.f32 %v1372, %v990
      %v1374 = vadd.f32 %v1373, %v991
      %v1375 = vadd.f32 %v1374, %v992
      %v1376 = vrot.slane %v1375, 4
      %v1377 = vadd.f32 %v1375, %v1376
      %v1378 = vrot.slane %v1377, 2
      %v1379 = vadd.f32 %v1377, %v1378
      %v1380 = vrot.slane %v1379, 1
      %v1381 = vadd.f32 %v1379, %v1380
      %1382 = vst [vmem:[%s305] sm:$0x1] %v1381
      %v1383 = vmul.f32 %v929, %v929
      %v1384 = vmul.f32 %v930, %v930
      %v1385 = vmul.f32 %v931, %v931
      %v1386 = vmul.f32 %v932, %v932
      %v1387 = vmul.f32 %v933, %v933
      %v1388 = vmul.f32 %v934, %v934
      %v1389 = vmul.f32 %v935, %v935
      %v1390 = vmul.f32 %v936, %v936
      %v1391 = vmul.f32 %v937, %v937
      %v1392 = vmul.f32 %v938, %v938
      %v1393 = vmul.f32 %v939, %v939
      %v1394 = vmul.f32 %v940, %v940
      %v1395 = vmul.f32 %v941, %v941
      %v1396 = vmul.f32 %v942, %v942
      %v1397 = vmul.f32 %v943, %v943
      %v1398 = vmul.f32 %v944, %v944
      %v1399 = vmul.f32 %v945, %v945
      %v1400 = vmul.f32 %v946, %v946
      %v1401 = vmul.f32 %v947, %v947
      %v1402 = vmul.f32 %v948, %v948
      %v1403 = vmul.f32 %v949, %v949
      %v1404 = vmul.f32 %v950, %v950
      %v1405 = vmul.f32 %v951, %v951
      %v1406 = vmul.f32 %v952, %v952
      %v1407 = vmul.f32 %v953, %v953
      %v1408 = vmul.f32 %v954, %v954
      %v1409 = vmul.f32 %v955, %v955
      %v1410 = vmul.f32 %v956, %v956
      %v1411 = vmul.f32 %v957, %v957
      %v1412 = vmul.f32 %v958, %v958
      %v1413 = vmul.f32 %v959, %v959
      %v1414 = vmul.f32 %v960, %v960
      %v1415 = vmul.f32 %v961, %v961
      %v1416 = vmul.f32 %v962, %v962
      %v1417 = vmul.f32 %v963, %v963
      %v1418 = vmul.f32 %v964, %v964
      %v1419 = vmul.f32 %v965, %v965
      %v1420 = vmul.f32 %v966, %v966
      %v1421 = vmul.f32 %v967, %v967
      %v1422 = vmul.f32 %v968, %v968
      %v1423 = vmul.f32 %v969, %v969
      %v1424 = vmul.f32 %v970, %v970
      %v1425 = vmul.f32 %v971, %v971
      %v1426 = vmul.f32 %v972, %v972
      %v1427 = vmul.f32 %v973, %v973
      %v1428 = vmul.f32 %v974, %v974
      %v1429 = vmul.f32 %v975, %v975
      %v1430 = vmul.f32 %v976, %v976
      %v1431 = vmul.f32 %v977, %v977
      %v1432 = vmul.f32 %v978, %v978
      %v1433 = vmul.f32 %v979, %v979
      %v1434 = vmul.f32 %v980, %v980
      %v1435 = vmul.f32 %v981, %v981
      %v1436 = vmul.f32 %v982, %v982
      %v1437 = vmul.f32 %v983, %v983
      %v1438 = vmul.f32 %v984, %v984
      %v1439 = vmul.f32 %v985, %v985
      %v1440 = vmul.f32 %v986, %v986
      %v1441 = vmul.f32 %v987, %v987
      %v1442 = vmul.f32 %v988, %v988
      %v1443 = vmul.f32 %v989, %v989
      %v1444 = vmul.f32 %v990, %v990
      %v1445 = vmul.f32 %v991, %v991
      %v1446 = vmul.f32 %v992, %v992
      %v1447 = vadd.f32 %v1383, %v1384
      %v1448 = vadd.f32 %v1447, %v1385
      %v1449 = vadd.f32 %v1448, %v1386
      %v1450 = vadd.f32 %v1449, %v1387
      %v1451 = vadd.f32 %v1450, %v1388
      %v1452 = vadd.f32 %v1451, %v1389
      %v1453 = vadd.f32 %v1452, %v1390
      %v1454 = vadd.f32 %v1453, %v1391
      %v1455 = vadd.f32 %v1454, %v1392
      %v1456 = vadd.f32 %v1455, %v1393
      %v1457 = vadd.f32 %v1456, %v1394
      %v1458 = vadd.f32 %v1457, %v1395
      %v1459 = vadd.f32 %v1458, %v1396
      %v1460 = vadd.f32 %v1459, %v1397
      %v1461 = vadd.f32 %v1460, %v1398
      %v1462 = vadd.f32 %v1461, %v1399
      %v1463 = vadd.f32 %v1462, %v1400
      %v1464 = vadd.f32 %v1463, %v1401
      %v1465 = vadd.f32 %v1464, %v1402
      %v1466 = vadd.f32 %v1465, %v1403
      %v1467 = vadd.f32 %v1466, %v1404
      %v1468 = vadd.f32 %v1467, %v1405
      %v1469 = vadd.f32 %v1468, %v1406
      %v1470 = vadd.f32 %v1469, %v1407
      %v1471 = vadd.f32 %v1470, %v1408
      %v1472 = vadd.f32 %v1471, %v1409
      %v1473 = vadd.f32 %v1472, %v1410
      %v1474 = vadd.f32 %v1473, %v1411
      %v1475 = vadd.f32 %v1474, %v1412
      %v1476 = vadd.f32 %v1475, %v1413
      %v1477 = vadd.f32 %v1476, %v1414
      %v1478 = vadd.f32 %v1477, %v1415
      %v1479 = vadd.f32 %v1478, %v1416
      %v1480 = vadd.f32 %v1479, %v1417
      %v1481 = vadd.f32 %v1480, %v1418
      %v1482 = vadd.f32 %v1481, %v1419
      %v1483 = vadd.f32 %v1482, %v1420
      %v1484 = vadd.f32 %v1483, %v1421
      %v1485 = vadd.f32 %v1484, %v1422
      %v1486 = vadd.f32 %v1485, %v1423
      %v1487 = vadd.f32 %v1486, %v1424
      %v1488 = vadd.f32 %v1487, %v1425
      %v1489 = vadd.f32 %v1488, %v1426
      %v1490 = vadd.f32 %v1489, %v1427
      %v1491 = vadd.f32 %v1490, %v1428
      %v1492 = vadd.f32 %v1491, %v1429
      %v1493 = vadd.f32 %v1492, %v1430
      %v1494 = vadd.f32 %v1493, %v1431
      %v1495 = vadd.f32 %v1494, %v1432
      %v1496 = vadd.f32 %v1495, %v1433
      %v1497 = vadd.f32 %v1496, %v1434
      %v1498 = vadd.f32 %v1497, %v1435
      %v1499 = vadd.f32 %v1498, %v1436
      %v1500 = vadd.f32 %v1499, %v1437
      %v1501 = vadd.f32 %v1500, %v1438
      %v1502 = vadd.f32 %v1501, %v1439
      %v1503 = vadd.f32 %v1502, %v1440
      %v1504 = vadd.f32 %v1503, %v1441
      %v1505 = vadd.f32 %v1504, %v1442
      %v1506 = vadd.f32 %v1505, %v1443
      %v1507 = vadd.f32 %v1506, %v1444
      %v1508 = vadd.f32 %v1507, %v1445
      %v1509 = vadd.f32 %v1508, %v1446
      %v1510 = vrot.slane %v1509, 4
      %v1511 = vadd.f32 %v1509, %v1510
      %v1512 = vrot.slane %v1511, 2
      %v1513 = vadd.f32 %v1511, %v1512
      %v1514 = vrot.slane %v1513, 1
      %v1515 = vadd.f32 %v1513, %v1514
      %1516 = vst [vmem:[%s311] sm:$0x1] %v1515
      %s1517 = smul.u32 64, %s21
      %p1518 = scmp.lt.s32.totalorder %s1517, 127
      %s1519 = scalar_select %p1518, %s1517, 127
      %p1520 = scmp.lt.s32.totalorder %s22, 0
      %s1521 = scalar_select %p1520, %s22, 0
      %s1522 = sadd.s32 %s1521, %s1519
      %s1523 = smul.addr %s1522, 4
      %s1524 = scalar_lea.vmem %s3, %s1523
      %p1525 = scmp.lt.s32.totalorder %s21, 1
      %s1526 = scalar_select %p1525, %s21, 1
      %p1527 = scmp.lt.s32.totalorder %s22, 0
      %s1528 = scalar_select %p1527, %s22, 0
      %s1529 = sadd.s32 %s1528, %s1526
      %s1530 = scalar_lea.vmem %s4, %s1529
      %p1531 = scmp.lt.s32.totalorder %s21, 1
      %s1532 = scalar_select %p1531, %s21, 1
      %p1533 = scmp.lt.s32.totalorder %s22, 0
      %s1534 = scalar_select %p1533, %s22, 0
      %s1535 = sadd.s32 %s1534, %s1532
      %s1536 = scalar_lea.vmem %s5, %s1535
      // Predicated region
      $region33: #{forward.16} parent=31 // pred_check
        %p1537 = pneg %p127
      $region34: #{forward.16} parent=31 // pred_check_branch
        %1539 = sbr.rel (%p1537) target = $region36
      $region35: #{forward.16} parent=31 // pred_region
        %s1540 = smul.u32 64, %s21
      $region36: #{forward.16} parent=31 // pred_fallthru
        _
      // Predicated region
      $region37: #{forward.16} parent=31 // pred_check
        %p1541 = pneg %p155
      $region38: #{forward.16} parent=31 // pred_check_branch
        %1543 = sbr.rel (%p1541) target = $region40
      $region39: #{forward.16} parent=31 // pred_region
        _
      $region40: #{forward.16} parent=31 // pred_fallthru
        _
      // Predicated region
      $region41: #{forward.16} parent=31 // pred_check
        %p1544 = pneg %p183
      $region42: #{forward.16} parent=31 // pred_check_branch
        %1546 = sbr.rel (%p1544) target = $region44
      $region43: #{forward.16} parent=31 // pred_region
        _
      $region44: #{forward.16} parent=31 // pred_fallthru
        _
    $region32: #{forward.16} parent=5 // pred_fallthru
      _
    %p1547 = scmp.le.s32.totalorder 2, %s12
    // Predicated region
    $region45: #{forward.16} parent=5 // pred_check
      %p1548 = pneg %p1547
    $region46: #{forward.16} parent=5 // pred_check_branch
      %1550 = sbr.rel (%p1548) target = $region48
    $region47: #{forward.16} parent=5 // pred_region
      %s1551 = ssub.s32 %s12, 2
      // Predicated region
      $region49: #{forward.16} parent=47 // pred_check
        %p1552 = pneg %p133
      $region50: #{forward.16} parent=47 // pred_check_branch
        %1554 = sbr.rel (%p1552) target = $region52
      $region51: #{forward.16} parent=47 // pred_region
        %s1555 = smul.u32 64, %s23
        %p1556 = scmp.lt.s32.totalorder %s1555, 127
        %s1557 = scalar_select %p1556, %s1555, 127
        %p1558 = scmp.lt.s32.totalorder %s24, 0
        %s1559 = scalar_select %p1558, %s24, 0
        %s1560 = sadd.s32 %s1559, %s1557
        %s1561 = smul.addr %s1560, 4
        %s1562 = scalar_lea.vmem %s3, %s1561
      $region52: #{forward.16} parent=47 // pred_fallthru
        _
      // Predicated region
      $region53: #{forward.16} parent=47 // pred_check
        %p1563 = pneg %p161
      $region54: #{forward.16} parent=47 // pred_check_branch
        %1565 = sbr.rel (%p1563) target = $region56
      $region55: #{forward.16} parent=47 // pred_region
        %p1566 = scmp.lt.s32.totalorder %s23, 1
        %s1567 = scalar_select %p1566, %s23, 1
        %p1568 = scmp.lt.s32.totalorder %s24, 0
        %s1569 = scalar_select %p1568, %s24, 0
        %s1570 = sadd.s32 %s1569, %s1567
        %s1571 = scalar_lea.vmem %s4, %s1570
      $region56: #{forward.16} parent=47 // pred_fallthru
        _
      // Predicated region
      $region57: #{forward.16} parent=47 // pred_check
        %p1572 = pneg %p189
      $region58: #{forward.16} parent=47 // pred_check_branch
        %1574 = sbr.rel (%p1572) target = $region60
      $region59: #{forward.16} parent=47 // pred_region
        %p1575 = scmp.lt.s32.totalorder %s23, 1
        %s1576 = scalar_select %p1575, %s23, 1
        %p1577 = scmp.lt.s32.totalorder %s24, 0
        %s1578 = scalar_select %p1577, %s24, 0
        %s1579 = sadd.s32 %s1578, %s1576
        %s1580 = scalar_lea.vmem %s5, %s1579
      $region60: #{forward.16} parent=47 // pred_fallthru
        _
    $region48: #{forward.16} parent=5 // pred_fallthru
      _
  $region6: #{forward.16} parent=0 // loop_footer
    %s16 = sadd.s32 1, %s12
  $region7: #{forward.16} parent=0 // loop_footer_branch
    %11 = sbr.rel target = $region3
  $region8: #{forward.16} parent=0 // loop_exit
    _

// kernel: forward.19
$region0: #{forward.19}
  #allocation0 [shape = 'u32[]', space=smem, size = 0x4, offset = 0x4, fixed_abs, tag = 'smem constant byte address 0x4 - core index']
  #allocation1 [shape = 'u32[144,128]{1,0:T(1,128)}', space=vmem, size = 0x12000, scoped, tag = 'internal scratch']
  %s0 = inlined_call_operand.vmem [shape: bf16[128,128], index: 0, kind: input, shape index: {}]
  %s1 = inlined_call_operand.vmem [shape: f32[1,128], index: 1, kind: input, shape index: {}]
  %s2 = inlined_call_operand.vmem [shape: f32[1,128], index: 2, kind: input, shape index: {}]
  %s3 = inlined_call_operand.vmem [shape: bf16[128,128], index: 3, kind: output, shape index: {}]
  %s4 = sld [smem:[#allocation0]]
  $region22: #{forward.19} parent=0
    _
  %s6 = ssub.s32 1, %s4
  %s7 = scalar_select 0, %s6, %s4
  // Predicated region
  $region2: #{forward.19} parent=0 // pred_check
    _
  $region3: #{forward.19} parent=0 // pred_check_branch
    %9 = sbr.rel (0) target = $region5
  $region4: #{forward.19} parent=0 // pred_region
    _
  $region5: #{forward.19} parent=0 // pred_fallthru
    _
  // Predicated region
  $region6: #{forward.19} parent=0 // pred_check
    _
  $region7: #{forward.19} parent=0 // pred_check_branch
    %11 = sbr.rel (0) target = $region9
  $region8: #{forward.19} parent=0 // pred_region
    _
  $region9: #{forward.19} parent=0 // pred_fallthru
    _
  // Predicated region
  $region10: #{forward.19} parent=0 // pred_check
    _
  $region11: #{forward.19} parent=0 // pred_check_branch
    %13 = sbr.rel (0) target = $region13
  $region12: #{forward.19} parent=0 // pred_region
    _
  $region13: #{forward.19} parent=0 // pred_fallthru
    _
  %v14 = vld [vmem:[%s0] sm:$0xf]
  %v15 = vld [vmem:[%s0 + $0x4] sm:$0xf]
  %v16 = vld [vmem:[%s0 + $0x8] sm:$0xf]
  %v17 = vld [vmem:[%s0 + $0xc] sm:$0xf]
  %v18 = vld [vmem:[%s0 + $0x10] sm:$0xf]
  %v19 = vld [vmem:[%s0 + $0x14] sm:$0xf]
  %v20 = vld [vmem:[%s0 + $0x18] sm:$0xf]
  %v21 = vld [vmem:[%s0 + $0x1c] sm:$0xf]
  %v22 = vld [vmem:[%s0 + $0x20] sm:$0xf]
  %v23 = vld [vmem:[%s0 + $0x24] sm:$0xf]
  %v24 = vld [vmem:[%s0 + $0x28] sm:$0xf]
  %v25 = vld [vmem:[%s0 + $0x2c] sm:$0xf]
  %v26 = vld [vmem:[%s0 + $0x30] sm:$0xf]
  %v27 = vld [vmem:[%s0 + $0x34] sm:$0xf]
  %v28 = vld [vmem:[%s0 + $0x38] sm:$0xf]
  %v29 = vld [vmem:[%s0 + $0x3c] sm:$0xf]
  %v30 = vunpack.c.l.bf16 %v14
  %v31 = vunpack.c.l.bf16 %v15
  %v32 = vunpack.c.l.bf16 %v16
  %v33 = vunpack.c.l.bf16 %v17
  %v34 = vunpack.c.l.bf16 %v18
  %v35 = vunpack.c.l.bf16 %v19
  %v36 = vunpack.c.l.bf16 %v20
  %v37 = vunpack.c.l.bf16 %v21
  %v38 = vunpack.c.l.bf16 %v22
  %v39 = vunpack.c.l.bf16 %v23
  %v40 = vunpack.c.l.bf16 %v24
  %v41 = vunpack.c.l.bf16 %v25
  %v42 = vunpack.c.l.bf16 %v26
  %v43 = vunpack.c.l.bf16 %v27
  %v44 = vunpack.c.l.bf16 %v28
  %v45 = vunpack.c.l.bf16 %v29
  %v46 = vld [vmem:[%s1] sm:$0x1]
  %v48 = vlaneseq
  %v49 = vshrl.u32 %v48, 7
  %v50 = vsub.s32 0, %v49
  %v51 = vrot.slane %v46, %v50
  %v53 = vmul.f32 %v30, %v51
  %v54 = vmul.f32 %v31, %v51
  %v55 = vmul.f32 %v32, %v51
  %v56 = vmul.f32 %v33, %v51
  %v57 = vmul.f32 %v34, %v51
  %v58 = vmul.f32 %v35, %v51
  %v59 = vmul.f32 %v36, %v51
  %v60 = vmul.f32 %v37, %v51
  %v61 = vmul.f32 %v38, %v51
  %v62 = vmul.f32 %v39, %v51
  %v63 = vmul.f32 %v40, %v51
  %v64 = vmul.f32 %v41, %v51
  %v65 = vmul.f32 %v42, %v51
  %v66 = vmul.f32 %v43, %v51
  %v67 = vmul.f32 %v44, %v51
  %v68 = vmul.f32 %v45, %v51
  %v69 = vld [vmem:[%s2] sm:$0x1]
  %v71 = vlaneseq
  %v72 = vshrl.u32 %v71, 7
  %v73 = vsub.s32 0, %v72
  %v74 = vrot.slane %v69, %v73
  %v76 = vadd.f32 %v53, %v74
  %v77 = vadd.f32 %v54, %v74
  %v78 = vadd.f32 %v55, %v74
  %v79 = vadd.f32 %v56, %v74
  %v80 = vadd.f32 %v57, %v74
  %v81 = vadd.f32 %v58, %v74
  %v82 = vadd.f32 %v59, %v74
  %v83 = vadd.f32 %v60, %v74
  %v84 = vadd.f32 %v61, %v74
  %v85 = vadd.f32 %v62, %v74
  %v86 = vadd.f32 %v63, %v74
  %v87 = vadd.f32 %v64, %v74
  %v88 = vadd.f32 %v65, %v74
  %v89 = vadd.f32 %v66, %v74
  %v90 = vadd.f32 %v67, %v74
  %v91 = vadd.f32 %v68, %v74
  %v92 = vpack.c.bf16 %v77, %v76
  %v93 = vpack.c.bf16 %v79, %v78
  %v94 = vpack.c.bf16 %v81, %v80
  %v95 = vpack.c.bf16 %v83, %v82
  %v96 = vpack.c.bf16 %v85, %v84
  %v97 = vpack.c.bf16 %v87, %v86
  %v98 = vpack.c.bf16 %v89, %v88
  %v99 = vpack.c.bf16 %v91, %v90
  %v108 = vunpack.c.l.b16 %v92
  %v109 = vunpack.c.h.b16 %v92
  %v110 = vunpack.c.l.b16 %v93
  %v111 = vunpack.c.h.b16 %v93
  %v112 = vunpack.c.l.b16 %v94
  %v113 = vunpack.c.h.b16 %v94
  %v114 = vunpack.c.l.b16 %v95
  %v115 = vunpack.c.h.b16 %v95
  %v116 = vunpack.c.l.b16 %v96
  %v117 = vunpack.c.h.b16 %v96
  %v118 = vunpack.c.l.b16 %v97
  %v119 = vunpack.c.h.b16 %v97
  %v120 = vunpack.c.l.b16 %v98
  %v121 = vunpack.c.h.b16 %v98
  %v122 = vunpack.c.l.b16 %v99
  %v123 = vunpack.c.h.b16 %v99
  %v124 = vpack.c.b16 %v108, %v108
  %v125 = vpack.c.b16 %v109, %v109
  %v126 = vpack.c.b16 %v110, %v110
  %v127 = vpack.c.b16 %v111, %v111
  %v128 = vpack.c.b16 %v112, %v112
  %v129 = vpack.c.b16 %v113, %v113
  %v130 = vpack.c.b16 %v114, %v114
  %v131 = vpack.c.b16 %v115, %v115
  %v132 = vpack.c.b16 %v116, %v116
  %v133 = vpack.c.b16 %v117, %v117
  %v134 = vpack.c.b16 %v118, %v118
  %v135 = vpack.c.b16 %v119, %v119
  %v136 = vpack.c.b16 %v120, %v120
  %v137 = vpack.c.b16 %v121, %v121
  %v138 = vpack.c.b16 %v122, %v122
  %v139 = vpack.c.b16 %v123, %v123
  %156 = vst [vmem:[%s3] sm:$0xf] %v124
  %157 = vst [vmem:[%s3 + $0x4] sm:$0xf] %v125
  %158 = vst [vmem:[%s3 + $0x8] sm:$0xf] %v126
  %159 = vst [vmem:[%s3 + $0xc] sm:$0xf] %v127
  %160 = vst [vmem:[%s3 + $0x10] sm:$0xf] %v128
  %161 = vst [vmem:[%s3 + $0x14] sm:$0xf] %v129
  %162 = vst [vmem:[%s3 + $0x18] sm:$0xf] %v130
  %163 = vst [vmem:[%s3 + $0x1c] sm:$0xf] %v131
  %164 = vst [vmem:[%s3 + $0x20] sm:$0xf] %v132
  %165 = vst [vmem:[%s3 + $0x24] sm:$0xf] %v133
  %166 = vst [vmem:[%s3 + $0x28] sm:$0xf] %v134
  %167 = vst [vmem:[%s3 + $0x2c] sm:$0xf] %v135
  %168 = vst [vmem:[%s3 + $0x30] sm:$0xf] %v136
  %169 = vst [vmem:[%s3 + $0x34] sm:$0xf] %v137
  %170 = vst [vmem:[%s3 + $0x38] sm:$0xf] %v138
  %171 = vst [vmem:[%s3 + $0x3c] sm:$0xf] %v139
  // Predicated region
  $region14: #{forward.19} parent=0 // pred_check
    _
  $region15: #{forward.19} parent=0 // pred_check_branch
    %173 = sbr.rel (0) target = $region17
  $region16: #{forward.19} parent=0 // pred_region
    _
  $region17: #{forward.19} parent=0 // pred_fallthru
    _
  // Predicated region
  $region18: #{forward.19} parent=0 // pred_check
    _
  $region19: #{forward.19} parent=0 // pred_check_branch
    %175 = sbr.rel (0) target = $region21
  $region20: #{forward.19} parent=0 // pred_region
    _
  $region21: #{forward.19} parent=0 // pred_fallthru
    _

// kernel: forward.18
$region0: #{forward.18}
  #allocation0 [shape = 'u32[]', space=smem, size = 0x4, offset = 0x4, fixed_abs, tag = 'smem constant byte address 0x4 - core index']
  #allocation1 [shape = 'u32[144,128]{1,0:T(1,128)}', space=vmem, size = 0x12000, scoped, tag = 'internal scratch']
  %s0 = inlined_call_operand.vmem [shape: bf16[128,1792], index: 0, kind: input, shape index: {}]
  %s1 = inlined_call_operand.vmem [shape: bf16[1792,128], index: 1, kind: input, shape index: {}]
  %s2 = inlined_call_operand.vmem [shape: f32[1,128], index: 2, kind: input, shape index: {}]
  %s3 = inlined_call_operand.vmem [shape: bf16[128,128], index: 3, kind: output, shape index: {0}]
  %s4 = inlined_call_operand.vmem [shape: f32[1,1,128], index: 4, kind: output, shape index: {1}]
  %s5 = inlined_call_operand.vmem [shape: f32[1,1,128], index: 5, kind: output, shape index: {2}]
  %6 = xla_tuple %s3, %s4, %s5
  %s7 = sld [smem:[#allocation0]]
  $region38: #{forward.18} parent=0
    _
  %s9 = ssub.s32 1, %s7
  %s10 = scalar_select 0, %s9, %s7
  // Predicated region
  $region2: #{forward.18} parent=0 // pred_check
    _
  $region3: #{forward.18} parent=0 // pred_check_branch
    %12 = sbr.rel (0) target = $region5
  $region4: #{forward.18} parent=0 // pred_region
    _
  $region5: #{forward.18} parent=0 // pred_fallthru
    _
  // Predicated region
  $region6: #{forward.18} parent=0 // pred_check
    _
  $region7: #{forward.18} parent=0 // pred_check_branch
    %14 = sbr.rel (0) target = $region9
  $region8: #{forward.18} parent=0 // pred_region
    _
  $region9: #{forward.18} parent=0 // pred_fallthru
    _
  // Predicated region
  $region10: #{forward.18} parent=0 // pred_check
    _
  $region11: #{forward.18} parent=0 // pred_check_branch
    %16 = sbr.rel (0) target = $region13
  $region12: #{forward.18} parent=0 // pred_region
    _
  $region13: #{forward.18} parent=0 // pred_fallthru
    _
  %v18 = vld [vmem:[%s0] sm:$0xff]
  %v19 = vld [vmem:[%s0 + $0x8] sm:$0xff]
  %v20 = vld [vmem:[%s0 + $0x10] sm:$0xff]
  %v21 = vld [vmem:[%s0 + $0x18] sm:$0xff]
  %v22 = vld [vmem:[%s0 + $0x20] sm:$0xff]
  %v23 = vld [vmem:[%s0 + $0x28] sm:$0xff]
  %v24 = vld [vmem:[%s0 + $0x30] sm:$0xff]
  %v25 = vld [vmem:[%s0 + $0x38] sm:$0xff]
  %v26 = vld [vmem:[%s0 + $0x40] sm:$0xff]
  %v27 = vld [vmem:[%s0 + $0x48] sm:$0xff]
  %v28 = vld [vmem:[%s0 + $0x50] sm:$0xff]
  %v29 = vld [vmem:[%s0 + $0x58] sm:$0xff]
  %v30 = vld [vmem:[%s0 + $0x60] sm:$0xff]
  %v31 = vld [vmem:[%s0 + $0x68] sm:$0xff]
  %v32 = vld [vmem:[%s0 + $0x70] sm:$0xff]
  %v33 = vld [vmem:[%s0 + $0x78] sm:$0xff]
  %v34 = vld [vmem:[%s0 + $0x80] sm:$0xff]
  %v35 = vld [vmem:[%s0 + $0x88] sm:$0xff]
  %v36 = vld [vmem:[%s0 + $0x90] sm:$0xff]
  %v37 = vld [vmem:[%s0 + $0x98] sm:$0xff]
  %v38 = vld [vmem:[%s0 + $0xa0] sm:$0xff]
  %v39 = vld [vmem:[%s0 + $0xa8] sm:$0xff]
  %v40 = vld [vmem:[%s0 + $0xb0] sm:$0xff]
  %v41 = vld [vmem:[%s0 + $0xb8] sm:$0xff]
  %v42 = vld [vmem:[%s0 + $0xc0] sm:$0xff]
  %v43 = vld [vmem:[%s0 + $0xc8] sm:$0xff]
  %v44 = vld [vmem:[%s0 + $0xd0] sm:$0xff]
  %v45 = vld [vmem:[%s0 + $0xd8] sm:$0xff]
  %v46 = vld [vmem:[%s0 + $0xe0] sm:$0xff]
  %v47 = vld [vmem:[%s0 + $0xe8] sm:$0xff]
  %v48 = vld [vmem:[%s0 + $0xf0] sm:$0xff]
  %v49 = vld [vmem:[%s0 + $0xf8] sm:$0xff]
  %v50 = vld [vmem:[%s0 + $0x100] sm:$0xff]
  %v51 = vld [vmem:[%s0 + $0x108] sm:$0xff]
  %v52 = vld [vmem:[%s0 + $0x110] sm:$0xff]
  %v53 = vld [vmem:[%s0 + $0x118] sm:$0xff]
  %v54 = vld [vmem:[%s0 + $0x120] sm:$0xff]
  %v55 = vld [vmem:[%s0 + $0x128] sm:$0xff]
  %v56 = vld [vmem:[%s0 + $0x130] sm:$0xff]
  %v57 = vld [vmem:[%s0 + $0x138] sm:$0xff]
  %v58 = vld [vmem:[%s0 + $0x140] sm:$0xff]
  %v59 = vld [vmem:[%s0 + $0x148] sm:$0xff]
  %v60 = vld [vmem:[%s0 + $0x150] sm:$0xff]
  %v61 = vld [vmem:[%s0 + $0x158] sm:$0xff]
  %v62 = vld [vmem:[%s0 + $0x160] sm:$0xff]
  %v63 = vld [vmem:[%s0 + $0x168] sm:$0xff]
  %v64 = vld [vmem:[%s0 + $0x170] sm:$0xff]
  %v65 = vld [vmem:[%s0 + $0x178] sm:$0xff]
  %v66 = vld [vmem:[%s0 + $0x180] sm:$0xff]
  %v67 = vld [vmem:[%s0 + $0x188] sm:$0xff]
  %v68 = vld [vmem:[%s0 + $0x190] sm:$0xff]
  %v69 = vld [vmem:[%s0 + $0x198] sm:$0xff]
  %v70 = vld [vmem:[%s0 + $0x1a0] sm:$0xff]
  %v71 = vld [vmem:[%s0 + $0x1a8] sm:$0xff]
  %v72 = vld [vmem:[%s0 + $0x1b0] sm:$0xff]
  %v73 = vld [vmem:[%s0 + $0x1b8] sm:$0xff]
  %v74 = vld [vmem:[%s0 + $0x1c0] sm:$0xff]
  %v75 = vld [vmem:[%s0 + $0x1c8] sm:$0xff]
  %v76 = vld [vmem:[%s0 + $0x1d0] sm:$0xff]
  %v77 = vld [vmem:[%s0 + $0x1d8] sm:$0xff]
  %v78 = vld [vmem:[%s0 + $0x1e0] sm:$0xff]
  %v79 = vld [vmem:[%s0 + $0x1e8] sm:$0xff]
  %v80 = vld [vmem:[%s0 + $0x1f0] sm:$0xff]
  %v81 = vld [vmem:[%s0 + $0x1f8] sm:$0xff]
  %v82 = vld [vmem:[%s0 + $0x200] sm:$0xff]
  %v83 = vld [vmem:[%s0 + $0x208] sm:$0xff]
  %v84 = vld [vmem:[%s0 + $0x210] sm:$0xff]
  %v85 = vld [vmem:[%s0 + $0x218] sm:$0xff]
  %v86 = vld [vmem:[%s0 + $0x220] sm:$0xff]
  %v87 = vld [vmem:[%s0 + $0x228] sm:$0xff]
  %v88 = vld [vmem:[%s0 + $0x230] sm:$0xff]
  %v89 = vld [vmem:[%s0 + $0x238] sm:$0xff]
  %v90 = vld [vmem:[%s0 + $0x240] sm:$0xff]
  %v91 = vld [vmem:[%s0 + $0x248] sm:$0xff]
  %v92 = vld [vmem:[%s0 + $0x250] sm:$0xff]
  %v93 = vld [vmem:[%s0 + $0x258] sm:$0xff]
  %v94 = vld [vmem:[%s0 + $0x260] sm:$0xff]
  %v95 = vld [vmem:[%s0 + $0x268] sm:$0xff]
  %v96 = vld [vmem:[%s0 + $0x270] sm:$0xff]
  %v97 = vld [vmem:[%s0 + $0x278] sm:$0xff]
  %v98 = vld [vmem:[%s0 + $0x280] sm:$0xff]
  %v99 = vld [vmem:[%s0 + $0x288] sm:$0xff]
  %v100 = vld [vmem:[%s0 + $0x290] sm:$0xff]
  %v101 = vld [vmem:[%s0 + $0x298] sm:$0xff]
  %v102 = vld [vmem:[%s0 + $0x2a0] sm:$0xff]
  %v103 = vld [vmem:[%s0 + $0x2a8] sm:$0xff]
  %v104 = vld [vmem:[%s0 + $0x2b0] sm:$0xff]
  %v105 = vld [vmem:[%s0 + $0x2b8] sm:$0xff]
  %v106 = vld [vmem:[%s0 + $0x2c0] sm:$0xff]
  %v107 = vld [vmem:[%s0 + $0x2c8] sm:$0xff]
  %v108 = vld [vmem:[%s0 + $0x2d0] sm:$0xff]
  %v109 = vld [vmem:[%s0 + $0x2d8] sm:$0xff]
  %v110 = vld [vmem:[%s0 + $0x2e0] sm:$0xff]
  %v111 = vld [vmem:[%s0 + $0x2e8] sm:$0xff]
  %v112 = vld [vmem:[%s0 + $0x2f0] sm:$0xff]
  %v113 = vld [vmem:[%s0 + $0x2f8] sm:$0xff]
  %v114 = vld [vmem:[%s0 + $0x300] sm:$0xff]
  %v115 = vld [vmem:[%s0 + $0x308] sm:$0xff]
  %v116 = vld [vmem:[%s0 + $0x310] sm:$0xff]
  %v117 = vld [vmem:[%s0 + $0x318] sm:$0xff]
  %v118 = vld [vmem:[%s0 + $0x320] sm:$0xff]
  %v119 = vld [vmem:[%s0 + $0x328] sm:$0xff]
  %v120 = vld [vmem:[%s0 + $0x330] sm:$0xff]
  %v121 = vld [vmem:[%s0 + $0x338] sm:$0xff]
  %v122 = vld [vmem:[%s0 + $0x340] sm:$0xff]
  %v123 = vld [vmem:[%s0 + $0x348] sm:$0xff]
  %v124 = vld [vmem:[%s0 + $0x350] sm:$0xff]
  %v125 = vld [vmem:[%s0 + $0x358] sm:$0xff]
  %v126 = vld [vmem:[%s0 + $0x360] sm:$0xff]
  %v127 = vld [vmem:[%s0 + $0x368] sm:$0xff]
  %v128 = vld [vmem:[%s0 + $0x370] sm:$0xff]
  %v129 = vld [vmem:[%s0 + $0x378] sm:$0xff]
  %v130 = vld [vmem:[%s1] sm:$0xf]
  %v131 = vld [vmem:[%s1 + $0x4] sm:$0xf]
  %v132 = vld [vmem:[%s1 + $0x8] sm:$0xf]
  %v133 = vld [vmem:[%s1 + $0xc] sm:$0xf]
  %v134 = vld [vmem:[%s1 + $0x10] sm:$0xf]
  %v135 = vld [vmem:[%s1 + $0x14] sm:$0xf]
  %v136 = vld [vmem:[%s1 + $0x18] sm:$0xf]
  %v137 = vld [vmem:[%s1 + $0x1c] sm:$0xf]
  %v138 = vld [vmem:[%s1 + $0x20] sm:$0xf]
  %v139 = vld [vmem:[%s1 + $0x24] sm:$0xf]
  %v140 = vld [vmem:[%s1 + $0x28] sm:$0xf]
  %v141 = vld [vmem:[%s1 + $0x2c] sm:$0xf]
  %v142 = vld [vmem:[%s1 + $0x30] sm:$0xf]
  %v143 = vld [vmem:[%s1 + $0x34] sm:$0xf]
  %v144 = vld [vmem:[%s1 + $0x38] sm:$0xf]
  %v145 = vld [vmem:[%s1 + $0x3c] sm:$0xf]
  %v146 = vld [vmem:[%s1 + $0x40] sm:$0xf]
  %v147 = vld [vmem:[%s1 + $0x44] sm:$0xf]
  %v148 = vld [vmem:[%s1 + $0x48] sm:$0xf]
  %v149 = vld [vmem:[%s1 + $0x4c] sm:$0xf]
  %v150 = vld [vmem:[%s1 + $0x50] sm:$0xf]
  %v151 = vld [vmem:[%s1 + $0x54] sm:$0xf]
  %v152 = vld [vmem:[%s1 + $0x58] sm:$0xf]
  %v153 = vld [vmem:[%s1 + $0x5c] sm:$0xf]
  %v154 = vld [vmem:[%s1 + $0x60] sm:$0xf]
  %v155 = vld [vmem:[%s1 + $0x64] sm:$0xf]
  %v156 = vld [vmem:[%s1 + $0x68] sm:$0xf]
  %v157 = vld [vmem:[%s1 + $0x6c] sm:$0xf]
  %v158 = vld [vmem:[%s1 + $0x70] sm:$0xf]
  %v159 = vld [vmem:[%s1 + $0x74] sm:$0xf]
  %v160 = vld [vmem:[%s1 + $0x78] sm:$0xf]
  %v161 = vld [vmem:[%s1 + $0x7c] sm:$0xf]
  %v162 = vld [vmem:[%s1 + $0x80] sm:$0xf]
  %v163 = vld [vmem:[%s1 + $0x84] sm:$0xf]
  %v164 = vld [vmem:[%s1 + $0x88] sm:$0xf]
  %v165 = vld [vmem:[%s1 + $0x8c] sm:$0xf]
  %v166 = vld [vmem:[%s1 + $0x90] sm:$0xf]
  %v167 = vld [vmem:[%s1 + $0x94] sm:$0xf]
  %v168 = vld [vmem:[%s1 + $0x98] sm:$0xf]
  %v169 = vld [vmem:[%s1 + $0x9c] sm:$0xf]
  %v170 = vld [vmem:[%s1 + $0xa0] sm:$0xf]
  %v171 = vld [vmem:[%s1 + $0xa4] sm:$0xf]
  %v172 = vld [vmem:[%s1 + $0xa8] sm:$0xf]
  %v173 = vld [vmem:[%s1 + $0xac] sm:$0xf]
  %v174 = vld [vmem:[%s1 + $0xb0] sm:$0xf]
  %v175 = vld [vmem:[%s1 + $0xb4] sm:$0xf]
  %v176 = vld [vmem:[%s1 + $0xb8] sm:$0xf]
  %v177 = vld [vmem:[%s1 + $0xbc] sm:$0xf]
  %v178 = vld [vmem:[%s1 + $0xc0] sm:$0xf]
  %v179 = vld [vmem:[%s1 + $0xc4] sm:$0xf]
  %v180 = vld [vmem:[%s1 + $0xc8] sm:$0xf]
  %v181 = vld [vmem:[%s1 + $0xcc] sm:$0xf]
  %v182 = vld [vmem:[%s1 + $0xd0] sm:$0xf]
  %v183 = vld [vmem:[%s1 + $0xd4] sm:$0xf]
  %v184 = vld [vmem:[%s1 + $0xd8] sm:$0xf]
  %v185 = vld [vmem:[%s1 + $0xdc] sm:$0xf]
  %v186 = vld [vmem:[%s1 + $0xe0] sm:$0xf]
  %v187 = vld [vmem:[%s1 + $0xe4] sm:$0xf]
  %v188 = vld [vmem:[%s1 + $0xe8] sm:$0xf]
  %v189 = vld [vmem:[%s1 + $0xec] sm:$0xf]
  %v190 = vld [vmem:[%s1 + $0xf0] sm:$0xf]
  %v191 = vld [vmem:[%s1 + $0xf4] sm:$0xf]
  %v192 = vld [vmem:[%s1 + $0xf8] sm:$0xf]
  %v193 = vld [vmem:[%s1 + $0xfc] sm:$0xf]
  %v194 = vld [vmem:[%s1 + $0x100] sm:$0xf]
  %v195 = vld [vmem:[%s1 + $0x104] sm:$0xf]
  %v196 = vld [vmem:[%s1 + $0x108] sm:$0xf]
  %v197 = vld [vmem:[%s1 + $0x10c] sm:$0xf]
  %v198 = vld [vmem:[%s1 + $0x110] sm:$0xf]
  %v199 = vld [vmem:[%s1 + $0x114] sm:$0xf]
  %v200 = vld [vmem:[%s1 + $0x118] sm:$0xf]
  %v201 = vld [vmem:[%s1 + $0x11c] sm:$0xf]
  %v202 = vld [vmem:[%s1 + $0x120] sm:$0xf]
  %v203 = vld [vmem:[%s1 + $0x124] sm:$0xf]
  %v204 = vld [vmem:[%s1 + $0x128] sm:$0xf]
  %v205 = vld [vmem:[%s1 + $0x12c] sm:$0xf]
  %v206 = vld [vmem:[%s1 + $0x130] sm:$0xf]
  %v207 = vld [vmem:[%s1 + $0x134] sm:$0xf]
  %v208 = vld [vmem:[%s1 + $0x138] sm:$0xf]
  %v209 = vld [vmem:[%s1 + $0x13c] sm:$0xf]
  %v210 = vld [vmem:[%s1 + $0x140] sm:$0xf]
  %v211 = vld [vmem:[%s1 + $0x144] sm:$0xf]
  %v212 = vld [vmem:[%s1 + $0x148] sm:$0xf]
  %v213 = vld [vmem:[%s1 + $0x14c] sm:$0xf]
  %v214 = vld [vmem:[%s1 + $0x150] sm:$0xf]
  %v215 = vld [vmem:[%s1 + $0x154] sm:$0xf]
  %v216 = vld [vmem:[%s1 + $0x158] sm:$0xf]
  %v217 = vld [vmem:[%s1 + $0x15c] sm:$0xf]
  %v218 = vld [vmem:[%s1 + $0x160] sm:$0xf]
  %v219 = vld [vmem:[%s1 + $0x164] sm:$0xf]
  %v220 = vld [vmem:[%s1 + $0x168] sm:$0xf]
  %v221 = vld [vmem:[%s1 + $0x16c] sm:$0xf]
  %v222 = vld [vmem:[%s1 + $0x170] sm:$0xf]
  %v223 = vld [vmem:[%s1 + $0x174] sm:$0xf]
  %v224 = vld [vmem:[%s1 + $0x178] sm:$0xf]
  %v225 = vld [vmem:[%s1 + $0x17c] sm:$0xf]
  %v226 = vld [vmem:[%s1 + $0x180] sm:$0xf]
  %v227 = vld [vmem:[%s1 + $0x184] sm:$0xf]
  %v228 = vld [vmem:[%s1 + $0x188] sm:$0xf]
  %v229 = vld [vmem:[%s1 + $0x18c] sm:$0xf]
  %v230 = vld [vmem:[%s1 + $0x190] sm:$0xf]
  %v231 = vld [vmem:[%s1 + $0x194] sm:$0xf]
  %v232 = vld [vmem:[%s1 + $0x198] sm:$0xf]
  %v233 = vld [vmem:[%s1 + $0x19c] sm:$0xf]
  %v234 = vld [vmem:[%s1 + $0x1a0] sm:$0xf]
  %v235 = vld [vmem:[%s1 + $0x1a4] sm:$0xf]
  %v236 = vld [vmem:[%s1 + $0x1a8] sm:$0xf]
  %v237 = vld [vmem:[%s1 + $0x1ac] sm:$0xf]
  %v238 = vld [vmem:[%s1 + $0x1b0] sm:$0xf]
  %v239 = vld [vmem:[%s1 + $0x1b4] sm:$0xf]
  %v240 = vld [vmem:[%s1 + $0x1b8] sm:$0xf]
  %v241 = vld [vmem:[%s1 + $0x1bc] sm:$0xf]
  %v242 = vld [vmem:[%s1 + $0x1c0] sm:$0xf]
  %v243 = vld [vmem:[%s1 + $0x1c4] sm:$0xf]
  %v244 = vld [vmem:[%s1 + $0x1c8] sm:$0xf]
  %v245 = vld [vmem:[%s1 + $0x1cc] sm:$0xf]
  %v246 = vld [vmem:[%s1 + $0x1d0] sm:$0xf]
  %v247 = vld [vmem:[%s1 + $0x1d4] sm:$0xf]
  %v248 = vld [vmem:[%s1 + $0x1d8] sm:$0xf]
  %v249 = vld [vmem:[%s1 + $0x1dc] sm:$0xf]
  %v250 = vld [vmem:[%s1 + $0x1e0] sm:$0xf]
  %v251 = vld [vmem:[%s1 + $0x1e4] sm:$0xf]
  %v252 = vld [vmem:[%s1 + $0x1e8] sm:$0xf]
  %v253 = vld [vmem:[%s1 + $0x1ec] sm:$0xf]
  %v254 = vld [vmem:[%s1 + $0x1f0] sm:$0xf]
  %v255 = vld [vmem:[%s1 + $0x1f4] sm:$0xf]
  %v256 = vld [vmem:[%s1 + $0x1f8] sm:$0xf]
  %v257 = vld [vmem:[%s1 + $0x1fc] sm:$0xf]
  %v258 = vld [vmem:[%s1 + $0x200] sm:$0xf]
  %v259 = vld [vmem:[%s1 + $0x204] sm:$0xf]
  %v260 = vld [vmem:[%s1 + $0x208] sm:$0xf]
  %v261 = vld [vmem:[%s1 + $0x20c] sm:$0xf]
  %v262 = vld [vmem:[%s1 + $0x210] sm:$0xf]
  %v263 = vld [vmem:[%s1 + $0x214] sm:$0xf]
  %v264 = vld [vmem:[%s1 + $0x218] sm:$0xf]
  %v265 = vld [vmem:[%s1 + $0x21c] sm:$0xf]
  %v266 = vld [vmem:[%s1 + $0x220] sm:$0xf]
  %v267 = vld [vmem:[%s1 + $0x224] sm:$0xf]
  %v268 = vld [vmem:[%s1 + $0x228] sm:$0xf]
  %v269 = vld [vmem:[%s1 + $0x22c] sm:$0xf]
  %v270 = vld [vmem:[%s1 + $0x230] sm:$0xf]
  %v271 = vld [vmem:[%s1 + $0x234] sm:$0xf]
  %v272 = vld [vmem:[%s1 + $0x238] sm:$0xf]
  %v273 = vld [vmem:[%s1 + $0x23c] sm:$0xf]
  %v274 = vld [vmem:[%s1 + $0x240] sm:$0xf]
  %v275 = vld [vmem:[%s1 + $0x244] sm:$0xf]
  %v276 = vld [vmem:[%s1 + $0x248] sm:$0xf]
  %v277 = vld [vmem:[%s1 + $0x24c] sm:$0xf]
  %v278 = vld [vmem:[%s1 + $0x250] sm:$0xf]
  %v279 = vld [vmem:[%s1 + $0x254] sm:$0xf]
  %v280 = vld [vmem:[%s1 + $0x258] sm:$0xf]
  %v281 = vld [vmem:[%s1 + $0x25c] sm:$0xf]
  %v282 = vld [vmem:[%s1 + $0x260] sm:$0xf]
  %v283 = vld [vmem:[%s1 + $0x264] sm:$0xf]
  %v284 = vld [vmem:[%s1 + $0x268] sm:$0xf]
  %v285 = vld [vmem:[%s1 + $0x26c] sm:$0xf]
  %v286 = vld [vmem:[%s1 + $0x270] sm:$0xf]
  %v287 = vld [vmem:[%s1 + $0x274] sm:$0xf]
  %v288 = vld [vmem:[%s1 + $0x278] sm:$0xf]
  %v289 = vld [vmem:[%s1 + $0x27c] sm:$0xf]
  %v290 = vld [vmem:[%s1 + $0x280] sm:$0xf]
  %v291 = vld [vmem:[%s1 + $0x284] sm:$0xf]
  %v292 = vld [vmem:[%s1 + $0x288] sm:$0xf]
  %v293 = vld [vmem:[%s1 + $0x28c] sm:$0xf]
  %v294 = vld [vmem:[%s1 + $0x290] sm:$0xf]
  %v295 = vld [vmem:[%s1 + $0x294] sm:$0xf]
  %v296 = vld [vmem:[%s1 + $0x298] sm:$0xf]
  %v297 = vld [vmem:[%s1 + $0x29c] sm:$0xf]
  %v298 = vld [vmem:[%s1 + $0x2a0] sm:$0xf]
  %v299 = vld [vmem:[%s1 + $0x2a4] sm:$0xf]
  %v300 = vld [vmem:[%s1 + $0x2a8] sm:$0xf]
  %v301 = vld [vmem:[%s1 + $0x2ac] sm:$0xf]
  %v302 = vld [vmem:[%s1 + $0x2b0] sm:$0xf]
  %v303 = vld [vmem:[%s1 + $0x2b4] sm:$0xf]
  %v304 = vld [vmem:[%s1 + $0x2b8] sm:$0xf]
  %v305 = vld [vmem:[%s1 + $0x2bc] sm:$0xf]
  %v306 = vld [vmem:[%s1 + $0x2c0] sm:$0xf]
  %v307 = vld [vmem:[%s1 + $0x2c4] sm:$0xf]
  %v308 = vld [vmem:[%s1 + $0x2c8] sm:$0xf]
  %v309 = vld [vmem:[%s1 + $0x2cc] sm:$0xf]
  %v310 = vld [vmem:[%s1 + $0x2d0] sm:$0xf]
  %v311 = vld [vmem:[%s1 + $0x2d4] sm:$0xf]
  %v312 = vld [vmem:[%s1 + $0x2d8] sm:$0xf]
  %v313 = vld [vmem:[%s1 + $0x2dc] sm:$0xf]
  %v314 = vld [vmem:[%s1 + $0x2e0] sm:$0xf]
  %v315 = vld [vmem:[%s1 + $0x2e4] sm:$0xf]
  %v316 = vld [vmem:[%s1 + $0x2e8] sm:$0xf]
  %v317 = vld [vmem:[%s1 + $0x2ec] sm:$0xf]
  %v318 = vld [vmem:[%s1 + $0x2f0] sm:$0xf]
  %v319 = vld [vmem:[%s1 + $0x2f4] sm:$0xf]
  %v320 = vld [vmem:[%s1 + $0x2f8] sm:$0xf]
  %v321 = vld [vmem:[%s1 + $0x2fc] sm:$0xf]
  %v322 = vld [vmem:[%s1 + $0x300] sm:$0xf]
  %v323 = vld [vmem:[%s1 + $0x304] sm:$0xf]
  %v324 = vld [vmem:[%s1 + $0x308] sm:$0xf]
  %v325 = vld [vmem:[%s1 + $0x30c] sm:$0xf]
  %v326 = vld [vmem:[%s1 + $0x310] sm:$0xf]
  %v327 = vld [vmem:[%s1 + $0x314] sm:$0xf]
  %v328 = vld [vmem:[%s1 + $0x318] sm:$0xf]
  %v329 = vld [vmem:[%s1 + $0x31c] sm:$0xf]
  %v330 = vld [vmem:[%s1 + $0x320] sm:$0xf]
  %v331 = vld [vmem:[%s1 + $0x324] sm:$0xf]
  %v332 = vld [vmem:[%s1 + $0x328] sm:$0xf]
  %v333 = vld [vmem:[%s1 + $0x32c] sm:$0xf]
  %v334 = vld [vmem:[%s1 + $0x330] sm:$0xf]
  %v335 = vld [vmem:[%s1 + $0x334] sm:$0xf]
  %v336 = vld [vmem:[%s1 + $0x338] sm:$0xf]
  %v337 = vld [vmem:[%s1 + $0x33c] sm:$0xf]
  %v338 = vld [vmem:[%s1 + $0x340] sm:$0xf]
  %v339 = vld [vmem:[%s1 + $0x344] sm:$0xf]
  %v340 = vld [vmem:[%s1 + $0x348] sm:$0xf]
  %v341 = vld [vmem:[%s1 + $0x34c] sm:$0xf]
  %v342 = vld [vmem:[%s1 + $0x350] sm:$0xf]
  %v343 = vld [vmem:[%s1 + $0x354] sm:$0xf]
  %v344 = vld [vmem:[%s1 + $0x358] sm:$0xf]
  %v345 = vld [vmem:[%s1 + $0x35c] sm:$0xf]
  %v346 = vld [vmem:[%s1 + $0x360] sm:$0xf]
  %v347 = vld [vmem:[%s1 + $0x364] sm:$0xf]
  %v348 = vld [vmem:[%s1 + $0x368] sm:$0xf]
  %v349 = vld [vmem:[%s1 + $0x36c] sm:$0xf]
  %v350 = vld [vmem:[%s1 + $0x370] sm:$0xf]
  %v351 = vld [vmem:[%s1 + $0x374] sm:$0xf]
  %v352 = vld [vmem:[%s1 + $0x378] sm:$0xf]
  %v353 = vld [vmem:[%s1 + $0x37c] sm:$0xf]
  %v354 = vld [vmem:[%s2] sm:$0x1]
  %v356 = vlaneseq
  %v357 = vshrl.u32 %v356, 7
  %v358 = vsub.s32 0, %v357
  %v359 = vrot.slane %v354, %v358
  %v473 = vunpack.c.l.b16 %v18
  %v474 = vunpack.c.h.b16 %v18
  %v475 = vunpack.c.l.b16 %v19
  %v476 = vunpack.c.h.b16 %v19
  %v477 = vunpack.c.l.b16 %v20
  %v478 = vunpack.c.h.b16 %v20
  %v479 = vunpack.c.l.b16 %v21
  %v480 = vunpack.c.h.b16 %v21
  %v481 = vunpack.c.l.b16 %v22
  %v482 = vunpack.c.h.b16 %v22
  %v483 = vunpack.c.l.b16 %v23
  %v484 = vunpack.c.h.b16 %v23
  %v485 = vunpack.c.l.b16 %v24
  %v486 = vunpack.c.h.b16 %v24
  %v487 = vunpack.c.l.b16 %v25
  %v488 = vunpack.c.h.b16 %v25
  %v489 = vunpack.c.l.b16 %v26
  %v490 = vunpack.c.h.b16 %v26
  %v491 = vunpack.c.l.b16 %v27
  %v492 = vunpack.c.h.b16 %v27
  %v493 = vunpack.c.l.b16 %v28
  %v494 = vunpack.c.h.b16 %v28
  %v495 = vunpack.c.l.b16 %v29
  %v496 = vunpack.c.h.b16 %v29
  %v497 = vunpack.c.l.b16 %v30
  %v498 = vunpack.c.h.b16 %v30
  %v499 = vunpack.c.l.b16 %v31
  %v500 = vunpack.c.h.b16 %v31
  %v501 = vunpack.c.l.b16 %v32
  %v502 = vunpack.c.h.b16 %v32
  %v503 = vunpack.c.l.b16 %v33
  %v504 = vunpack.c.h.b16 %v33
  %v505 = vunpack.c.l.b16 %v34
  %v506 = vunpack.c.h.b16 %v34
  %v507 = vunpack.c.l.b16 %v35
  %v508 = vunpack.c.h.b16 %v35
  %v509 = vunpack.c.l.b16 %v36
  %v510 = vunpack.c.h.b16 %v36
  %v511 = vunpack.c.l.b16 %v37
  %v512 = vunpack.c.h.b16 %v37
  %v513 = vunpack.c.l.b16 %v38
  %v514 = vunpack.c.h.b16 %v38
  %v515 = vunpack.c.l.b16 %v39
  %v516 = vunpack.c.h.b16 %v39
  %v517 = vunpack.c.l.b16 %v40
  %v518 = vunpack.c.h.b16 %v40
  %v519 = vunpack.c.l.b16 %v41
  %v520 = vunpack.c.h.b16 %v41
  %v521 = vunpack.c.l.b16 %v42
  %v522 = vunpack.c.h.b16 %v42
  %v523 = vunpack.c.l.b16 %v43
  %v524 = vunpack.c.h.b16 %v43
  %v525 = vunpack.c.l.b16 %v44
  %v526 = vunpack.c.h.b16 %v44
  %v527 = vunpack.c.l.b16 %v45
  %v528 = vunpack.c.h.b16 %v45
  %v529 = vunpack.c.l.b16 %v46
  %v530 = vunpack.c.h.b16 %v46
  %v531 = vunpack.c.l.b16 %v47
  %v532 = vunpack.c.h.b16 %v47
  %v533 = vunpack.c.l.b16 %v48
  %v534 = vunpack.c.h.b16 %v48
  %v535 = vunpack.c.l.b16 %v49
  %v536 = vunpack.c.h.b16 %v49
  %v537 = vunpack.c.l.b16 %v50
  %v538 = vunpack.c.h.b16 %v50
  %v539 = vunpack.c.l.b16 %v51
  %v540 = vunpack.c.h.b16 %v51
  %v541 = vunpack.c.l.b16 %v52
  %v542 = vunpack.c.h.b16 %v52
  %v543 = vunpack.c.l.b16 %v53
  %v544 = vunpack.c.h.b16 %v53
  %v545 = vunpack.c.l.b16 %v54
  %v546 = vunpack.c.h.b16 %v54
  %v547 = vunpack.c.l.b16 %v55
  %v548 = vunpack.c.h.b16 %v55
  %v549 = vunpack.c.l.b16 %v56
  %v550 = vunpack.c.h.b16 %v56
  %v551 = vunpack.c.l.b16 %v57
  %v552 = vunpack.c.h.b16 %v57
  %v553 = vunpack.c.l.b16 %v58
  %v554 = vunpack.c.h.b16 %v58
  %v555 = vunpack.c.l.b16 %v59
  %v556 = vunpack.c.h.b16 %v59
  %v557 = vunpack.c.l.b16 %v60
  %v558 = vunpack.c.h.b16 %v60
  %v559 = vunpack.c.l.b16 %v61
  %v560 = vunpack.c.h.b16 %v61
  %v561 = vunpack.c.l.b16 %v62
  %v562 = vunpack.c.h.b16 %v62
  %v563 = vunpack.c.l.b16 %v63
  %v564 = vunpack.c.h.b16 %v63
  %v565 = vunpack.c.l.b16 %v64
  %v566 = vunpack.c.h.b16 %v64
  %v567 = vunpack.c.l.b16 %v65
  %v568 = vunpack.c.h.b16 %v65
  %v569 = vunpack.c.l.b16 %v66
  %v570 = vunpack.c.h.b16 %v66
  %v571 = vunpack.c.l.b16 %v67
  %v572 = vunpack.c.h.b16 %v67
  %v573 = vunpack.c.l.b16 %v68
  %v574 = vunpack.c.h.b16 %v68
  %v575 = vunpack.c.l.b16 %v69
  %v576 = vunpack.c.h.b16 %v69
  %v577 = vunpack.c.l.b16 %v70
  %v578 = vunpack.c.h.b16 %v70
  %v579 = vunpack.c.l.b16 %v71
  %v580 = vunpack.c.h.b16 %v71
  %v581 = vunpack.c.l.b16 %v72
  %v582 = vunpack.c.h.b16 %v72
  %v583 = vunpack.c.l.b16 %v73
  %v584 = vunpack.c.h.b16 %v73
  %v585 = vunpack.c.l.b16 %v74
  %v586 = vunpack.c.h.b16 %v74
  %v587 = vunpack.c.l.b16 %v75
  %v588 = vunpack.c.h.b16 %v75
  %v589 = vunpack.c.l.b16 %v76
  %v590 = vunpack.c.h.b16 %v76
  %v591 = vunpack.c.l.b16 %v77
  %v592 = vunpack.c.h.b16 %v77
  %v593 = vunpack.c.l.b16 %v78
  %v594 = vunpack.c.h.b16 %v78
  %v595 = vunpack.c.l.b16 %v79
  %v596 = vunpack.c.h.b16 %v79
  %v597 = vunpack.c.l.b16 %v80
  %v598 = vunpack.c.h.b16 %v80
  %v599 = vunpack.c.l.b16 %v81
  %v600 = vunpack.c.h.b16 %v81
  %v601 = vunpack.c.l.b16 %v82
  %v602 = vunpack.c.h.b16 %v82
  %v603 = vunpack.c.l.b16 %v83
  %v604 = vunpack.c.h.b16 %v83
  %v605 = vunpack.c.l.b16 %v84
  %v606 = vunpack.c.h.b16 %v84
  %v607 = vunpack.c.l.b16 %v85
  %v608 = vunpack.c.h.b16 %v85
  %v609 = vunpack.c.l.b16 %v86
  %v610 = vunpack.c.h.b16 %v86
  %v611 = vunpack.c.l.b16 %v87
  %v612 = vunpack.c.h.b16 %v87
  %v613 = vunpack.c.l.b16 %v88
  %v614 = vunpack.c.h.b16 %v88
  %v615 = vunpack.c.l.b16 %v89
  %v616 = vunpack.c.h.b16 %v89
  %v617 = vunpack.c.l.b16 %v90
  %v618 = vunpack.c.h.b16 %v90
  %v619 = vunpack.c.l.b16 %v91
  %v620 = vunpack.c.h.b16 %v91
  %v621 = vunpack.c.l.b16 %v92
  %v622 = vunpack.c.h.b16 %v92
  %v623 = vunpack.c.l.b16 %v93
  %v624 = vunpack.c.h.b16 %v93
  %v625 = vunpack.c.l.b16 %v94
  %v626 = vunpack.c.h.b16 %v94
  %v627 = vunpack.c.l.b16 %v95
  %v628 = vunpack.c.h.b16 %v95
  %v629 = vunpack.c.l.b16 %v96
  %v630 = vunpack.c.h.b16 %v96
  %v631 = vunpack.c.l.b16 %v97
  %v632 = vunpack.c.h.b16 %v97
  %v633 = vunpack.c.l.b16 %v98
  %v634 = vunpack.c.h.b16 %v98
  %v635 = vunpack.c.l.b16 %v99
  %v636 = vunpack.c.h.b16 %v99
  %v637 = vunpack.c.l.b16 %v100
  %v638 = vunpack.c.h.b16 %v100
  %v639 = vunpack.c.l.b16 %v101
  %v640 = vunpack.c.h.b16 %v101
  %v641 = vunpack.c.l.b16 %v102
  %v642 = vunpack.c.h.b16 %v102
  %v643 = vunpack.c.l.b16 %v103
  %v644 = vunpack.c.h.b16 %v103
  %v645 = vunpack.c.l.b16 %v104
  %v646 = vunpack.c.h.b16 %v104
  %v647 = vunpack.c.l.b16 %v105
  %v648 = vunpack.c.h.b16 %v105
  %v649 = vunpack.c.l.b16 %v106
  %v650 = vunpack.c.h.b16 %v106
  %v651 = vunpack.c.l.b16 %v107
  %v652 = vunpack.c.h.b16 %v107
  %v653 = vunpack.c.l.b16 %v108
  %v654 = vunpack.c.h.b16 %v108
  %v655 = vunpack.c.l.b16 %v109
  %v656 = vunpack.c.h.b16 %v109
  %v657 = vunpack.c.l.b16 %v110
  %v658 = vunpack.c.h.b16 %v110
  %v659 = vunpack.c.l.b16 %v111
  %v660 = vunpack.c.h.b16 %v111
  %v661 = vunpack.c.l.b16 %v112
  %v662 = vunpack.c.h.b16 %v112
  %v663 = vunpack.c.l.b16 %v113
  %v664 = vunpack.c.h.b16 %v113
  %v665 = vunpack.c.l.b16 %v114
  %v666 = vunpack.c.h.b16 %v114
  %v667 = vunpack.c.l.b16 %v115
  %v668 = vunpack.c.h.b16 %v115
  %v669 = vunpack.c.l.b16 %v116
  %v670 = vunpack.c.h.b16 %v116
  %v671 = vunpack.c.l.b16 %v117
  %v672 = vunpack.c.h.b16 %v117
  %v673 = vunpack.c.l.b16 %v118
  %v674 = vunpack.c.h.b16 %v118
  %v675 = vunpack.c.l.b16 %v119
  %v676 = vunpack.c.h.b16 %v119
  %v677 = vunpack.c.l.b16 %v120
  %v678 = vunpack.c.h.b16 %v120
  %v679 = vunpack.c.l.b16 %v121
  %v680 = vunpack.c.h.b16 %v121
  %v681 = vunpack.c.l.b16 %v122
  %v682 = vunpack.c.h.b16 %v122
  %v683 = vunpack.c.l.b16 %v123
  %v684 = vunpack.c.h.b16 %v123
  %v685 = vunpack.c.l.b16 %v124
  %v686 = vunpack.c.h.b16 %v124
  %v687 = vunpack.c.l.b16 %v125
  %v688 = vunpack.c.h.b16 %v125
  %v689 = vunpack.c.l.b16 %v126
  %v690 = vunpack.c.h.b16 %v126
  %v691 = vunpack.c.l.b16 %v127
  %v692 = vunpack.c.h.b16 %v127
  %v693 = vunpack.c.l.b16 %v128
  %v694 = vunpack.c.h.b16 %v128
  %v695 = vunpack.c.l.b16 %v129
  %v696 = vunpack.c.h.b16 %v129
  %v697 = vpack.c.b16 %v487, %v473
  %v698 = vpack.c.b16 %v488, %v474
  %v699 = vpack.c.b16 %v489, %v475
  %v700 = vpack.c.b16 %v490, %v476
  %v701 = vpack.c.b16 %v491, %v477
  %v702 = vpack.c.b16 %v492, %v478
  %v703 = vpack.c.b16 %v493, %v479
  %v704 = vpack.c.b16 %v494, %v480
  %v705 = vpack.c.b16 %v495, %v481
  %v706 = vpack.c.b16 %v496, %v482
  %v707 = vpack.c.b16 %v497, %v483
  %v708 = vpack.c.b16 %v498, %v484
  %v709 = vpack.c.b16 %v499, %v485
  %v710 = vpack.c.b16 %v500, %v486
  %v711 = vpack.c.b16 %v515, %v501
  %v712 = vpack.c.b16 %v516, %v502
  %v713 = vpack.c.b16 %v517, %v503
  %v714 = vpack.c.b16 %v518, %v504
  %v715 = vpack.c.b16 %v519, %v505
  %v716 = vpack.c.b16 %v520, %v506
  %v717 = vpack.c.b16 %v521, %v507
  %v718 = vpack.c.b16 %v522, %v508
  %v719 = vpack.c.b16 %v523, %v509
  %v720 = vpack.c.b16 %v524, %v510
  %v721 = vpack.c.b16 %v525, %v511
  %v722 = vpack.c.b16 %v526, %v512
  %v723 = vpack.c.b16 %v527, %v513
  %v724 = vpack.c.b16 %v528, %v514
  %v725 = vpack.c.b16 %v543, %v529
  %v726 = vpack.c.b16 %v544, %v530
  %v727 = vpack.c.b16 %v545, %v531
  %v728 = vpack.c.b16 %v546, %v532
  %v729 = vpack.c.b16 %v547, %v533
  %v730 = vpack.c.b16 %v548, %v534
  %v731 = vpack.c.b16 %v549, %v535
  %v732 = vpack.c.b16 %v550, %v536
  %v733 = vpack.c.b16 %v551, %v537
  %v734 = vpack.c.b16 %v552, %v538
  %v735 = vpack.c.b16 %v553, %v539
  %v736 = vpack.c.b16 %v554, %v540
  %v737 = vpack.c.b16 %v555, %v541
  %v738 = vpack.c.b16 %v556, %v542
  %v739 = vpack.c.b16 %v571, %v557
  %v740 = vpack.c.b16 %v572, %v558
  %v741 = vpack.c.b16 %v573, %v559
  %v742 = vpack.c.b16 %v574, %v560
  %v743 = vpack.c.b16 %v575, %v561
  %v744 = vpack.c.b16 %v576, %v562
  %v745 = vpack.c.b16 %v577, %v563
  %v746 = vpack.c.b16 %v578, %v564
  %v747 = vpack.c.b16 %v579, %v565
  %v748 = vpack.c.b16 %v580, %v566
  %v749 = vpack.c.b16 %v581, %v567
  %v750 = vpack.c.b16 %v582, %v568
  %v751 = vpack.c.b16 %v583, %v569
  %v752 = vpack.c.b16 %v584, %v570
  %v753 = vpack.c.b16 %v599, %v585
  %v754 = vpack.c.b16 %v600, %v586
  %v755 = vpack.c.b16 %v601, %v587
  %v756 = vpack.c.b16 %v602, %v588
  %v757 = vpack.c.b16 %v603, %v589
  %v758 = vpack.c.b16 %v604, %v590
  %v759 = vpack.c.b16 %v605, %v591
  %v760 = vpack.c.b16 %v606, %v592
  %v761 = vpack.c.b16 %v607, %v593
  %v762 = vpack.c.b16 %v608, %v594
  %v763 = vpack.c.b16 %v609, %v595
  %v764 = vpack.c.b16 %v610, %v596
  %v765 = vpack.c.b16 %v611, %v597
  %v766 = vpack.c.b16 %v612, %v598
  %v767 = vpack.c.b16 %v627, %v613
  %v768 = vpack.c.b16 %v628, %v614
  %v769 = vpack.c.b16 %v629, %v615
  %v770 = vpack.c.b16 %v630, %v616
  %v771 = vpack.c.b16 %v631, %v617
  %v772 = vpack.c.b16 %v632, %v618
  %v773 = vpack.c.b16 %v633, %v619
  %v774 = vpack.c.b16 %v634, %v620
  %v775 = vpack.c.b16 %v635, %v621
  %v776 = vpack.c.b16 %v636, %v622
  %v777 = vpack.c.b16 %v637, %v623
  %v778 = vpack.c.b16 %v638, %v624
  %v779 = vpack.c.b16 %v639, %v625
  %v780 = vpack.c.b16 %v640, %v626
  %v781 = vpack.c.b16 %v655, %v641
  %v782 = vpack.c.b16 %v656, %v642
  %v783 = vpack.c.b16 %v657, %v643
  %v784 = vpack.c.b16 %v658, %v644
  %v785 = vpack.c.b16 %v659, %v645
  %v786 = vpack.c.b16 %v660, %v646
  %v787 = vpack.c.b16 %v661, %v647
  %v788 = vpack.c.b16 %v662, %v648
  %v789 = vpack.c.b16 %v663, %v649
  %v790 = vpack.c.b16 %v664, %v650
  %v791 = vpack.c.b16 %v665, %v651
  %v792 = vpack.c.b16 %v666, %v652
  %v793 = vpack.c.b16 %v667, %v653
  %v794 = vpack.c.b16 %v668, %v654
  %v795 = vpack.c.b16 %v683, %v669
  %v796 = vpack.c.b16 %v684, %v670
  %v797 = vpack.c.b16 %v685, %v671
  %v798 = vpack.c.b16 %v686, %v672
  %v799 = vpack.c.b16 %v687, %v673
  %v800 = vpack.c.b16 %v688, %v674
  %v801 = vpack.c.b16 %v689, %v675
  %v802 = vpack.c.b16 %v690, %v676
  %v803 = vpack.c.b16 %v691, %v677
  %v804 = vpack.c.b16 %v692, %v678
  %v805 = vpack.c.b16 %v693, %v679
  %v806 = vpack.c.b16 %v694, %v680
  %v807 = vpack.c.b16 %v695, %v681
  %v808 = vpack.c.b16 %v696, %v682
  %v1145 = vunpack.c.l.b16 %v130
  %v1146 = vunpack.c.l.b16 %v131
  %v1147 = vunpack.c.l.b16 %v132
  %v1148 = vunpack.c.l.b16 %v133
  %v1149 = vunpack.c.l.b16 %v134
  %v1150 = vunpack.c.l.b16 %v135
  %v1151 = vunpack.c.l.b16 %v136
  %v1152 = vunpack.c.l.b16 %v137
  %v1153 = vunpack.c.l.b16 %v138
  %v1154 = vunpack.c.l.b16 %v139
  %v1155 = vunpack.c.l.b16 %v140
  %v1156 = vunpack.c.l.b16 %v141
  %v1157 = vunpack.c.l.b16 %v142
  %v1158 = vunpack.c.l.b16 %v143
  %v1159 = vunpack.c.l.b16 %v144
  %v1160 = vunpack.c.l.b16 %v145
  %v1161 = vunpack.c.l.b16 %v146
  %v1162 = vunpack.c.l.b16 %v147
  %v1163 = vunpack.c.l.b16 %v148
  %v1164 = vunpack.c.l.b16 %v149
  %v1165 = vunpack.c.l.b16 %v150
  %v1166 = vunpack.c.l.b16 %v151
  %v1167 = vunpack.c.l.b16 %v152
  %v1168 = vunpack.c.l.b16 %v153
  %v1169 = vunpack.c.l.b16 %v154
  %v1170 = vunpack.c.l.b16 %v155
  %v1171 = vunpack.c.l.b16 %v156
  %v1172 = vunpack.c.l.b16 %v157
  %v1173 = vunpack.c.l.b16 %v158
  %v1174 = vunpack.c.l.b16 %v159
  %v1175 = vunpack.c.l.b16 %v160
  %v1176 = vunpack.c.l.b16 %v161
  %v1177 = vunpack.c.l.b16 %v162
  %v1178 = vunpack.c.l.b16 %v163
  %v1179 = vunpack.c.l.b16 %v164
  %v1180 = vunpack.c.l.b16 %v165
  %v1181 = vunpack.c.l.b16 %v166
  %v1182 = vunpack.c.l.b16 %v167
  %v1183 = vunpack.c.l.b16 %v168
  %v1184 = vunpack.c.l.b16 %v169
  %v1185 = vunpack.c.l.b16 %v170
  %v1186 = vunpack.c.l.b16 %v171
  %v1187 = vunpack.c.l.b16 %v172
  %v1188 = vunpack.c.l.b16 %v173
  %v1189 = vunpack.c.l.b16 %v174
  %v1190 = vunpack.c.l.b16 %v175
  %v1191 = vunpack.c.l.b16 %v176
  %v1192 = vunpack.c.l.b16 %v177
  %v1193 = vunpack.c.l.b16 %v178
  %v1194 = vunpack.c.l.b16 %v179
  %v1195 = vunpack.c.l.b16 %v180
  %v1196 = vunpack.c.l.b16 %v181
  %v1197 = vunpack.c.l.b16 %v182
  %v1198 = vunpack.c.l.b16 %v183
  %v1199 = vunpack.c.l.b16 %v184
  %v1200 = vunpack.c.l.b16 %v185
  %v1201 = vunpack.c.l.b16 %v186
  %v1202 = vunpack.c.l.b16 %v187
  %v1203 = vunpack.c.l.b16 %v188
  %v1204 = vunpack.c.l.b16 %v189
  %v1205 = vunpack.c.l.b16 %v190
  %v1206 = vunpack.c.l.b16 %v191
  %v1207 = vunpack.c.l.b16 %v192
  %v1208 = vunpack.c.l.b16 %v193
  %v1209 = vunpack.c.l.b16 %v194
  %v1210 = vunpack.c.l.b16 %v195
  %v1211 = vunpack.c.l.b16 %v196
  %v1212 = vunpack.c.l.b16 %v197
  %v1213 = vunpack.c.l.b16 %v198
  %v1214 = vunpack.c.l.b16 %v199
  %v1215 = vunpack.c.l.b16 %v200
  %v1216 = vunpack.c.l.b16 %v201
  %v1217 = vunpack.c.l.b16 %v202
  %v1218 = vunpack.c.l.b16 %v203
  %v1219 = vunpack.c.l.b16 %v204
  %v1220 = vunpack.c.l.b16 %v205
  %v1221 = vunpack.c.l.b16 %v206
  %v1222 = vunpack.c.l.b16 %v207
  %v1223 = vunpack.c.l.b16 %v208
  %v1224 = vunpack.c.l.b16 %v209
  %v1225 = vunpack.c.l.b16 %v210
  %v1226 = vunpack.c.l.b16 %v211
  %v1227 = vunpack.c.l.b16 %v212
  %v1228 = vunpack.c.l.b16 %v213
  %v1229 = vunpack.c.l.b16 %v214
  %v1230 = vunpack.c.l.b16 %v215
  %v1231 = vunpack.c.l.b16 %v216
  %v1232 = vunpack.c.l.b16 %v217
  %v1233 = vunpack.c.l.b16 %v218
  %v1234 = vunpack.c.l.b16 %v219
  %v1235 = vunpack.c.l.b16 %v220
  %v1236 = vunpack.c.l.b16 %v221
  %v1237 = vunpack.c.l.b16 %v222
  %v1238 = vunpack.c.l.b16 %v223
  %v1239 = vunpack.c.l.b16 %v224
  %v1240 = vunpack.c.l.b16 %v225
  %v1241 = vunpack.c.l.b16 %v226
  %v1242 = vunpack.c.l.b16 %v227
  %v1243 = vunpack.c.l.b16 %v228
  %v1244 = vunpack.c.l.b16 %v229
  %v1245 = vunpack.c.l.b16 %v230
  %v1246 = vunpack.c.l.b16 %v231
  %v1247 = vunpack.c.l.b16 %v232
  %v1248 = vunpack.c.l.b16 %v233
  %v1249 = vunpack.c.l.b16 %v234
  %v1250 = vunpack.c.l.b16 %v235
  %v1251 = vunpack.c.l.b16 %v236
  %v1252 = vunpack.c.l.b16 %v237
  %v1253 = vunpack.c.l.b16 %v238
  %v1254 = vunpack.c.l.b16 %v239
  %v1255 = vunpack.c.l.b16 %v240
  %v1256 = vunpack.c.l.b16 %v241
  %v1257 = vunpack.c.l.b16 %v242
  %v1258 = vunpack.c.l.b16 %v243
  %v1259 = vunpack.c.l.b16 %v244
  %v1260 = vunpack.c.l.b16 %v245
  %v1261 = vunpack.c.l.b16 %v246
  %v1262 = vunpack.c.l.b16 %v247
  %v1263 = vunpack.c.l.b16 %v248
  %v1264 = vunpack.c.l.b16 %v249
  %v1265 = vunpack.c.l.b16 %v250
  %v1266 = vunpack.c.l.b16 %v251
  %v1267 = vunpack.c.l.b16 %v252
  %v1268 = vunpack.c.l.b16 %v253
  %v1269 = vunpack.c.l.b16 %v254
  %v1270 = vunpack.c.l.b16 %v255
  %v1271 = vunpack.c.l.b16 %v256
  %v1272 = vunpack.c.l.b16 %v257
  %v1273 = vunpack.c.l.b16 %v258
  %v1274 = vunpack.c.l.b16 %v259
  %v1275 = vunpack.c.l.b16 %v260
  %v1276 = vunpack.c.l.b16 %v261
  %v1277 = vunpack.c.l.b16 %v262
  %v1278 = vunpack.c.l.b16 %v263
  %v1279 = vunpack.c.l.b16 %v264
  %v1280 = vunpack.c.l.b16 %v265
  %v1281 = vunpack.c.l.b16 %v266
  %v1282 = vunpack.c.l.b16 %v267
  %v1283 = vunpack.c.l.b16 %v268
  %v1284 = vunpack.c.l.b16 %v269
  %v1285 = vunpack.c.l.b16 %v270
  %v1286 = vunpack.c.l.b16 %v271
  %v1287 = vunpack.c.l.b16 %v272
  %v1288 = vunpack.c.l.b16 %v273
  %v1289 = vunpack.c.l.b16 %v274
  %v1290 = vunpack.c.l.b16 %v275
  %v1291 = vunpack.c.l.b16 %v276
  %v1292 = vunpack.c.l.b16 %v277
  %v1293 = vunpack.c.l.b16 %v278
  %v1294 = vunpack.c.l.b16 %v279
  %v1295 = vunpack.c.l.b16 %v280
  %v1296 = vunpack.c.l.b16 %v281
  %v1297 = vunpack.c.l.b16 %v282
  %v1298 = vunpack.c.l.b16 %v283
  %v1299 = vunpack.c.l.b16 %v284
  %v1300 = vunpack.c.l.b16 %v285
  %v1301 = vunpack.c.l.b16 %v286
  %v1302 = vunpack.c.l.b16 %v287
  %v1303 = vunpack.c.l.b16 %v288
  %v1304 = vunpack.c.l.b16 %v289
  %v1305 = vunpack.c.l.b16 %v290
  %v1306 = vunpack.c.l.b16 %v291
  %v1307 = vunpack.c.l.b16 %v292
  %v1308 = vunpack.c.l.b16 %v293
  %v1309 = vunpack.c.l.b16 %v294
  %v1310 = vunpack.c.l.b16 %v295
  %v1311 = vunpack.c.l.b16 %v296
  %v1312 = vunpack.c.l.b16 %v297
  %v1313 = vunpack.c.l.b16 %v298
  %v1314 = vunpack.c.l.b16 %v299
  %v1315 = vunpack.c.l.b16 %v300
  %v1316 = vunpack.c.l.b16 %v301
  %v1317 = vunpack.c.l.b16 %v302
  %v1318 = vunpack.c.l.b16 %v303
  %v1319 = vunpack.c.l.b16 %v304
  %v1320 = vunpack.c.l.b16 %v305
  %v1321 = vunpack.c.l.b16 %v306
  %v1322 = vunpack.c.l.b16 %v307
  %v1323 = vunpack.c.l.b16 %v308
  %v1324 = vunpack.c.l.b16 %v309
  %v1325 = vunpack.c.l.b16 %v310
  %v1326 = vunpack.c.l.b16 %v311
  %v1327 = vunpack.c.l.b16 %v312
  %v1328 = vunpack.c.l.b16 %v313
  %v1329 = vunpack.c.l.b16 %v314
  %v1330 = vunpack.c.l.b16 %v315
  %v1331 = vunpack.c.l.b16 %v316
  %v1332 = vunpack.c.l.b16 %v317
  %v1333 = vunpack.c.l.b16 %v318
  %v1334 = vunpack.c.l.b16 %v319
  %v1335 = vunpack.c.l.b16 %v320
  %v1336 = vunpack.c.l.b16 %v321
  %v1337 = vunpack.c.l.b16 %v322
  %v1338 = vunpack.c.l.b16 %v323
  %v1339 = vunpack.c.l.b16 %v324
  %v1340 = vunpack.c.l.b16 %v325
  %v1341 = vunpack.c.l.b16 %v326
  %v1342 = vunpack.c.l.b16 %v327
  %v1343 = vunpack.c.l.b16 %v328
  %v1344 = vunpack.c.l.b16 %v329
  %v1345 = vunpack.c.l.b16 %v330
  %v1346 = vunpack.c.l.b16 %v331
  %v1347 = vunpack.c.l.b16 %v332
  %v1348 = vunpack.c.l.b16 %v333
  %v1349 = vunpack.c.l.b16 %v334
  %v1350 = vunpack.c.l.b16 %v335
  %v1351 = vunpack.c.l.b16 %v336
  %v1352 = vunpack.c.l.b16 %v337
  %v1353 = vunpack.c.l.b16 %v338
  %v1354 = vunpack.c.l.b16 %v339
  %v1355 = vunpack.c.l.b16 %v340
  %v1356 = vunpack.c.l.b16 %v341
  %v1357 = vunpack.c.l.b16 %v342
  %v1358 = vunpack.c.l.b16 %v343
  %v1359 = vunpack.c.l.b16 %v344
  %v1360 = vunpack.c.l.b16 %v345
  %v1361 = vunpack.c.l.b16 %v346
  %v1362 = vunpack.c.l.b16 %v347
  %v1363 = vunpack.c.l.b16 %v348
  %v1364 = vunpack.c.l.b16 %v349
  %v1365 = vunpack.c.l.b16 %v350
  %v1366 = vunpack.c.l.b16 %v351
  %v1367 = vunpack.c.l.b16 %v352
  %v1368 = vunpack.c.l.b16 %v353
  %v1369 = vpack.c.b16 %v1146, %v1145
  %v1370 = vpack.c.b16 %v1148, %v1147
  %v1371 = vpack.c.b16 %v1150, %v1149
  %v1372 = vpack.c.b16 %v1152, %v1151
  %v1373 = vpack.c.b16 %v1154, %v1153
  %v1374 = vpack.c.b16 %v1156, %v1155
  %v1375 = vpack.c.b16 %v1158, %v1157
  %v1376 = vpack.c.b16 %v1160, %v1159
  %v1377 = vpack.c.b16 %v1162, %v1161
  %v1378 = vpack.c.b16 %v1164, %v1163
  %v1379 = vpack.c.b16 %v1166, %v1165
  %v1380 = vpack.c.b16 %v1168, %v1167
  %v1381 = vpack.c.b16 %v1170, %v1169
  %v1382 = vpack.c.b16 %v1172, %v1171
  %v1383 = vpack.c.b16 %v1174, %v1173
  %v1384 = vpack.c.b16 %v1176, %v1175
  %v1385 = vpack.c.b16 %v1178, %v1177
  %v1386 = vpack.c.b16 %v1180, %v1179
  %v1387 = vpack.c.b16 %v1182, %v1181
  %v1388 = vpack.c.b16 %v1184, %v1183
  %v1389 = vpack.c.b16 %v1186, %v1185
  %v1390 = vpack.c.b16 %v1188, %v1187
  %v1391 = vpack.c.b16 %v1190, %v1189
  %v1392 = vpack.c.b16 %v1192, %v1191
  %v1393 = vpack.c.b16 %v1194, %v1193
  %v1394 = vpack.c.b16 %v1196, %v1195
  %v1395 = vpack.c.b16 %v1198, %v1197
  %v1396 = vpack.c.b16 %v1200, %v1199
  %v1397 = vpack.c.b16 %v1202, %v1201
  %v1398 = vpack.c.b16 %v1204, %v1203
  %v1399 = vpack.c.b16 %v1206, %v1205
  %v1400 = vpack.c.b16 %v1208, %v1207
  %v1401 = vpack.c.b16 %v1210, %v1209
  %v1402 = vpack.c.b16 %v1212, %v1211
  %v1403 = vpack.c.b16 %v1214, %v1213
  %v1404 = vpack.c.b16 %v1216, %v1215
  %v1405 = vpack.c.b16 %v1218, %v1217
  %v1406 = vpack.c.b16 %v1220, %v1219
  %v1407 = vpack.c.b16 %v1222, %v1221
  %v1408 = vpack.c.b16 %v1224, %v1223
  %v1409 = vpack.c.b16 %v1226, %v1225
  %v1410 = vpack.c.b16 %v1228, %v1227
  %v1411 = vpack.c.b16 %v1230, %v1229
  %v1412 = vpack.c.b16 %v1232, %v1231
  %v1413 = vpack.c.b16 %v1234, %v1233
  %v1414 = vpack.c.b16 %v1236, %v1235
  %v1415 = vpack.c.b16 %v1238, %v1237
  %v1416 = vpack.c.b16 %v1240, %v1239
  %v1417 = vpack.c.b16 %v1242, %v1241
  %v1418 = vpack.c.b16 %v1244, %v1243
  %v1419 = vpack.c.b16 %v1246, %v1245
  %v1420 = vpack.c.b16 %v1248, %v1247
  %v1421 = vpack.c.b16 %v1250, %v1249
  %v1422 = vpack.c.b16 %v1252, %v1251
  %v1423 = vpack.c.b16 %v1254, %v1253
  %v1424 = vpack.c.b16 %v1256, %v1255
  %v1425 = vpack.c.b16 %v1258, %v1257
  %v1426 = vpack.c.b16 %v1260, %v1259
  %v1427 = vpack.c.b16 %v1262, %v1261
  %v1428 = vpack.c.b16 %v1264, %v1263
  %v1429 = vpack.c.b16 %v1266, %v1265
  %v1430 = vpack.c.b16 %v1268, %v1267
  %v1431 = vpack.c.b16 %v1270, %v1269
  %v1432 = vpack.c.b16 %v1272, %v1271
  %v1433 = vpack.c.b16 %v1274, %v1273
  %v1434 = vpack.c.b16 %v1276, %v1275
  %v1435 = vpack.c.b16 %v1278, %v1277
  %v1436 = vpack.c.b16 %v1280, %v1279
  %v1437 = vpack.c.b16 %v1282, %v1281
  %v1438 = vpack.c.b16 %v1284, %v1283
  %v1439 = vpack.c.b16 %v1286, %v1285
  %v1440 = vpack.c.b16 %v1288, %v1287
  %v1441 = vpack.c.b16 %v1290, %v1289
  %v1442 = vpack.c.b16 %v1292, %v1291
  %v1443 = vpack.c.b16 %v1294, %v1293
  %v1444 = vpack.c.b16 %v1296, %v1295
  %v1445 = vpack.c.b16 %v1298, %v1297
  %v1446 = vpack.c.b16 %v1300, %v1299
  %v1447 = vpack.c.b16 %v1302, %v1301
  %v1448 = vpack.c.b16 %v1304, %v1303
  %v1449 = vpack.c.b16 %v1306, %v1305
  %v1450 = vpack.c.b16 %v1308, %v1307
  %v1451 = vpack.c.b16 %v1310, %v1309
  %v1452 = vpack.c.b16 %v1312, %v1311
  %v1453 = vpack.c.b16 %v1314, %v1313
  %v1454 = vpack.c.b16 %v1316, %v1315
  %v1455 = vpack.c.b16 %v1318, %v1317
  %v1456 = vpack.c.b16 %v1320, %v1319
  %v1457 = vpack.c.b16 %v1322, %v1321
  %v1458 = vpack.c.b16 %v1324, %v1323
  %v1459 = vpack.c.b16 %v1326, %v1325
  %v1460 = vpack.c.b16 %v1328, %v1327
  %v1461 = vpack.c.b16 %v1330, %v1329
  %v1462 = vpack.c.b16 %v1332, %v1331
  %v1463 = vpack.c.b16 %v1334, %v1333
  %v1464 = vpack.c.b16 %v1336, %v1335
  %v1465 = vpack.c.b16 %v1338, %v1337
  %v1466 = vpack.c.b16 %v1340, %v1339
  %v1467 = vpack.c.b16 %v1342, %v1341
  %v1468 = vpack.c.b16 %v1344, %v1343
  %v1469 = vpack.c.b16 %v1346, %v1345
  %v1470 = vpack.c.b16 %v1348, %v1347
  %v1471 = vpack.c.b16 %v1350, %v1349
  %v1472 = vpack.c.b16 %v1352, %v1351
  %v1473 = vpack.c.b16 %v1354, %v1353
  %v1474 = vpack.c.b16 %v1356, %v1355
  %v1475 = vpack.c.b16 %v1358, %v1357
  %v1476 = vpack.c.b16 %v1360, %v1359
  %v1477 = vpack.c.b16 %v1362, %v1361
  %v1478 = vpack.c.b16 %v1364, %v1363
  %v1479 = vpack.c.b16 %v1366, %v1365
  %v1480 = vpack.c.b16 %v1368, %v1367
  %1593 = vmatprep.subr.bf16.mxu0 0
  %1594 = vmatpush1.bf16.msra.mxu0 %v1369
  %1595 = vmatprep.subr.bf16.mxu0 0
  %1596 = vmatpush1.bf16.msra.mxu0 %v1370
  %1597 = vmatprep.subr.bf16.mxu0 0
  %1598 = vmatpush1.bf16.msra.mxu0 %v1371
  %1599 = vmatprep.subr.bf16.mxu0 0
  %1600 = vmatpush1.bf16.msra.mxu0 %v1372
  %1601 = vmatprep.subr.bf16.mxu0 0
  %1602 = vmatpush1.bf16.msra.mxu0 %v1373
  %1603 = vmatprep.subr.bf16.mxu0 0
  %1604 = vmatpush1.bf16.msra.mxu0 %v1374
  %1605 = vmatprep.subr.bf16.mxu0 0
  %1606 = vmatpush1.bf16.msra.mxu0 %v1375
  %1607 = vmatprep.subr.bf16.mxu0 0
  %1608 = vmatpush1.bf16.msra.mxu0 %v1376
  %1609 = vmatprep.subr.bf16.mxu0 0
  %1610 = vmatpush1.bf16.msra.mxu0 %v1377
  %1611 = vmatprep.subr.bf16.mxu0 0
  %1612 = vmatpush1.bf16.msra.mxu0 %v1378
  %1613 = vmatprep.subr.bf16.mxu0 0
  %1614 = vmatpush1.bf16.msra.mxu0 %v1379
  %1615 = vmatprep.subr.bf16.mxu0 0
  %1616 = vmatpush1.bf16.msra.mxu0 %v1380
  %1617 = vmatprep.subr.bf16.mxu0 0
  %1618 = vmatpush1.bf16.msra.mxu0 %v1381
  %1619 = vmatprep.subr.bf16.mxu0 0
  %1620 = vmatpush1.bf16.msra.mxu0 %v1382
  %1621 = vmatprep.subr.bf16.mxu0 0
  %1622 = vmatpush1.bf16.msra.mxu0 %v1383
  %1623 = vmatprep.subr.bf16.mxu0 0
  %1624 = vmatpush1.bf16.msra.mxu0 %v1384
  %1625 = vmatprep.mubr.bf16.mxu0 %v698
  %1626 = vmatmul.mubr.bf16.gmra.mrb[0].mxu0 %v697
  %v1627 = vpop.f32.mrb[0].mxu0
  %v1628 = vadd.f32 %v359, %v1627
  %v1629 = vpop.f32.mrb[0].mxu0
  %v1630 = vpop.f32.mrb[0].mxu0
  %v1631 = vadd.f32 %v359, %v1630
  %v1632 = vpop.f32.mrb[0].mxu0
  %1633 = vmatprep.mubr.bf16.mxu0 %v712
  %1634 = vmatmul.mubr.bf16.gmra.mrb[0].mxu0 %v711
  %v1635 = vpop.f32.mrb[0].mxu0
  %v1636 = vadd.f32 %v359, %v1635
  %v1637 = vpop.f32.mrb[0].mxu0
  %v1638 = vpop.f32.mrb[0].mxu0
  %v1639 = vadd.f32 %v359, %v1638
  %v1640 = vpop.f32.mrb[0].mxu0
  %1641 = vmatprep.mubr.bf16.mxu0 %v726
  %1642 = vmatmul.mubr.bf16.gmra.mrb[0].mxu0 %v725
  %v1643 = vpop.f32.mrb[0].mxu0
  %v1644 = vadd.f32 %v359, %v1643
  %v1645 = vpop.f32.mrb[0].mxu0
  %v1646 = vpop.f32.mrb[0].mxu0
  %v1647 = vadd.f32 %v359, %v1646
  %v1648 = vpop.f32.mrb[0].mxu0
  %1649 = vmatprep.mubr.bf16.mxu0 %v740
  %1650 = vmatmul.mubr.bf16.gmra.mrb[0].mxu0 %v739
  %v1651 = vpop.f32.mrb[0].mxu0
  %v1652 = vadd.f32 %v359, %v1651
  %v1653 = vpop.f32.mrb[0].mxu0
  %v1654 = vpop.f32.mrb[0].mxu0
  %v1655 = vadd.f32 %v359, %v1654
  %v1656 = vpop.f32.mrb[0].mxu0
  %1657 = vmatprep.mubr.bf16.mxu0 %v754
  %1658 = vmatmul.mubr.bf16.gmra.mrb[0].mxu0 %v753
  %v1659 = vpop.f32.mrb[0].mxu0
  %v1660 = vadd.f32 %v359, %v1659
  %v1661 = vpop.f32.mrb[0].mxu0
  %v1662 = vpop.f32.mrb[0].mxu0
  %v1663 = vadd.f32 %v359, %v1662
  %v1664 = vpop.f32.mrb[0].mxu0
  %1665 = vmatprep.mubr.bf16.mxu0 %v768
  %1666 = vmatmul.mubr.bf16.gmra.mrb[0].mxu0 %v767
  %v1667 = vpop.f32.mrb[0].mxu0
  %v1668 = vadd.f32 %v359, %v1667
  %v1669 = vpop.f32.mrb[0].mxu0
  %v1670 = vpop.f32.mrb[0].mxu0
  %v1671 = vadd.f32 %v359, %v1670
  %v1672 = vpop.f32.mrb[0].mxu0
  %1673 = vmatprep.mubr.bf16.mxu0 %v782
  %1674 = vmatmul.mubr.bf16.gmra.mrb[0].mxu0 %v781
  %v1675 = vpop.f32.mrb[0].mxu0
  %v1676 = vadd.f32 %v359, %v1675
  %v1677 = vpop.f32.mrb[0].mxu0
  %v1678 = vpop.f32.mrb[0].mxu0
  %v1679 = vadd.f32 %v359, %v1678
  %v1680 = vpop.f32.mrb[0].mxu0
  %1681 = vmatprep.mubr.bf16.mxu0 %v796
  %1682 = vmatmul.mubr.bf16.gmra.mrb[0].mxu0 %v795
  %v1683 = vpop.f32.mrb[0].mxu0
  %v1684 = vadd.f32 %v359, %v1683
  %v1685 = vpop.f32.mrb[0].mxu0
  %v1686 = vpop.f32.mrb[0].mxu0
  %v1687 = vadd.f32 %v359, %v1686
  %v1688 = vpop.f32.mrb[0].mxu0
  %1689 = vdwg.mxu0
  %1690 = vmatprep.subr.bf16.mxu0 0
  %1691 = vmatpush1.bf16.msra.mxu0 %v1385
  %1692 = vmatprep.subr.bf16.mxu0 0
  %1693 = vmatpush1.bf16.msra.mxu0 %v1386
  %1694 = vmatprep.subr.bf16.mxu0 0
  %1695 = vmatpush1.bf16.msra.mxu0 %v1387
  %1696 = vmatprep.subr.bf16.mxu0 0
  %1697 = vmatpush1.bf16.msra.mxu0 %v1388
  %1698 = vmatprep.subr.bf16.mxu0 0
  %1699 = vmatpush1.bf16.msra.mxu0 %v1389
  %1700 = vmatprep.subr.bf16.mxu0 0
  %1701 = vmatpush1.bf16.msra.mxu0 %v1390
  %1702 = vmatprep.subr.bf16.mxu0 0
  %1703 = vmatpush1.bf16.msra.mxu0 %v1391
  %1704 = vmatprep.subr.bf16.mxu0 0
  %1705 = vmatpush1.bf16.msra.mxu0 %v1392
  %1706 = vmatprep.subr.bf16.mxu0 0
  %1707 = vmatpush1.bf16.msra.mxu0 %v1393
  %1708 = vmatprep.subr.bf16.mxu0 0
  %1709 = vmatpush1.bf16.msra.mxu0 %v1394
  %1710 = vmatprep.subr.bf16.mxu0 0
  %1711 = vmatpush1.bf16.msra.mxu0 %v1395
  %1712 = vmatprep.subr.bf16.mxu0 0
  %1713 = vmatpush1.bf16.msra.mxu0 %v1396
  %1714 = vmatprep.subr.bf16.mxu0 0
  %1715 = vmatpush1.bf16.msra.mxu0 %v1397
  %1716 = vmatprep.subr.bf16.mxu0 0
  %1717 = vmatpush1.bf16.msra.mxu0 %v1398
  %1718 = vmatprep.subr.bf16.mxu0 0
  %1719 = vmatpush1.bf16.msra.mxu0 %v1399
  %1720 = vmatprep.subr.bf16.mxu0 0
  %1721 = vmatpush1.bf16.msra.mxu0 %v1400
  %1722 = vmatprep.mubr.bf16.mxu0 %v700
  %1723 = vmatmul.mubr.bf16.gmra.mrb[0].mxu0 %v699
  %v1724 = vpop.f32.mrb[0].mxu0
  %v1725 = vadd.f32 %v1628, %v1724
  %v1726 = vpop.f32.mrb[0].mxu0
  %v1727 = vpop.f32.mrb[0].mxu0
  %v1728 = vadd.f32 %v1631, %v1727
  %v1729 = vpop.f32.mrb[0].mxu0
  %1730 = vmatprep.mubr.bf16.mxu0 %v714
  %1731 = vmatmul.mubr.bf16.gmra.mrb[0].mxu0 %v713
  %v1732 = vpop.f32.mrb[0].mxu0
  %v1733 = vadd.f32 %v1636, %v1732
  %v1734 = vpop.f32.mrb[0].mxu0
  %v1735 = vpop.f32.mrb[0].mxu0
  %v1736 = vadd.f32 %v1639, %v1735
  %v1737 = vpop.f32.mrb[0].mxu0
  %1738 = vmatprep.mubr.bf16.mxu0 %v728
  %1739 = vmatmul.mubr.bf16.gmra.mrb[0].mxu0 %v727
  %v1740 = vpop.f32.mrb[0].mxu0
  %v1741 = vadd.f32 %v1644, %v1740
  %v1742 = vpop.f32.mrb[0].mxu0
  %v1743 = vpop.f32.mrb[0].mxu0
  %v1744 = vadd.f32 %v1647, %v1743
  %v1745 = vpop.f32.mrb[0].mxu0
  %1746 = vmatprep.mubr.bf16.mxu0 %v742
  %1747 = vmatmul.mubr.bf16.gmra.mrb[0].mxu0 %v741
  %v1748 = vpop.f32.mrb[0].mxu0
  %v1749 = vadd.f32 %v1652, %v1748
  %v1750 = vpop.f32.mrb[0].mxu0
  %v1751 = vpop.f32.mrb[0].mxu0
  %v1752 = vadd.f32 %v1655, %v1751
  %v1753 = vpop.f32.mrb[0].mxu0
  %1754 = vmatprep.mubr.bf16.mxu0 %v756
  %1755 = vmatmul.mubr.bf16.gmra.mrb[0].mxu0 %v755
  %v1756 = vpop.f32.mrb[0].mxu0
  %v1757 = vadd.f32 %v1660, %v1756
  %v1758 = vpop.f32.mrb[0].mxu0
  %v1759 = vpop.f32.mrb[0].mxu0
  %v1760 = vadd.f32 %v1663, %v1759
  %v1761 = vpop.f32.mrb[0].mxu0
  %1762 = vmatprep.mubr.bf16.mxu0 %v770
  %1763 = vmatmul.mubr.bf16.gmra.mrb[0].mxu0 %v769
  %v1764 = vpop.f32.mrb[0].mxu0
  %v1765 = vadd.f32 %v1668, %v1764
  %v1766 = vpop.f32.mrb[0].mxu0
  %v1767 = vpop.f32.mrb[0].mxu0
  %v1768 = vadd.f32 %v1671, %v1767
  %v1769 = vpop.f32.mrb[0].mxu0
  %1770 = vmatprep.mubr.bf16.mxu0 %v784
  %1771 = vmatmul.mubr.bf16.gmra.mrb[0].mxu0 %v783
  %v1772 = vpop.f32.mrb[0].mxu0
  %v1773 = vadd.f32 %v1676, %v1772
  %v1774 = vpop.f32.mrb[0].mxu0
  %v1775 = vpop.f32.mrb[0].mxu0
  %v1776 = vadd.f32 %v1679, %v1775
  %v1777 = vpop.f32.mrb[0].mxu0
  %1778 = vmatprep.mubr.bf16.mxu0 %v798
  %1779 = vmatmul.mubr.bf16.gmra.mrb[0].mxu0 %v797
  %v1780 = vpop.f32.mrb[0].mxu0
  %v1781 = vadd.f32 %v1684, %v1780
  %v1782 = vpop.f32.mrb[0].mxu0
  %v1783 = vpop.f32.mrb[0].mxu0
  %v1784 = vadd.f32 %v1687, %v1783
  %v1785 = vpop.f32.mrb[0].mxu0
  %1786 = vdwg.mxu0
  %1787 = vmatprep.subr.bf16.mxu0 0
  %1788 = vmatpush1.bf16.msra.mxu0 %v1401
  %1789 = vmatprep.subr.bf16.mxu0 0
  %1790 = vmatpush1.bf16.msra.mxu0 %v1402
  %1791 = vmatprep.subr.bf16.mxu0 0
  %1792 = vmatpush1.bf16.msra.mxu0 %v1403
  %1793 = vmatprep.subr.bf16.mxu0 0
  %1794 = vmatpush1.bf16.msra.mxu0 %v1404
  %1795 = vmatprep.subr.bf16.mxu0 0
  %1796 = vmatpush1.bf16.msra.mxu0 %v1405
  %1797 = vmatprep.subr.bf16.mxu0 0
  %1798 = vmatpush1.bf16.msra.mxu0 %v1406
  %1799 = vmatprep.subr.bf16.mxu0 0
  %1800 = vmatpush1.bf16.msra.mxu0 %v1407
  %1801 = vmatprep.subr.bf16.mxu0 0
  %1802 = vmatpush1.bf16.msra.mxu0 %v1408
  %1803 = vmatprep.subr.bf16.mxu0 0
  %1804 = vmatpush1.bf16.msra.mxu0 %v1409
  %1805 = vmatprep.subr.bf16.mxu0 0
  %1806 = vmatpush1.bf16.msra.mxu0 %v1410
  %1807 = vmatprep.subr.bf16.mxu0 0
  %1808 = vmatpush1.bf16.msra.mxu0 %v1411
  %1809 = vmatprep.subr.bf16.mxu0 0
  %1810 = vmatpush1.bf16.msra.mxu0 %v1412
  %1811 = vmatprep.subr.bf16.mxu0 0
  %1812 = vmatpush1.bf16.msra.mxu0 %v1413
  %1813 = vmatprep.subr.bf16.mxu0 0
  %1814 = vmatpush1.bf16.msra.mxu0 %v1414
  %1815 = vmatprep.subr.bf16.mxu0 0
  %1816 = vmatpush1.bf16.msra.mxu0 %v1415
  %1817 = vmatprep.subr.bf16.mxu0 0
  %1818 = vmatpush1.bf16.msra.mxu0 %v1416
  %1819 = vmatprep.mubr.bf16.mxu0 %v702
  %1820 = vmatmul.mubr.bf16.gmra.mrb[0].mxu0 %v701
  %v1821 = vpop.f32.mrb[0].mxu0
  %v1822 = vadd.f32 %v1725, %v1821
  %v1823 = vpop.f32.mrb[0].mxu0
  %v1824 = vpop.f32.mrb[0].mxu0
  %v1825 = vadd.f32 %v1728, %v1824
  %v1826 = vpop.f32.mrb[0].mxu0
  %1827 = vmatprep.mubr.bf16.mxu0 %v716
  %1828 = vmatmul.mubr.bf16.gmra.mrb[0].mxu0 %v715
  %v1829 = vpop.f32.mrb[0].mxu0
  %v1830 = vadd.f32 %v1733, %v1829
  %v1831 = vpop.f32.mrb[0].mxu0
  %v1832 = vpop.f32.mrb[0].mxu0
  %v1833 = vadd.f32 %v1736, %v1832
  %v1834 = vpop.f32.mrb[0].mxu0
  %1835 = vmatprep.mubr.bf16.mxu0 %v730
  %1836 = vmatmul.mubr.bf16.gmra.mrb[0].mxu0 %v729
  %v1837 = vpop.f32.mrb[0].mxu0
  %v1838 = vadd.f32 %v1741, %v1837
  %v1839 = vpop.f32.mrb[0].mxu0
  %v1840 = vpop.f32.mrb[0].mxu0
  %v1841 = vadd.f32 %v1744, %v1840
  %v1842 = vpop.f32.mrb[0].mxu0
  %1843 = vmatprep.mubr.bf16.mxu0 %v744
  %1844 = vmatmul.mubr.bf16.gmra.mrb[0].mxu0 %v743
  %v1845 = vpop.f32.mrb[0].mxu0
  %v1846 = vadd.f32 %v1749, %v1845
  %v1847 = vpop.f32.mrb[0].mxu0
  %v1848 = vpop.f32.mrb[0].mxu0
  %v1849 = vadd.f32 %v1752, %v1848
  %v1850 = vpop.f32.mrb[0].mxu0
  %1851 = vmatprep.mubr.bf16.mxu0 %v758
  %1852 = vmatmul.mubr.bf16.gmra.mrb[0].mxu0 %v757
  %v1853 = vpop.f32.mrb[0].mxu0
  %v1854 = vadd.f32 %v1757, %v1853
  %v1855 = vpop.f32.mrb[0].mxu0
  %v1856 = vpop.f32.mrb[0].mxu0
  %v1857 = vadd.f32 %v1760, %v1856
  %v1858 = vpop.f32.mrb[0].mxu0
  %1859 = vmatprep.mubr.bf16.mxu0 %v772
  %1860 = vmatmul.mubr.bf16.gmra.mrb[0].mxu0 %v771
  %v1861 = vpop.f32.mrb[0].mxu0
  %v1862 = vadd.f32 %v1765, %v1861
  %v1863 = vpop.f32.mrb[0].mxu0
  %v1864 = vpop.f32.mrb[0].mxu0
  %v1865 = vadd.f32 %v1768, %v1864
  %v1866 = vpop.f32.mrb[0].mxu0
  %1867 = vmatprep.mubr.bf16.mxu0 %v786
  %1868 = vmatmul.mubr.bf16.gmra.mrb[0].mxu0 %v785
  %v1869 = vpop.f32.mrb[0].mxu0
  %v1870 = vadd.f32 %v1773, %v1869
  %v1871 = vpop.f32.mrb[0].mxu0
  %v1872 = vpop.f32.mrb[0].mxu0
  %v1873 = vadd.f32 %v1776, %v1872
  %v1874 = vpop.f32.mrb[0].mxu0
  %1875 = vmatprep.mubr.bf16.mxu0 %v800
  %1876 = vmatmul.mubr.bf16.gmra.mrb[0].mxu0 %v799
  %v1877 = vpop.f32.mrb[0].mxu0
  %v1878 = vadd.f32 %v1781, %v1877
  %v1879 = vpop.f32.mrb[0].mxu0
  %v1880 = vpop.f32.mrb[0].mxu0
  %v1881 = vadd.f32 %v1784, %v1880
  %v1882 = vpop.f32.mrb[0].mxu0
  %1883 = vdwg.mxu0
  %1884 = vmatprep.subr.bf16.mxu0 0
  %1885 = vmatpush1.bf16.msra.mxu0 %v1417
  %1886 = vmatprep.subr.bf16.mxu0 0
  %1887 = vmatpush1.bf16.msra.mxu0 %v1418
  %1888 = vmatprep.subr.bf16.mxu0 0
  %1889 = vmatpush1.bf16.msra.mxu0 %v1419
  %1890 = vmatprep.subr.bf16.mxu0 0
  %1891 = vmatpush1.bf16.msra.mxu0 %v1420
  %1892 = vmatprep.subr.bf16.mxu0 0
  %1893 = vmatpush1.bf16.msra.mxu0 %v1421
  %1894 = vmatprep.subr.bf16.mxu0 0
  %1895 = vmatpush1.bf16.msra.mxu0 %v1422
  %1896 = vmatprep.subr.bf16.mxu0 0
  %1897 = vmatpush1.bf16.msra.mxu0 %v1423
  %1898 = vmatprep.subr.bf16.mxu0 0
  %1899 = vmatpush1.bf16.msra.mxu0 %v1424
  %1900 = vmatprep.subr.bf16.mxu0 0
  %1901 = vmatpush1.bf16.msra.mxu0 %v1425
  %1902 = vmatprep.subr.bf16.mxu0 0
  %1903 = vmatpush1.bf16.msra.mxu0 %v1426
  %1904 = vmatprep.subr.bf16.mxu0 0
  %1905 = vmatpush1.bf16.msra.mxu0 %v1427
  %1906 = vmatprep.subr.bf16.mxu0 0
  %1907 = vmatpush1.bf16.msra.mxu0 %v1428
  %1908 = vmatprep.subr.bf16.mxu0 0
  %1909 = vmatpush1.bf16.msra.mxu0 %v1429
  %1910 = vmatprep.subr.bf16.mxu0 0
  %1911 = vmatpush1.bf16.msra.mxu0 %v1430
  %1912 = vmatprep.subr.bf16.mxu0 0
  %1913 = vmatpush1.bf16.msra.mxu0 %v1431
  %1914 = vmatprep.subr.bf16.mxu0 0
  %1915 = vmatpush1.bf16.msra.mxu0 %v1432
  %1916 = vmatprep.mubr.bf16.mxu0 %v704
  %1917 = vmatmul.mubr.bf16.gmra.mrb[0].mxu0 %v703
  %v1918 = vpop.f32.mrb[0].mxu0
  %v1919 = vadd.f32 %v1822, %v1918
  %v1920 = vpop.f32.mrb[0].mxu0
  %v1921 = vpop.f32.mrb[0].mxu0
  %v1922 = vadd.f32 %v1825, %v1921
  %v1923 = vpop.f32.mrb[0].mxu0
  %1924 = vmatprep.mubr.bf16.mxu0 %v718
  %1925 = vmatmul.mubr.bf16.gmra.mrb[0].mxu0 %v717
  %v1926 = vpop.f32.mrb[0].mxu0
  %v1927 = vadd.f32 %v1830, %v1926
  %v1928 = vpop.f32.mrb[0].mxu0
  %v1929 = vpop.f32.mrb[0].mxu0
  %v1930 = vadd.f32 %v1833, %v1929
  %v1931 = vpop.f32.mrb[0].mxu0
  %1932 = vmatprep.mubr.bf16.mxu0 %v732
  %1933 = vmatmul.mubr.bf16.gmra.mrb[0].mxu0 %v731
  %v1934 = vpop.f32.mrb[0].mxu0
  %v1935 = vadd.f32 %v1838, %v1934
  %v1936 = vpop.f32.mrb[0].mxu0
  %v1937 = vpop.f32.mrb[0].mxu0
  %v1938 = vadd.f32 %v1841, %v1937
  %v1939 = vpop.f32.mrb[0].mxu0
  %1940 = vmatprep.mubr.bf16.mxu0 %v746
  %1941 = vmatmul.mubr.bf16.gmra.mrb[0].mxu0 %v745
  %v1942 = vpop.f32.mrb[0].mxu0
  %v1943 = vadd.f32 %v1846, %v1942
  %v1944 = vpop.f32.mrb[0].mxu0
  %v1945 = vpop.f32.mrb[0].mxu0
  %v1946 = vadd.f32 %v1849, %v1945
  %v1947 = vpop.f32.mrb[0].mxu0
  %1948 = vmatprep.mubr.bf16.mxu0 %v760
  %1949 = vmatmul.mubr.bf16.gmra.mrb[0].mxu0 %v759
  %v1950 = vpop.f32.mrb[0].mxu0
  %v1951 = vadd.f32 %v1854, %v1950
  %v1952 = vpop.f32.mrb[0].mxu0
  %v1953 = vpop.f32.mrb[0].mxu0
  %v1954 = vadd.f32 %v1857, %v1953
  %v1955 = vpop.f32.mrb[0].mxu0
  %1956 = vmatprep.mubr.bf16.mxu0 %v774
  %1957 = vmatmul.mubr.bf16.gmra.mrb[0].mxu0 %v773
  %v1958 = vpop.f32.mrb[0].mxu0
  %v1959 = vadd.f32 %v1862, %v1958
  %v1960 = vpop.f32.mrb[0].mxu0
  %v1961 = vpop.f32.mrb[0].mxu0
  %v1962 = vadd.f32 %v1865, %v1961
  %v1963 = vpop.f32.mrb[0].mxu0
  %1964 = vmatprep.mubr.bf16.mxu0 %v788
  %1965 = vmatmul.mubr.bf16.gmra.mrb[0].mxu0 %v787
  %v1966 = vpop.f32.mrb[0].mxu0
  %v1967 = vadd.f32 %v1870, %v1966
  %v1968 = vpop.f32.mrb[0].mxu0
  %v1969 = vpop.f32.mrb[0].mxu0
  %v1970 = vadd.f32 %v1873, %v1969
  %v1971 = vpop.f32.mrb[0].mxu0
  %1972 = vmatprep.mubr.bf16.mxu0 %v802
  %1973 = vmatmul.mubr.bf16.gmra.mrb[0].mxu0 %v801
  %v1974 = vpop.f32.mrb[0].mxu0
  %v1975 = vadd.f32 %v1878, %v1974
  %v1976 = vpop.f32.mrb[0].mxu0
  %v1977 = vpop.f32.mrb[0].mxu0
  %v1978 = vadd.f32 %v1881, %v1977
  %v1979 = vpop.f32.mrb[0].mxu0
  %1980 = vdwg.mxu0
  %1981 = vmatprep.subr.bf16.mxu0 0
  %1982 = vmatpush1.bf16.msra.mxu0 %v1433
  %1983 = vmatprep.subr.bf16.mxu0 0
  %1984 = vmatpush1.bf16.msra.mxu0 %v1434
  %1985 = vmatprep.subr.bf16.mxu0 0
  %1986 = vmatpush1.bf16.msra.mxu0 %v1435
  %1987 = vmatprep.subr.bf16.mxu0 0
  %1988 = vmatpush1.bf16.msra.mxu0 %v1436
  %1989 = vmatprep.subr.bf16.mxu0 0
  %1990 = vmatpush1.bf16.msra.mxu0 %v1437
  %1991 = vmatprep.subr.bf16.mxu0 0
  %1992 = vmatpush1.bf16.msra.mxu0 %v1438
  %1993 = vmatprep.subr.bf16.mxu0 0
  %1994 = vmatpush1.bf16.msra.mxu0 %v1439
  %1995 = vmatprep.subr.bf16.mxu0 0
  %1996 = vmatpush1.bf16.msra.mxu0 %v1440
  %1997 = vmatprep.subr.bf16.mxu0 0
  %1998 = vmatpush1.bf16.msra.mxu0 %v1441
  %1999 = vmatprep.subr.bf16.mxu0 0
  %2000 = vmatpush1.bf16.msra.mxu0 %v1442
  %2001 = vmatprep.subr.bf16.mxu0 0
  %2002 = vmatpush1.bf16.msra.mxu0 %v1443
  %2003 = vmatprep.subr.bf16.mxu0 0
  %2004 = vmatpush1.bf16.msra.mxu0 %v1444
  %2005 = vmatprep.subr.bf16.mxu0 0
  %2006 = vmatpush1.bf16.msra.mxu0 %v1445
  %2007 = vmatprep.subr.bf16.mxu0 0
  %2008 = vmatpush1.bf16.msra.mxu0 %v1446
  %2009 = vmatprep.subr.bf16.mxu0 0
  %2010 = vmatpush1.bf16.msra.mxu0 %v1447
  %2011 = vmatprep.subr.bf16.mxu0 0
  %2012 = vmatpush1.bf16.msra.mxu0 %v1448
  %2013 = vmatprep.mubr.bf16.mxu0 %v706
  %2014 = vmatmul.mubr.bf16.gmra.mrb[0].mxu0 %v705
  %v2015 = vpop.f32.mrb[0].mxu0
  %v2016 = vadd.f32 %v1919, %v2015
  %v2017 = vpop.f32.mrb[0].mxu0
  %v2018 = vpop.f32.mrb[0].mxu0
  %v2019 = vadd.f32 %v1922, %v2018
  %v2020 = vpop.f32.mrb[0].mxu0
  %2021 = vmatprep.mubr.bf16.mxu0 %v720
  %2022 = vmatmul.mubr.bf16.gmra.mrb[0].mxu0 %v719
  %v2023 = vpop.f32.mrb[0].mxu0
  %v2024 = vadd.f32 %v1927, %v2023
  %v2025 = vpop.f32.mrb[0].mxu0
  %v2026 = vpop.f32.mrb[0].mxu0
  %v2027 = vadd.f32 %v1930, %v2026
  %v2028 = vpop.f32.mrb[0].mxu0
  %2029 = vmatprep.mubr.bf16.mxu0 %v734
  %2030 = vmatmul.mubr.bf16.gmra.mrb[0].mxu0 %v733
  %v2031 = vpop.f32.mrb[0].mxu0
  %v2032 = vadd.f32 %v1935, %v2031
  %v2033 = vpop.f32.mrb[0].mxu0
  %v2034 = vpop.f32.mrb[0].mxu0
  %v2035 = vadd.f32 %v1938, %v2034
  %v2036 = vpop.f32.mrb[0].mxu0
  %2037 = vmatprep.mubr.bf16.mxu0 %v748
  %2038 = vmatmul.mubr.bf16.gmra.mrb[0].mxu0 %v747
  %v2039 = vpop.f32.mrb[0].mxu0
  %v2040 = vadd.f32 %v1943, %v2039
  %v2041 = vpop.f32.mrb[0].mxu0
  %v2042 = vpop.f32.mrb[0].mxu0
  %v2043 = vadd.f32 %v1946, %v2042
  %v2044 = vpop.f32.mrb[0].mxu0
  %2045 = vmatprep.mubr.bf16.mxu0 %v762
  %2046 = vmatmul.mubr.bf16.gmra.mrb[0].mxu0 %v761
  %v2047 = vpop.f32.mrb[0].mxu0
  %v2048 = vadd.f32 %v1951, %v2047
  %v2049 = vpop.f32.mrb[0].mxu0
  %v2050 = vpop.f32.mrb[0].mxu0
  %v2051 = vadd.f32 %v1954, %v2050
  %v2052 = vpop.f32.mrb[0].mxu0
  %2053 = vmatprep.mubr.bf16.mxu0 %v776
  %2054 = vmatmul.mubr.bf16.gmra.mrb[0].mxu0 %v775
  %v2055 = vpop.f32.mrb[0].mxu0
  %v2056 = vadd.f32 %v1959, %v2055
  %v2057 = vpop.f32.mrb[0].mxu0
  %v2058 = vpop.f32.mrb[0].mxu0
  %v2059 = vadd.f32 %v1962, %v2058
  %v2060 = vpop.f32.mrb[0].mxu0
  %2061 = vmatprep.mubr.bf16.mxu0 %v790
  %2062 = vmatmul.mubr.bf16.gmra.mrb[0].mxu0 %v789
  %v2063 = vpop.f32.mrb[0].mxu0
  %v2064 = vadd.f32 %v1967, %v2063
  %v2065 = vpop.f32.mrb[0].mxu0
  %v2066 = vpop.f32.mrb[0].mxu0
  %v2067 = vadd.f32 %v1970, %v2066
  %v2068 = vpop.f32.mrb[0].mxu0
  %2069 = vmatprep.mubr.bf16.mxu0 %v804
  %2070 = vmatmul.mubr.bf16.gmra.mrb[0].mxu0 %v803
  %v2071 = vpop.f32.mrb[0].mxu0
  %v2072 = vadd.f32 %v1975, %v2071
  %v2073 = vpop.f32.mrb[0].mxu0
  %v2074 = vpop.f32.mrb[0].mxu0
  %v2075 = vadd.f32 %v1978, %v2074
  %v2076 = vpop.f32.mrb[0].mxu0
  %2077 = vdwg.mxu0
  %2078 = vmatprep.subr.bf16.mxu0 0
  %2079 = vmatpush1.bf16.msra.mxu0 %v1449
  %2080 = vmatprep.subr.bf16.mxu0 0
  %2081 = vmatpush1.bf16.msra.mxu0 %v1450
  %2082 = vmatprep.subr.bf16.mxu0 0
  %2083 = vmatpush1.bf16.msra.mxu0 %v1451
  %2084 = vmatprep.subr.bf16.mxu0 0
  %2085 = vmatpush1.bf16.msra.mxu0 %v1452
  %2086 = vmatprep.subr.bf16.mxu0 0
  %2087 = vmatpush1.bf16.msra.mxu0 %v1453
  %2088 = vmatprep.subr.bf16.mxu0 0
  %2089 = vmatpush1.bf16.msra.mxu0 %v1454
  %2090 = vmatprep.subr.bf16.mxu0 0
  %2091 = vmatpush1.bf16.msra.mxu0 %v1455
  %2092 = vmatprep.subr.bf16.mxu0 0
  %2093 = vmatpush1.bf16.msra.mxu0 %v1456
  %2094 = vmatprep.subr.bf16.mxu0 0
  %2095 = vmatpush1.bf16.msra.mxu0 %v1457
  %2096 = vmatprep.subr.bf16.mxu0 0
  %2097 = vmatpush1.bf16.msra.mxu0 %v1458
  %2098 = vmatprep.subr.bf16.mxu0 0
  %2099 = vmatpush1.bf16.msra.mxu0 %v1459
  %2100 = vmatprep.subr.bf16.mxu0 0
  %2101 = vmatpush1.bf16.msra.mxu0 %v1460
  %2102 = vmatprep.subr.bf16.mxu0 0
  %2103 = vmatpush1.bf16.msra.mxu0 %v1461
  %2104 = vmatprep.subr.bf16.mxu0 0
  %2105 = vmatpush1.bf16.msra.mxu0 %v1462
  %2106 = vmatprep.subr.bf16.mxu0 0
  %2107 = vmatpush1.bf16.msra.mxu0 %v1463
  %2108 = vmatprep.subr.bf16.mxu0 0
  %2109 = vmatpush1.bf16.msra.mxu0 %v1464
  %2110 = vmatprep.mubr.bf16.mxu0 %v708
  %2111 = vmatmul.mubr.bf16.gmra.mrb[0].mxu0 %v707
  %v2112 = vpop.f32.mrb[0].mxu0
  %v2113 = vadd.f32 %v2016, %v2112
  %v2114 = vpop.f32.mrb[0].mxu0
  %v2115 = vpop.f32.mrb[0].mxu0
  %v2116 = vadd.f32 %v2019, %v2115
  %v2117 = vpop.f32.mrb[0].mxu0
  %2118 = vmatprep.mubr.bf16.mxu0 %v722
  %2119 = vmatmul.mubr.bf16.gmra.mrb[0].mxu0 %v721
  %v2120 = vpop.f32.mrb[0].mxu0
  %v2121 = vadd.f32 %v2024, %v2120
  %v2122 = vpop.f32.mrb[0].mxu0
  %v2123 = vpop.f32.mrb[0].mxu0
  %v2124 = vadd.f32 %v2027, %v2123
  %v2125 = vpop.f32.mrb[0].mxu0
  %2126 = vmatprep.mubr.bf16.mxu0 %v736
  %2127 = vmatmul.mubr.bf16.gmra.mrb[0].mxu0 %v735
  %v2128 = vpop.f32.mrb[0].mxu0
  %v2129 = vadd.f32 %v2032, %v2128
  %v2130 = vpop.f32.mrb[0].mxu0
  %v2131 = vpop.f32.mrb[0].mxu0
  %v2132 = vadd.f32 %v2035, %v2131
  %v2133 = vpop.f32.mrb[0].mxu0
  %2134 = vmatprep.mubr.bf16.mxu0 %v750
  %2135 = vmatmul.mubr.bf16.gmra.mrb[0].mxu0 %v749
  %v2136 = vpop.f32.mrb[0].mxu0
  %v2137 = vadd.f32 %v2040, %v2136
  %v2138 = vpop.f32.mrb[0].mxu0
  %v2139 = vpop.f32.mrb[0].mxu0
  %v2140 = vadd.f32 %v2043, %v2139
  %v2141 = vpop.f32.mrb[0].mxu0
  %2142 = vmatprep.mubr.bf16.mxu0 %v764
  %2143 = vmatmul.mubr.bf16.gmra.mrb[0].mxu0 %v763
  %v2144 = vpop.f32.mrb[0].mxu0
  %v2145 = vadd.f32 %v2048, %v2144
  %v2146 = vpop.f32.mrb[0].mxu0
  %v2147 = vpop.f32.mrb[0].mxu0
  %v2148 = vadd.f32 %v2051, %v2147
  %v2149 = vpop.f32.mrb[0].mxu0
  %2150 = vmatprep.mubr.bf16.mxu0 %v778
  %2151 = vmatmul.mubr.bf16.gmra.mrb[0].mxu0 %v777
  %v2152 = vpop.f32.mrb[0].mxu0
  %v2153 = vadd.f32 %v2056, %v2152
  %v2154 = vpop.f32.mrb[0].mxu0
  %v2155 = vpop.f32.mrb[0].mxu0
  %v2156 = vadd.f32 %v2059, %v2155
  %v2157 = vpop.f32.mrb[0].mxu0
  %2158 = vmatprep.mubr.bf16.mxu0 %v792
  %2159 = vmatmul.mubr.bf16.gmra.mrb[0].mxu0 %v791
  %v2160 = vpop.f32.mrb[0].mxu0
  %v2161 = vadd.f32 %v2064, %v2160
  %v2162 = vpop.f32.mrb[0].mxu0
  %v2163 = vpop.f32.mrb[0].mxu0
  %v2164 = vadd.f32 %v2067, %v2163
  %v2165 = vpop.f32.mrb[0].mxu0
  %2166 = vmatprep.mubr.bf16.mxu0 %v806
  %2167 = vmatmul.mubr.bf16.gmra.mrb[0].mxu0 %v805
  %v2168 = vpop.f32.mrb[0].mxu0
  %v2169 = vadd.f32 %v2072, %v2168
  %v2170 = vpop.f32.mrb[0].mxu0
  %v2171 = vpop.f32.mrb[0].mxu0
  %v2172 = vadd.f32 %v2075, %v2171
  %v2173 = vpop.f32.mrb[0].mxu0
  %2174 = vdwg.mxu0
  %2175 = vmatprep.subr.bf16.mxu0 0
  %2176 = vmatpush1.bf16.msra.mxu0 %v1465
  %2177 = vmatprep.subr.bf16.mxu0 0
  %2178 = vmatpush1.bf16.msra.mxu0 %v1466
  %2179 = vmatprep.subr.bf16.mxu0 0
  %2180 = vmatpush1.bf16.msra.mxu0 %v1467
  %2181 = vmatprep.subr.bf16.mxu0 0
  %2182 = vmatpush1.bf16.msra.mxu0 %v1468
  %2183 = vmatprep.subr.bf16.mxu0 0
  %2184 = vmatpush1.bf16.msra.mxu0 %v1469
  %2185 = vmatprep.subr.bf16.mxu0 0
  %2186 = vmatpush1.bf16.msra.mxu0 %v1470
  %2187 = vmatprep.subr.bf16.mxu0 0
  %2188 = vmatpush1.bf16.msra.mxu0 %v1471
  %2189 = vmatprep.subr.bf16.mxu0 0
  %2190 = vmatpush1.bf16.msra.mxu0 %v1472
  %2191 = vmatprep.subr.bf16.mxu0 0
  %2192 = vmatpush1.bf16.msra.mxu0 %v1473
  %2193 = vmatprep.subr.bf16.mxu0 0
  %2194 = vmatpush1.bf16.msra.mxu0 %v1474
  %2195 = vmatprep.subr.bf16.mxu0 0
  %2196 = vmatpush1.bf16.msra.mxu0 %v1475
  %2197 = vmatprep.subr.bf16.mxu0 0
  %2198 = vmatpush1.bf16.msra.mxu0 %v1476
  %2199 = vmatprep.subr.bf16.mxu0 0
  %2200 = vmatpush1.bf16.msra.mxu0 %v1477
  %2201 = vmatprep.subr.bf16.mxu0 0
  %2202 = vmatpush1.bf16.msra.mxu0 %v1478
  %2203 = vmatprep.subr.bf16.mxu0 0
  %2204 = vmatpush1.bf16.msra.mxu0 %v1479
  %2205 = vmatprep.subr.bf16.mxu0 0
  %2206 = vmatpush1.bf16.msra.mxu0 %v1480
  %2207 = vmatprep.mubr.bf16.mxu0 %v710
  %2208 = vmatmul.mubr.bf16.gmra.mrb[0].mxu0 %v709
  %v2209 = vpop.f32.mrb[0].mxu0
  %v2210 = vadd.f32 %v2113, %v2209
  %v2211 = vpop.f32.mrb[0].mxu0
  %v2212 = vpop.f32.mrb[0].mxu0
  %v2213 = vadd.f32 %v2116, %v2212
  %v2214 = vpop.f32.mrb[0].mxu0
  %2215 = vmatprep.mubr.bf16.mxu0 %v724
  %2216 = vmatmul.mubr.bf16.gmra.mrb[0].mxu0 %v723
  %v2217 = vpop.f32.mrb[0].mxu0
  %v2218 = vadd.f32 %v2121, %v2217
  %v2219 = vpop.f32.mrb[0].mxu0
  %v2220 = vpop.f32.mrb[0].mxu0
  %v2221 = vadd.f32 %v2124, %v2220
  %v2222 = vpop.f32.mrb[0].mxu0
  %2223 = vmatprep.mubr.bf16.mxu0 %v738
  %2224 = vmatmul.mubr.bf16.gmra.mrb[0].mxu0 %v737
  %v2225 = vpop.f32.mrb[0].mxu0
  %v2226 = vadd.f32 %v2129, %v2225
  %v2227 = vpop.f32.mrb[0].mxu0
  %v2228 = vpop.f32.mrb[0].mxu0
  %v2229 = vadd.f32 %v2132, %v2228
  %v2230 = vpop.f32.mrb[0].mxu0
  %2231 = vmatprep.mubr.bf16.mxu0 %v752
  %2232 = vmatmul.mubr.bf16.gmra.mrb[0].mxu0 %v751
  %v2233 = vpop.f32.mrb[0].mxu0
  %v2234 = vadd.f32 %v2137, %v2233
  %v2235 = vpop.f32.mrb[0].mxu0
  %v2236 = vpop.f32.mrb[0].mxu0
  %v2237 = vadd.f32 %v2140, %v2236
  %v2238 = vpop.f32.mrb[0].mxu0
  %2239 = vmatprep.mubr.bf16.mxu0 %v766
  %2240 = vmatmul.mubr.bf16.gmra.mrb[0].mxu0 %v765
  %v2241 = vpop.f32.mrb[0].mxu0
  %v2242 = vadd.f32 %v2145, %v2241
  %v2243 = vpop.f32.mrb[0].mxu0
  %v2244 = vpop.f32.mrb[0].mxu0
  %v2245 = vadd.f32 %v2148, %v2244
  %v2246 = vpop.f32.mrb[0].mxu0
  %2247 = vmatprep.mubr.bf16.mxu0 %v780
  %2248 = vmatmul.mubr.bf16.gmra.mrb[0].mxu0 %v779
  %v2249 = vpop.f32.mrb[0].mxu0
  %v2250 = vadd.f32 %v2153, %v2249
  %v2251 = vpop.f32.mrb[0].mxu0
  %v2252 = vpop.f32.mrb[0].mxu0
  %v2253 = vadd.f32 %v2156, %v2252
  %v2254 = vpop.f32.mrb[0].mxu0
  %2255 = vmatprep.mubr.bf16.mxu0 %v794
  %2256 = vmatmul.mubr.bf16.gmra.mrb[0].mxu0 %v793
  %v2257 = vpop.f32.mrb[0].mxu0
  %v2258 = vadd.f32 %v2161, %v2257
  %v2259 = vpop.f32.mrb[0].mxu0
  %v2260 = vpop.f32.mrb[0].mxu0
  %v2261 = vadd.f32 %v2164, %v2260
  %v2262 = vpop.f32.mrb[0].mxu0
  %2263 = vmatprep.mubr.bf16.mxu0 %v808
  %2264 = vmatmul.mubr.bf16.gmra.mrb[0].mxu0 %v807
  %v2265 = vpop.f32.mrb[0].mxu0
  %v2266 = vadd.f32 %v2169, %v2265
  %v2267 = vpop.f32.mrb[0].mxu0
  %v2268 = vpop.f32.mrb[0].mxu0
  %v2269 = vadd.f32 %v2172, %v2268
  %v2270 = vpop.f32.mrb[0].mxu0
  %2271 = vdwg.mxu0
  %v2272 = vmax.f32 %v2210, 0.0
  %v2273 = vmax.f32 %v2213, 0.0
  %v2274 = vmax.f32 %v2218, 0.0
  %v2275 = vmax.f32 %v2221, 0.0
  %v2276 = vmax.f32 %v2226, 0.0
  %v2277 = vmax.f32 %v2229, 0.0
  %v2278 = vmax.f32 %v2234, 0.0
  %v2279 = vmax.f32 %v2237, 0.0
  %v2280 = vmax.f32 %v2242, 0.0
  %v2281 = vmax.f32 %v2245, 0.0
  %v2282 = vmax.f32 %v2250, 0.0
  %v2283 = vmax.f32 %v2253, 0.0
  %v2284 = vmax.f32 %v2258, 0.0
  %v2285 = vmax.f32 %v2261, 0.0
  %v2286 = vmax.f32 %v2266, 0.0
  %v2287 = vmax.f32 %v2269, 0.0
  %v2288 = vpack.c.bf16 %v2273, %v2272
  %v2289 = vpack.c.bf16 %v2275, %v2274
  %v2290 = vpack.c.bf16 %v2277, %v2276
  %v2291 = vpack.c.bf16 %v2279, %v2278
  %v2292 = vpack.c.bf16 %v2281, %v2280
  %v2293 = vpack.c.bf16 %v2283, %v2282
  %v2294 = vpack.c.bf16 %v2285, %v2284
  %v2295 = vpack.c.bf16 %v2287, %v2286
  %v2304 = vunpack.c.l.b16 %v2288
  %v2305 = vunpack.c.h.b16 %v2288
  %v2306 = vunpack.c.l.b16 %v2289
  %v2307 = vunpack.c.h.b16 %v2289
  %v2308 = vunpack.c.l.b16 %v2290
  %v2309 = vunpack.c.h.b16 %v2290
  %v2310 = vunpack.c.l.b16 %v2291
  %v2311 = vunpack.c.h.b16 %v2291
  %v2312 = vunpack.c.l.b16 %v2292
  %v2313 = vunpack.c.h.b16 %v2292
  %v2314 = vunpack.c.l.b16 %v2293
  %v2315 = vunpack.c.h.b16 %v2293
  %v2316 = vunpack.c.l.b16 %v2294
  %v2317 = vunpack.c.h.b16 %v2294
  %v2318 = vunpack.c.l.b16 %v2295
  %v2319 = vunpack.c.h.b16 %v2295
  %v2320 = vpack.c.b16 %v2304, %v2304
  %v2321 = vpack.c.b16 %v2305, %v2305
  %v2322 = vpack.c.b16 %v2306, %v2306
  %v2323 = vpack.c.b16 %v2307, %v2307
  %v2324 = vpack.c.b16 %v2308, %v2308
  %v2325 = vpack.c.b16 %v2309, %v2309
  %v2326 = vpack.c.b16 %v2310, %v2310
  %v2327 = vpack.c.b16 %v2311, %v2311
  %v2328 = vpack.c.b16 %v2312, %v2312
  %v2329 = vpack.c.b16 %v2313, %v2313
  %v2330 = vpack.c.b16 %v2314, %v2314
  %v2331 = vpack.c.b16 %v2315, %v2315
  %v2332 = vpack.c.b16 %v2316, %v2316
  %v2333 = vpack.c.b16 %v2317, %v2317
  %v2334 = vpack.c.b16 %v2318, %v2318
  %v2335 = vpack.c.b16 %v2319, %v2319
  %2352 = vst [vmem:[%s3] sm:$0xf] %v2320
  %2353 = vst [vmem:[%s3 + $0x4] sm:$0xf] %v2321
  %2354 = vst [vmem:[%s3 + $0x8] sm:$0xf] %v2322
  %2355 = vst [vmem:[%s3 + $0xc] sm:$0xf] %v2323
  %2356 = vst [vmem:[%s3 + $0x10] sm:$0xf] %v2324
  %2357 = vst [vmem:[%s3 + $0x14] sm:$0xf] %v2325
  %2358 = vst [vmem:[%s3 + $0x18] sm:$0xf] %v2326
  %2359 = vst [vmem:[%s3 + $0x1c] sm:$0xf] %v2327
  %2360 = vst [vmem:[%s3 + $0x20] sm:$0xf] %v2328
  %2361 = vst [vmem:[%s3 + $0x24] sm:$0xf] %v2329
  %2362 = vst [vmem:[%s3 + $0x28] sm:$0xf] %v2330
  %2363 = vst [vmem:[%s3 + $0x2c] sm:$0xf] %v2331
  %2364 = vst [vmem:[%s3 + $0x30] sm:$0xf] %v2332
  %2365 = vst [vmem:[%s3 + $0x34] sm:$0xf] %v2333
  %2366 = vst [vmem:[%s3 + $0x38] sm:$0xf] %v2334
  %2367 = vst [vmem:[%s3 + $0x3c] sm:$0xf] %v2335
  %v2368 = vadd.f32 %v2272, %v2273
  %v2369 = vadd.f32 %v2368, %v2274
  %v2370 = vadd.f32 %v2369, %v2275
  %v2371 = vadd.f32 %v2370, %v2276
  %v2372 = vadd.f32 %v2371, %v2277
  %v2373 = vadd.f32 %v2372, %v2278
  %v2374 = vadd.f32 %v2373, %v2279
  %v2375 = vadd.f32 %v2374, %v2280
  %v2376 = vadd.f32 %v2375, %v2281
  %v2377 = vadd.f32 %v2376, %v2282
  %v2378 = vadd.f32 %v2377, %v2283
  %v2379 = vadd.f32 %v2378, %v2284
  %v2380 = vadd.f32 %v2379, %v2285
  %v2381 = vadd.f32 %v2380, %v2286
  %v2382 = vadd.f32 %v2381, %v2287
  %v2383 = vrot.slane %v2382, 4
  %v2384 = vadd.f32 %v2382, %v2383
  %v2385 = vrot.slane %v2384, 2
  %v2386 = vadd.f32 %v2384, %v2385
  %v2387 = vrot.slane %v2386, 1
  %v2388 = vadd.f32 %v2386, %v2387
  %2389 = vst [vmem:[%s4] sm:$0x1] %v2388
  %v2390 = vmul.f32 %v2272, %v2272
  %v2391 = vmul.f32 %v2273, %v2273
  %v2392 = vmul.f32 %v2274, %v2274
  %v2393 = vmul.f32 %v2275, %v2275
  %v2394 = vmul.f32 %v2276, %v2276
  %v2395 = vmul.f32 %v2277, %v2277
  %v2396 = vmul.f32 %v2278, %v2278
  %v2397 = vmul.f32 %v2279, %v2279
  %v2398 = vmul.f32 %v2280, %v2280
  %v2399 = vmul.f32 %v2281, %v2281
  %v2400 = vmul.f32 %v2282, %v2282
  %v2401 = vmul.f32 %v2283, %v2283
  %v2402 = vmul.f32 %v2284, %v2284
  %v2403 = vmul.f32 %v2285, %v2285
  %v2404 = vmul.f32 %v2286, %v2286
  %v2405 = vmul.f32 %v2287, %v2287
  %v2406 = vadd.f32 %v2390, %v2391
  %v2407 = vadd.f32 %v2406, %v2392
  %v2408 = vadd.f32 %v2407, %v2393
  %v2409 = vadd.f32 %v2408, %v2394
  %v2410 = vadd.f32 %v2409, %v2395
  %v2411 = vadd.f32 %v2410, %v2396
  %v2412 = vadd.f32 %v2411, %v2397
  %v2413 = vadd.f32 %v2412, %v2398
  %v2414 = vadd.f32 %v2413, %v2399
  %v2415 = vadd.f32 %v2414, %v2400
  %v2416 = vadd.f32 %v2415, %v2401
  %v2417 = vadd.f32 %v2416, %v2402
  %v2418 = vadd.f32 %v2417, %v2403
  %v2419 = vadd.f32 %v2418, %v2404
  %v2420 = vadd.f32 %v2419, %v2405
  %v2421 = vrot.slane %v2420, 4
  %v2422 = vadd.f32 %v2420, %v2421
  %v2423 = vrot.slane %v2422, 2
  %v2424 = vadd.f32 %v2422, %v2423
  %v2425 = vrot.slane %v2424, 1
  %v2426 = vadd.f32 %v2424, %v2425
  %2427 = vst [vmem:[%s5] sm:$0x1] %v2426
  // Predicated region
  $region14: #{forward.18} parent=0 // pred_check
    _
  $region15: #{forward.18} parent=0 // pred_check_branch
    %2429 = sbr.rel (0) target = $region17
  $region16: #{forward.18} parent=0 // pred_region
    _
  $region17: #{forward.18} parent=0 // pred_fallthru
    _
  // Predicated region
  $region18: #{forward.18} parent=0 // pred_check
    _
  $region19: #{forward.18} parent=0 // pred_check_branch
    %2431 = sbr.rel (0) target = $region21
  $region20: #{forward.18} parent=0 // pred_region
    _
  $region21: #{forward.18} parent=0 // pred_fallthru
    _
  // Predicated region
  $region22: #{forward.18} parent=0 // pred_check
    _
  $region23: #{forward.18} parent=0 // pred_check_branch
    %2433 = sbr.rel (0) target = $region25
  $region24: #{forward.18} parent=0 // pred_region
    _
  $region25: #{forward.18} parent=0 // pred_fallthru
    _
  // Predicated region
  $region26: #{forward.18} parent=0 // pred_check
    _
  $region27: #{forward.18} parent=0 // pred_check_branch
    %2435 = sbr.rel (0) target = $region29
  $region28: #{forward.18} parent=0 // pred_region
    _
  $region29: #{forward.18} parent=0 // pred_fallthru
    _
  // Predicated region
  $region30: #{forward.18} parent=0 // pred_check
    _
  $region31: #{forward.18} parent=0 // pred_check_branch
    %2437 = sbr.rel (0) target = $region33
  $region32: #{forward.18} parent=0 // pred_region
    _
  $region33: #{forward.18} parent=0 // pred_fallthru
    _
  // Predicated region
  $region34: #{forward.18} parent=0 // pred_check
    _
  $region35: #{forward.18} parent=0 // pred_check_branch
    %2439 = sbr.rel (0) target = $region37
  $region36: #{forward.18} parent=0 // pred_region
    _
  $region37: #{forward.18} parent=0 // pred_fallthru
    _

// kernel: forward.22
$region0: #{forward.22}
  #allocation0 [shape = 'u32[]', space=smem, size = 0x4, offset = 0x4, fixed_abs, tag = 'smem constant byte address 0x4 - core index']
  #allocation1 [shape = 'u32[144,128]{1,0:T(1,128)}', space=vmem, size = 0x12000, scoped, tag = 'internal scratch']
  %s0 = inlined_call_operand.vmem [shape: bf16[128,256], index: 0, kind: input, shape index: {}]
  %s1 = inlined_call_operand.vmem [shape: bf16[256,128], index: 1, kind: input, shape index: {}]
  %s2 = inlined_call_operand.vmem [shape: f32[1,128], index: 2, kind: input, shape index: {}]
  %s3 = inlined_call_operand.vmem [shape: bf16[128,128], index: 3, kind: output, shape index: {0}]
  %s4 = inlined_call_operand.vmem [shape: f32[1,1,128], index: 4, kind: output, shape index: {1}]
  %s5 = inlined_call_operand.vmem [shape: f32[1,1,128], index: 5, kind: output, shape index: {2}]
  %6 = xla_tuple %s3, %s4, %s5
  %s7 = sld [smem:[#allocation0]]
  $region38: #{forward.22} parent=0
    _
  %s9 = ssub.s32 1, %s7
  %s10 = scalar_select 0, %s9, %s7
  // Predicated region
  $region2: #{forward.22} parent=0 // pred_check
    _
  $region3: #{forward.22} parent=0 // pred_check_branch
    %12 = sbr.rel (0) target = $region5
  $region4: #{forward.22} parent=0 // pred_region
    _
  $region5: #{forward.22} parent=0 // pred_fallthru
    _
  // Predicated region
  $region6: #{forward.22} parent=0 // pred_check
    _
  $region7: #{forward.22} parent=0 // pred_check_branch
    %14 = sbr.rel (0) target = $region9
  $region8: #{forward.22} parent=0 // pred_region
    _
  $region9: #{forward.22} parent=0 // pred_fallthru
    _
  // Predicated region
  $region10: #{forward.22} parent=0 // pred_check
    _
  $region11: #{forward.22} parent=0 // pred_check_branch
    %16 = sbr.rel (0) target = $region13
  $region12: #{forward.22} parent=0 // pred_region
    _
  $region13: #{forward.22} parent=0 // pred_fallthru
    _
  %v18 = vld [vmem:[%s0] sm:$0xff]
  %v19 = vld [vmem:[%s0 + $0x8] sm:$0xff]
  %v20 = vld [vmem:[%s0 + $0x10] sm:$0xff]
  %v21 = vld [vmem:[%s0 + $0x18] sm:$0xff]
  %v22 = vld [vmem:[%s0 + $0x20] sm:$0xff]
  %v23 = vld [vmem:[%s0 + $0x28] sm:$0xff]
  %v24 = vld [vmem:[%s0 + $0x30] sm:$0xff]
  %v25 = vld [vmem:[%s0 + $0x38] sm:$0xff]
  %v26 = vld [vmem:[%s0 + $0x40] sm:$0xff]
  %v27 = vld [vmem:[%s0 + $0x48] sm:$0xff]
  %v28 = vld [vmem:[%s0 + $0x50] sm:$0xff]
  %v29 = vld [vmem:[%s0 + $0x58] sm:$0xff]
  %v30 = vld [vmem:[%s0 + $0x60] sm:$0xff]
  %v31 = vld [vmem:[%s0 + $0x68] sm:$0xff]
  %v32 = vld [vmem:[%s0 + $0x70] sm:$0xff]
  %v33 = vld [vmem:[%s0 + $0x78] sm:$0xff]
  %v34 = vld [vmem:[%s1] sm:$0xf]
  %v35 = vld [vmem:[%s1 + $0x4] sm:$0xf]
  %v36 = vld [vmem:[%s1 + $0x8] sm:$0xf]
  %v37 = vld [vmem:[%s1 + $0xc] sm:$0xf]
  %v38 = vld [vmem:[%s1 + $0x10] sm:$0xf]
  %v39 = vld [vmem:[%s1 + $0x14] sm:$0xf]
  %v40 = vld [vmem:[%s1 + $0x18] sm:$0xf]
  %v41 = vld [vmem:[%s1 + $0x1c] sm:$0xf]
  %v42 = vld [vmem:[%s1 + $0x20] sm:$0xf]
  %v43 = vld [vmem:[%s1 + $0x24] sm:$0xf]
  %v44 = vld [vmem:[%s1 + $0x28] sm:$0xf]
  %v45 = vld [vmem:[%s1 + $0x2c] sm:$0xf]
  %v46 = vld [vmem:[%s1 + $0x30] sm:$0xf]
  %v47 = vld [vmem:[%s1 + $0x34] sm:$0xf]
  %v48 = vld [vmem:[%s1 + $0x38] sm:$0xf]
  %v49 = vld [vmem:[%s1 + $0x3c] sm:$0xf]
  %v50 = vld [vmem:[%s1 + $0x40] sm:$0xf]
  %v51 = vld [vmem:[%s1 + $0x44] sm:$0xf]
  %v52 = vld [vmem:[%s1 + $0x48] sm:$0xf]
  %v53 = vld [vmem:[%s1 + $0x4c] sm:$0xf]
  %v54 = vld [vmem:[%s1 + $0x50] sm:$0xf]
  %v55 = vld [vmem:[%s1 + $0x54] sm:$0xf]
  %v56 = vld [vmem:[%s1 + $0x58] sm:$0xf]
  %v57 = vld [vmem:[%s1 + $0x5c] sm:$0xf]
  %v58 = vld [vmem:[%s1 + $0x60] sm:$0xf]
  %v59 = vld [vmem:[%s1 + $0x64] sm:$0xf]
  %v60 = vld [vmem:[%s1 + $0x68] sm:$0xf]
  %v61 = vld [vmem:[%s1 + $0x6c] sm:$0xf]
  %v62 = vld [vmem:[%s1 + $0x70] sm:$0xf]
  %v63 = vld [vmem:[%s1 + $0x74] sm:$0xf]
  %v64 = vld [vmem:[%s1 + $0x78] sm:$0xf]
  %v65 = vld [vmem:[%s1 + $0x7c] sm:$0xf]
  %v66 = vld [vmem:[%s2] sm:$0x1]
  %v68 = vlaneseq
  %v69 = vshrl.u32 %v68, 7
  %v70 = vsub.s32 0, %v69
  %v71 = vrot.slane %v66, %v70
  %v89 = vunpack.c.l.b16 %v18
  %v90 = vunpack.c.h.b16 %v18
  %v91 = vunpack.c.l.b16 %v19
  %v92 = vunpack.c.h.b16 %v19
  %v93 = vunpack.c.l.b16 %v20
  %v94 = vunpack.c.h.b16 %v20
  %v95 = vunpack.c.l.b16 %v21
  %v96 = vunpack.c.h.b16 %v21
  %v97 = vunpack.c.l.b16 %v22
  %v98 = vunpack.c.h.b16 %v22
  %v99 = vunpack.c.l.b16 %v23
  %v100 = vunpack.c.h.b16 %v23
  %v101 = vunpack.c.l.b16 %v24
  %v102 = vunpack.c.h.b16 %v24
  %v103 = vunpack.c.l.b16 %v25
  %v104 = vunpack.c.h.b16 %v25
  %v105 = vunpack.c.l.b16 %v26
  %v106 = vunpack.c.h.b16 %v26
  %v107 = vunpack.c.l.b16 %v27
  %v108 = vunpack.c.h.b16 %v27
  %v109 = vunpack.c.l.b16 %v28
  %v110 = vunpack.c.h.b16 %v28
  %v111 = vunpack.c.l.b16 %v29
  %v112 = vunpack.c.h.b16 %v29
  %v113 = vunpack.c.l.b16 %v30
  %v114 = vunpack.c.h.b16 %v30
  %v115 = vunpack.c.l.b16 %v31
  %v116 = vunpack.c.h.b16 %v31
  %v117 = vunpack.c.l.b16 %v32
  %v118 = vunpack.c.h.b16 %v32
  %v119 = vunpack.c.l.b16 %v33
  %v120 = vunpack.c.h.b16 %v33
  %v121 = vpack.c.b16 %v91, %v89
  %v122 = vpack.c.b16 %v92, %v90
  %v123 = vpack.c.b16 %v95, %v93
  %v124 = vpack.c.b16 %v96, %v94
  %v125 = vpack.c.b16 %v99, %v97
  %v126 = vpack.c.b16 %v100, %v98
  %v127 = vpack.c.b16 %v103, %v101
  %v128 = vpack.c.b16 %v104, %v102
  %v129 = vpack.c.b16 %v107, %v105
  %v130 = vpack.c.b16 %v108, %v106
  %v131 = vpack.c.b16 %v111, %v109
  %v132 = vpack.c.b16 %v112, %v110
  %v133 = vpack.c.b16 %v115, %v113
  %v134 = vpack.c.b16 %v116, %v114
  %v135 = vpack.c.b16 %v119, %v117
  %v136 = vpack.c.b16 %v120, %v118
  %v185 = vunpack.c.l.b16 %v34
  %v186 = vunpack.c.l.b16 %v35
  %v187 = vunpack.c.l.b16 %v36
  %v188 = vunpack.c.l.b16 %v37
  %v189 = vunpack.c.l.b16 %v38
  %v190 = vunpack.c.l.b16 %v39
  %v191 = vunpack.c.l.b16 %v40
  %v192 = vunpack.c.l.b16 %v41
  %v193 = vunpack.c.l.b16 %v42
  %v194 = vunpack.c.l.b16 %v43
  %v195 = vunpack.c.l.b16 %v44
  %v196 = vunpack.c.l.b16 %v45
  %v197 = vunpack.c.l.b16 %v46
  %v198 = vunpack.c.l.b16 %v47
  %v199 = vunpack.c.l.b16 %v48
  %v200 = vunpack.c.l.b16 %v49
  %v201 = vunpack.c.l.b16 %v50
  %v202 = vunpack.c.l.b16 %v51
  %v203 = vunpack.c.l.b16 %v52
  %v204 = vunpack.c.l.b16 %v53
  %v205 = vunpack.c.l.b16 %v54
  %v206 = vunpack.c.l.b16 %v55
  %v207 = vunpack.c.l.b16 %v56
  %v208 = vunpack.c.l.b16 %v57
  %v209 = vunpack.c.l.b16 %v58
  %v210 = vunpack.c.l.b16 %v59
  %v211 = vunpack.c.l.b16 %v60
  %v212 = vunpack.c.l.b16 %v61
  %v213 = vunpack.c.l.b16 %v62
  %v214 = vunpack.c.l.b16 %v63
  %v215 = vunpack.c.l.b16 %v64
  %v216 = vunpack.c.l.b16 %v65
  %v217 = vpack.c.b16 %v186, %v185
  %v218 = vpack.c.b16 %v188, %v187
  %v219 = vpack.c.b16 %v190, %v189
  %v220 = vpack.c.b16 %v192, %v191
  %v221 = vpack.c.b16 %v194, %v193
  %v222 = vpack.c.b16 %v196, %v195
  %v223 = vpack.c.b16 %v198, %v197
  %v224 = vpack.c.b16 %v200, %v199
  %v225 = vpack.c.b16 %v202, %v201
  %v226 = vpack.c.b16 %v204, %v203
  %v227 = vpack.c.b16 %v206, %v205
  %v228 = vpack.c.b16 %v208, %v207
  %v229 = vpack.c.b16 %v210, %v209
  %v230 = vpack.c.b16 %v212, %v211
  %v231 = vpack.c.b16 %v214, %v213
  %v232 = vpack.c.b16 %v216, %v215
  %249 = vmatprep.subr.bf16.mxu0 0
  %250 = vmatpush1.bf16.msra.mxu0 %v217
  %251 = vmatprep.subr.bf16.mxu0 0
  %252 = vmatpush1.bf16.msra.mxu0 %v218
  %253 = vmatprep.subr.bf16.mxu0 0
  %254 = vmatpush1.bf16.msra.mxu0 %v219
  %255 = vmatprep.subr.bf16.mxu0 0
  %256 = vmatpush1.bf16.msra.mxu0 %v220
  %257 = vmatprep.subr.bf16.mxu0 0
  %258 = vmatpush1.bf16.msra.mxu0 %v221
  %259 = vmatprep.subr.bf16.mxu0 0
  %260 = vmatpush1.bf16.msra.mxu0 %v222
  %261 = vmatprep.subr.bf16.mxu0 0
  %262 = vmatpush1.bf16.msra.mxu0 %v223
  %263 = vmatprep.subr.bf16.mxu0 0
  %264 = vmatpush1.bf16.msra.mxu0 %v224
  %265 = vmatprep.subr.bf16.mxu0 0
  %266 = vmatpush1.bf16.msra.mxu0 %v225
  %267 = vmatprep.subr.bf16.mxu0 0
  %268 = vmatpush1.bf16.msra.mxu0 %v226
  %269 = vmatprep.subr.bf16.mxu0 0
  %270 = vmatpush1.bf16.msra.mxu0 %v227
  %271 = vmatprep.subr.bf16.mxu0 0
  %272 = vmatpush1.bf16.msra.mxu0 %v228
  %273 = vmatprep.subr.bf16.mxu0 0
  %274 = vmatpush1.bf16.msra.mxu0 %v229
  %275 = vmatprep.subr.bf16.mxu0 0
  %276 = vmatpush1.bf16.msra.mxu0 %v230
  %277 = vmatprep.subr.bf16.mxu0 0
  %278 = vmatpush1.bf16.msra.mxu0 %v231
  %279 = vmatprep.subr.bf16.mxu0 0
  %280 = vmatpush1.bf16.msra.mxu0 %v232
  %281 = vmatprep.mubr.bf16.mxu0 %v122
  %282 = vmatmul.mubr.bf16.gmra.mrb[0].mxu0 %v121
  %v283 = vpop.f32.mrb[0].mxu0
  %v284 = vadd.f32 %v71, %v283
  %v285 = vpop.f32.mrb[0].mxu0
  %v286 = vpop.f32.mrb[0].mxu0
  %v287 = vadd.f32 %v71, %v286
  %v288 = vpop.f32.mrb[0].mxu0
  %289 = vmatprep.mubr.bf16.mxu0 %v124
  %290 = vmatmul.mubr.bf16.gmra.mrb[0].mxu0 %v123
  %v291 = vpop.f32.mrb[0].mxu0
  %v292 = vadd.f32 %v71, %v291
  %v293 = vpop.f32.mrb[0].mxu0
  %v294 = vpop.f32.mrb[0].mxu0
  %v295 = vadd.f32 %v71, %v294
  %v296 = vpop.f32.mrb[0].mxu0
  %297 = vmatprep.mubr.bf16.mxu0 %v126
  %298 = vmatmul.mubr.bf16.gmra.mrb[0].mxu0 %v125
  %v299 = vpop.f32.mrb[0].mxu0
  %v300 = vadd.f32 %v71, %v299
  %v301 = vpop.f32.mrb[0].mxu0
  %v302 = vpop.f32.mrb[0].mxu0
  %v303 = vadd.f32 %v71, %v302
  %v304 = vpop.f32.mrb[0].mxu0
  %305 = vmatprep.mubr.bf16.mxu0 %v128
  %306 = vmatmul.mubr.bf16.gmra.mrb[0].mxu0 %v127
  %v307 = vpop.f32.mrb[0].mxu0
  %v308 = vadd.f32 %v71, %v307
  %v309 = vpop.f32.mrb[0].mxu0
  %v310 = vpop.f32.mrb[0].mxu0
  %v311 = vadd.f32 %v71, %v310
  %v312 = vpop.f32.mrb[0].mxu0
  %313 = vmatprep.mubr.bf16.mxu0 %v130
  %314 = vmatmul.mubr.bf16.gmra.mrb[0].mxu0 %v129
  %v315 = vpop.f32.mrb[0].mxu0
  %v316 = vadd.f32 %v71, %v315
  %v317 = vpop.f32.mrb[0].mxu0
  %v318 = vpop.f32.mrb[0].mxu0
  %v319 = vadd.f32 %v71, %v318
  %v320 = vpop.f32.mrb[0].mxu0
  %321 = vmatprep.mubr.bf16.mxu0 %v132
  %322 = vmatmul.mubr.bf16.gmra.mrb[0].mxu0 %v131
  %v323 = vpop.f32.mrb[0].mxu0
  %v324 = vadd.f32 %v71, %v323
  %v325 = vpop.f32.mrb[0].mxu0
  %v326 = vpop.f32.mrb[0].mxu0
  %v327 = vadd.f32 %v71, %v326
  %v328 = vpop.f32.mrb[0].mxu0
  %329 = vmatprep.mubr.bf16.mxu0 %v134
  %330 = vmatmul.mubr.bf16.gmra.mrb[0].mxu0 %v133
  %v331 = vpop.f32.mrb[0].mxu0
  %v332 = vadd.f32 %v71, %v331
  %v333 = vpop.f32.mrb[0].mxu0
  %v334 = vpop.f32.mrb[0].mxu0
  %v335 = vadd.f32 %v71, %v334
  %v336 = vpop.f32.mrb[0].mxu0
  %337 = vmatprep.mubr.bf16.mxu0 %v136
  %338 = vmatmul.mubr.bf16.gmra.mrb[0].mxu0 %v135
  %v339 = vpop.f32.mrb[0].mxu0
  %v340 = vadd.f32 %v71, %v339
  %v341 = vpop.f32.mrb[0].mxu0
  %v342 = vpop.f32.mrb[0].mxu0
  %v343 = vadd.f32 %v71, %v342
  %v344 = vpop.f32.mrb[0].mxu0
  %345 = vdwg.mxu0
  %v346 = vpack.c.bf16 %v287, %v284
  %v347 = vpack.c.bf16 %v295, %v292
  %v348 = vpack.c.bf16 %v303, %v300
  %v349 = vpack.c.bf16 %v311, %v308
  %v350 = vpack.c.bf16 %v319, %v316
  %v351 = vpack.c.bf16 %v327, %v324
  %v352 = vpack.c.bf16 %v335, %v332
  %v353 = vpack.c.bf16 %v343, %v340
  %v362 = vunpack.c.l.b16 %v346
  %v363 = vunpack.c.h.b16 %v346
  %v364 = vunpack.c.l.b16 %v347
  %v365 = vunpack.c.h.b16 %v347
  %v366 = vunpack.c.l.b16 %v348
  %v367 = vunpack.c.h.b16 %v348
  %v368 = vunpack.c.l.b16 %v349
  %v369 = vunpack.c.h.b16 %v349
  %v370 = vunpack.c.l.b16 %v350
  %v371 = vunpack.c.h.b16 %v350
  %v372 = vunpack.c.l.b16 %v351
  %v373 = vunpack.c.h.b16 %v351
  %v374 = vunpack.c.l.b16 %v352
  %v375 = vunpack.c.h.b16 %v352
  %v376 = vunpack.c.l.b16 %v353
  %v377 = vunpack.c.h.b16 %v353
  %v378 = vpack.c.b16 %v362, %v362
  %v379 = vpack.c.b16 %v363, %v363
  %v380 = vpack.c.b16 %v364, %v364
  %v381 = vpack.c.b16 %v365, %v365
  %v382 = vpack.c.b16 %v366, %v366
  %v383 = vpack.c.b16 %v367, %v367
  %v384 = vpack.c.b16 %v368, %v368
  %v385 = vpack.c.b16 %v369, %v369
  %v386 = vpack.c.b16 %v370, %v370
  %v387 = vpack.c.b16 %v371, %v371
  %v388 = vpack.c.b16 %v372, %v372
  %v389 = vpack.c.b16 %v373, %v373
  %v390 = vpack.c.b16 %v374, %v374
  %v391 = vpack.c.b16 %v375, %v375
  %v392 = vpack.c.b16 %v376, %v376
  %v393 = vpack.c.b16 %v377, %v377
  %410 = vst [vmem:[%s3] sm:$0xf] %v378
  %411 = vst [vmem:[%s3 + $0x4] sm:$0xf] %v379
  %412 = vst [vmem:[%s3 + $0x8] sm:$0xf] %v380
  %413 = vst [vmem:[%s3 + $0xc] sm:$0xf] %v381
  %414 = vst [vmem:[%s3 + $0x10] sm:$0xf] %v382
  %415 = vst [vmem:[%s3 + $0x14] sm:$0xf] %v383
  %416 = vst [vmem:[%s3 + $0x18] sm:$0xf] %v384
  %417 = vst [vmem:[%s3 + $0x1c] sm:$0xf] %v385
  %418 = vst [vmem:[%s3 + $0x20] sm:$0xf] %v386
  %419 = vst [vmem:[%s3 + $0x24] sm:$0xf] %v387
  %420 = vst [vmem:[%s3 + $0x28] sm:$0xf] %v388
  %421 = vst [vmem:[%s3 + $0x2c] sm:$0xf] %v389
  %422 = vst [vmem:[%s3 + $0x30] sm:$0xf] %v390
  %423 = vst [vmem:[%s3 + $0x34] sm:$0xf] %v391
  %424 = vst [vmem:[%s3 + $0x38] sm:$0xf] %v392
  %425 = vst [vmem:[%s3 + $0x3c] sm:$0xf] %v393
  %v426 = vadd.f32 %v284, %v287
  %v427 = vadd.f32 %v426, %v292
  %v428 = vadd.f32 %v427, %v295
  %v429 = vadd.f32 %v428, %v300
  %v430 = vadd.f32 %v429, %v303
  %v431 = vadd.f32 %v430, %v308
  %v432 = vadd.f32 %v431, %v311
  %v433 = vadd.f32 %v432, %v316
  %v434 = vadd.f32 %v433, %v319
  %v435 = vadd.f32 %v434, %v324
  %v436 = vadd.f32 %v435, %v327
  %v437 = vadd.f32 %v436, %v332
  %v438 = vadd.f32 %v437, %v335
  %v439 = vadd.f32 %v438, %v340
  %v440 = vadd.f32 %v439, %v343
  %v441 = vrot.slane %v440, 4
  %v442 = vadd.f32 %v440, %v441
  %v443 = vrot.slane %v442, 2
  %v444 = vadd.f32 %v442, %v443
  %v445 = vrot.slane %v444, 1
  %v446 = vadd.f32 %v444, %v445
  %447 = vst [vmem:[%s4] sm:$0x1] %v446
  %v448 = vmul.f32 %v284, %v284
  %v449 = vmul.f32 %v287, %v287
  %v450 = vmul.f32 %v292, %v292
  %v451 = vmul.f32 %v295, %v295
  %v452 = vmul.f32 %v300, %v300
  %v453 = vmul.f32 %v303, %v303
  %v454 = vmul.f32 %v308, %v308
  %v455 = vmul.f32 %v311, %v311
  %v456 = vmul.f32 %v316, %v316
  %v457 = vmul.f32 %v319, %v319
  %v458 = vmul.f32 %v324, %v324
  %v459 = vmul.f32 %v327, %v327
  %v460 = vmul.f32 %v332, %v332
  %v461 = vmul.f32 %v335, %v335
  %v462 = vmul.f32 %v340, %v340
  %v463 = vmul.f32 %v343, %v343
  %v464 = vadd.f32 %v448, %v449
  %v465 = vadd.f32 %v464, %v450
  %v466 = vadd.f32 %v465, %v451
  %v467 = vadd.f32 %v466, %v452
  %v468 = vadd.f32 %v467, %v453
  %v469 = vadd.f32 %v468, %v454
  %v470 = vadd.f32 %v469, %v455
  %v471 = vadd.f32 %v470, %v456
  %v472 = vadd.f32 %v471, %v457
  %v473 = vadd.f32 %v472, %v458
  %v474 = vadd.f32 %v473, %v459
  %v475 = vadd.f32 %v474, %v460
  %v476 = vadd.f32 %v475, %v461
  %v477 = vadd.f32 %v476, %v462
  %v478 = vadd.f32 %v477, %v463
  %v479 = vrot.slane %v478, 4
  %v480 = vadd.f32 %v478, %v479
  %v481 = vrot.slane %v480, 2
  %v482 = vadd.f32 %v480, %v481
  %v483 = vrot.slane %v482, 1
  %v484 = vadd.f32 %v482, %v483
  %485 = vst [vmem:[%s5] sm:$0x1] %v484
  // Predicated region
  $region14: #{forward.22} parent=0 // pred_check
    _
  $region15: #{forward.22} parent=0 // pred_check_branch
    %487 = sbr.rel (0) target = $region17
  $region16: #{forward.22} parent=0 // pred_region
    _
  $region17: #{forward.22} parent=0 // pred_fallthru
    _
  // Predicated region
  $region18: #{forward.22} parent=0 // pred_check
    _
  $region19: #{forward.22} parent=0 // pred_check_branch
    %489 = sbr.rel (0) target = $region21
  $region20: #{forward.22} parent=0 // pred_region
    _
  $region21: #{forward.22} parent=0 // pred_fallthru
    _
  // Predicated region
  $region22: #{forward.22} parent=0 // pred_check
    _
  $region23: #{forward.22} parent=0 // pred_check_branch
    %491 = sbr.rel (0) target = $region25
  $region24: #{forward.22} parent=0 // pred_region
    _
  $region25: #{forward.22} parent=0 // pred_fallthru
    _
  // Predicated region
  $region26: #{forward.22} parent=0 // pred_check
    _
  $region27: #{forward.22} parent=0 // pred_check_branch
    %493 = sbr.rel (0) target = $region29
  $region28: #{forward.22} parent=0 // pred_region
    _
  $region29: #{forward.22} parent=0 // pred_fallthru
    _
  // Predicated region
  $region30: #{forward.22} parent=0 // pred_check
    _
  $region31: #{forward.22} parent=0 // pred_check_branch
    %495 = sbr.rel (0) target = $region33
  $region32: #{forward.22} parent=0 // pred_region
    _
  $region33: #{forward.22} parent=0 // pred_fallthru
    _
  // Predicated region
  $region34: #{forward.22} parent=0 // pred_check
    _
  $region35: #{forward.22} parent=0 // pred_check_branch
    %497 = sbr.rel (0) target = $region37
  $region36: #{forward.22} parent=0 // pred_region
    _
  $region37: #{forward.22} parent=0 // pred_fallthru
    _

// kernel: forward.23
$region0: #{forward.23}
  #allocation0 [shape = 'u32[]', space=smem, size = 0x4, offset = 0x4, fixed_abs, tag = 'smem constant byte address 0x4 - core index']
  #allocation1 [shape = 'u32[144,128]{1,0:T(1,128)}', space=vmem, size = 0x12000, scoped, tag = 'internal scratch']
  %s0 = inlined_call_operand.vmem [shape: bf16[128,128], index: 0, kind: input, shape index: {}]
  %s1 = inlined_call_operand.vmem [shape: f32[1,128], index: 1, kind: input, shape index: {}]
  %s2 = inlined_call_operand.vmem [shape: f32[1,128], index: 2, kind: input, shape index: {}]
  %s3 = inlined_call_operand.vmem [shape: bf16[128,128], index: 3, kind: output, shape index: {}]
  %s4 = sld [smem:[#allocation0]]
  $region22: #{forward.23} parent=0
    _
  %s6 = ssub.s32 1, %s4
  %s7 = scalar_select 0, %s6, %s4
  // Predicated region
  $region2: #{forward.23} parent=0 // pred_check
    _
  $region3: #{forward.23} parent=0 // pred_check_branch
    %9 = sbr.rel (0) target = $region5
  $region4: #{forward.23} parent=0 // pred_region
    _
  $region5: #{forward.23} parent=0 // pred_fallthru
    _
  // Predicated region
  $region6: #{forward.23} parent=0 // pred_check
    _
  $region7: #{forward.23} parent=0 // pred_check_branch
    %11 = sbr.rel (0) target = $region9
  $region8: #{forward.23} parent=0 // pred_region
    _
  $region9: #{forward.23} parent=0 // pred_fallthru
    _
  // Predicated region
  $region10: #{forward.23} parent=0 // pred_check
    _
  $region11: #{forward.23} parent=0 // pred_check_branch
    %13 = sbr.rel (0) target = $region13
  $region12: #{forward.23} parent=0 // pred_region
    _
  $region13: #{forward.23} parent=0 // pred_fallthru
    _
  %v14 = vld [vmem:[%s0] sm:$0xf]
  %v15 = vld [vmem:[%s0 + $0x4] sm:$0xf]
  %v16 = vld [vmem:[%s0 + $0x8] sm:$0xf]
  %v17 = vld [vmem:[%s0 + $0xc] sm:$0xf]
  %v18 = vld [vmem:[%s0 + $0x10] sm:$0xf]
  %v19 = vld [vmem:[%s0 + $0x14] sm:$0xf]
  %v20 = vld [vmem:[%s0 + $0x18] sm:$0xf]
  %v21 = vld [vmem:[%s0 + $0x1c] sm:$0xf]
  %v22 = vld [vmem:[%s0 + $0x20] sm:$0xf]
  %v23 = vld [vmem:[%s0 + $0x24] sm:$0xf]
  %v24 = vld [vmem:[%s0 + $0x28] sm:$0xf]
  %v25 = vld [vmem:[%s0 + $0x2c] sm:$0xf]
  %v26 = vld [vmem:[%s0 + $0x30] sm:$0xf]
  %v27 = vld [vmem:[%s0 + $0x34] sm:$0xf]
  %v28 = vld [vmem:[%s0 + $0x38] sm:$0xf]
  %v29 = vld [vmem:[%s0 + $0x3c] sm:$0xf]
  %v30 = vunpack.c.l.bf16 %v14
  %v31 = vunpack.c.l.bf16 %v15
  %v32 = vunpack.c.l.bf16 %v16
  %v33 = vunpack.c.l.bf16 %v17
  %v34 = vunpack.c.l.bf16 %v18
  %v35 = vunpack.c.l.bf16 %v19
  %v36 = vunpack.c.l.bf16 %v20
  %v37 = vunpack.c.l.bf16 %v21
  %v38 = vunpack.c.l.bf16 %v22
  %v39 = vunpack.c.l.bf16 %v23
  %v40 = vunpack.c.l.bf16 %v24
  %v41 = vunpack.c.l.bf16 %v25
  %v42 = vunpack.c.l.bf16 %v26
  %v43 = vunpack.c.l.bf16 %v27
  %v44 = vunpack.c.l.bf16 %v28
  %v45 = vunpack.c.l.bf16 %v29
  %v46 = vld [vmem:[%s1] sm:$0x1]
  %v48 = vlaneseq
  %v49 = vshrl.u32 %v48, 7
  %v50 = vsub.s32 0, %v49
  %v51 = vrot.slane %v46, %v50
  %v53 = vmul.f32 %v30, %v51
  %v54 = vmul.f32 %v31, %v51
  %v55 = vmul.f32 %v32, %v51
  %v56 = vmul.f32 %v33, %v51
  %v57 = vmul.f32 %v34, %v51
  %v58 = vmul.f32 %v35, %v51
  %v59 = vmul.f32 %v36, %v51
  %v60 = vmul.f32 %v37, %v51
  %v61 = vmul.f32 %v38, %v51
  %v62 = vmul.f32 %v39, %v51
  %v63 = vmul.f32 %v40, %v51
  %v64 = vmul.f32 %v41, %v51
  %v65 = vmul.f32 %v42, %v51
  %v66 = vmul.f32 %v43, %v51
  %v67 = vmul.f32 %v44, %v51
  %v68 = vmul.f32 %v45, %v51
  %v69 = vld [vmem:[%s2] sm:$0x1]
  %v71 = vlaneseq
  %v72 = vshrl.u32 %v71, 7
  %v73 = vsub.s32 0, %v72
  %v74 = vrot.slane %v69, %v73
  %v76 = vadd.f32 %v53, %v74
  %v77 = vadd.f32 %v54, %v74
  %v78 = vadd.f32 %v55, %v74
  %v79 = vadd.f32 %v56, %v74
  %v80 = vadd.f32 %v57, %v74
  %v81 = vadd.f32 %v58, %v74
  %v82 = vadd.f32 %v59, %v74
  %v83 = vadd.f32 %v60, %v74
  %v84 = vadd.f32 %v61, %v74
  %v85 = vadd.f32 %v62, %v74
  %v86 = vadd.f32 %v63, %v74
  %v87 = vadd.f32 %v64, %v74
  %v88 = vadd.f32 %v65, %v74
  %v89 = vadd.f32 %v66, %v74
  %v90 = vadd.f32 %v67, %v74
  %v91 = vadd.f32 %v68, %v74
  %v92 = vmax.f32 %v76, 0.0
  %v93 = vmax.f32 %v77, 0.0
  %v94 = vmax.f32 %v78, 0.0
  %v95 = vmax.f32 %v79, 0.0
  %v96 = vmax.f32 %v80, 0.0
  %v97 = vmax.f32 %v81, 0.0
  %v98 = vmax.f32 %v82, 0.0
  %v99 = vmax.f32 %v83, 0.0
  %v100 = vmax.f32 %v84, 0.0
  %v101 = vmax.f32 %v85, 0.0
  %v102 = vmax.f32 %v86, 0.0
  %v103 = vmax.f32 %v87, 0.0
  %v104 = vmax.f32 %v88, 0.0
  %v105 = vmax.f32 %v89, 0.0
  %v106 = vmax.f32 %v90, 0.0
  %v107 = vmax.f32 %v91, 0.0
  %v108 = vpack.c.bf16 %v93, %v92
  %v109 = vpack.c.bf16 %v95, %v94
  %v110 = vpack.c.bf16 %v97, %v96
  %v111 = vpack.c.bf16 %v99, %v98
  %v112 = vpack.c.bf16 %v101, %v100
  %v113 = vpack.c.bf16 %v103, %v102
  %v114 = vpack.c.bf16 %v105, %v104
  %v115 = vpack.c.bf16 %v107, %v106
  %v124 = vunpack.c.l.b16 %v108
  %v125 = vunpack.c.h.b16 %v108
  %v126 = vunpack.c.l.b16 %v109
  %v127 = vunpack.c.h.b16 %v109
  %v128 = vunpack.c.l.b16 %v110
  %v129 = vunpack.c.h.b16 %v110
  %v130 = vunpack.c.l.b16 %v111
  %v131 = vunpack.c.h.b16 %v111
  %v132 = vunpack.c.l.b16 %v112
  %v133 = vunpack.c.h.b16 %v112
  %v134 = vunpack.c.l.b16 %v113
  %v135 = vunpack.c.h.b16 %v113
  %v136 = vunpack.c.l.b16 %v114
  %v137 = vunpack.c.h.b16 %v114
  %v138 = vunpack.c.l.b16 %v115
  %v139 = vunpack.c.h.b16 %v115
  %v140 = vpack.c.b16 %v124, %v124
  %v141 = vpack.c.b16 %v125, %v125
  %v142 = vpack.c.b16 %v126, %v126
  %v143 = vpack.c.b16 %v127, %v127
  %v144 = vpack.c.b16 %v128, %v128
  %v145 = vpack.c.b16 %v129, %v129
  %v146 = vpack.c.b16 %v130, %v130
  %v147 = vpack.c.b16 %v131, %v131
  %v148 = vpack.c.b16 %v132, %v132
  %v149 = vpack.c.b16 %v133, %v133
  %v150 = vpack.c.b16 %v134, %v134
  %v151 = vpack.c.b16 %v135, %v135
  %v152 = vpack.c.b16 %v136, %v136
  %v153 = vpack.c.b16 %v137, %v137
  %v154 = vpack.c.b16 %v138, %v138
  %v155 = vpack.c.b16 %v139, %v139
  %172 = vst [vmem:[%s3] sm:$0xf] %v140
  %173 = vst [vmem:[%s3 + $0x4] sm:$0xf] %v141
  %174 = vst [vmem:[%s3 + $0x8] sm:$0xf] %v142
  %175 = vst [vmem:[%s3 + $0xc] sm:$0xf] %v143
  %176 = vst [vmem:[%s3 + $0x10] sm:$0xf] %v144
  %177 = vst [vmem:[%s3 + $0x14] sm:$0xf] %v145
  %178 = vst [vmem:[%s3 + $0x18] sm:$0xf] %v146
  %179 = vst [vmem:[%s3 + $0x1c] sm:$0xf] %v147
  %180 = vst [vmem:[%s3 + $0x20] sm:$0xf] %v148
  %181 = vst [vmem:[%s3 + $0x24] sm:$0xf] %v149
  %182 = vst [vmem:[%s3 + $0x28] sm:$0xf] %v150
  %183 = vst [vmem:[%s3 + $0x2c] sm:$0xf] %v151
  %184 = vst [vmem:[%s3 + $0x30] sm:$0xf] %v152
  %185 = vst [vmem:[%s3 + $0x34] sm:$0xf] %v153
  %186 = vst [vmem:[%s3 + $0x38] sm:$0xf] %v154
  %187 = vst [vmem:[%s3 + $0x3c] sm:$0xf] %v155
  // Predicated region
  $region14: #{forward.23} parent=0 // pred_check
    _
  $region15: #{forward.23} parent=0 // pred_check_branch
    %189 = sbr.rel (0) target = $region17
  $region16: #{forward.23} parent=0 // pred_region
    _
  $region17: #{forward.23} parent=0 // pred_fallthru
    _
  // Predicated region
  $region18: #{forward.23} parent=0 // pred_check
    _
  $region19: #{forward.23} parent=0 // pred_check_branch
    %191 = sbr.rel (0) target = $region21
  $region20: #{forward.23} parent=0 // pred_region
    _
  $region21: #{forward.23} parent=0 // pred_fallthru
    _

// kernel: forward.26
$region0: #{forward.26}
  #allocation0 [shape = 'u32[]', space=smem, size = 0x4, offset = 0x4, fixed_abs, tag = 'smem constant byte address 0x4 - core index']
  #allocation1 [shape = 'u32[144,128]{1,0:T(1,128)}', space=vmem, size = 0x12000, scoped, tag = 'internal scratch']
  %s0 = inlined_call_operand.vmem [shape: bf16[128,384], index: 0, kind: input, shape index: {}]
  %s1 = inlined_call_operand.vmem [shape: bf16[384,128], index: 1, kind: input, shape index: {}]
  %s2 = inlined_call_operand.vmem [shape: f32[1,128], index: 2, kind: input, shape index: {}]
  %s3 = inlined_call_operand.vmem [shape: bf16[128,128], index: 3, kind: output, shape index: {0}]
  %s4 = inlined_call_operand.vmem [shape: f32[1,1,128], index: 4, kind: output, shape index: {1}]
  %s5 = inlined_call_operand.vmem [shape: f32[1,1,128], index: 5, kind: output, shape index: {2}]
  %6 = xla_tuple %s3, %s4, %s5
  %s7 = sld [smem:[#allocation0]]
  $region38: #{forward.26} parent=0
    _
  %s9 = ssub.s32 1, %s7
  %s10 = scalar_select 0, %s9, %s7
  // Predicated region
  $region2: #{forward.26} parent=0 // pred_check
    _
  $region3: #{forward.26} parent=0 // pred_check_branch
    %12 = sbr.rel (0) target = $region5
  $region4: #{forward.26} parent=0 // pred_region
    _
  $region5: #{forward.26} parent=0 // pred_fallthru
    _
  // Predicated region
  $region6: #{forward.26} parent=0 // pred_check
    _
  $region7: #{forward.26} parent=0 // pred_check_branch
    %14 = sbr.rel (0) target = $region9
  $region8: #{forward.26} parent=0 // pred_region
    _
  $region9: #{forward.26} parent=0 // pred_fallthru
    _
  // Predicated region
  $region10: #{forward.26} parent=0 // pred_check
    _
  $region11: #{forward.26} parent=0 // pred_check_branch
    %16 = sbr.rel (0) target = $region13
  $region12: #{forward.26} parent=0 // pred_region
    _
  $region13: #{forward.26} parent=0 // pred_fallthru
    _
  %v18 = vld [vmem:[%s0] sm:$0xff]
  %v19 = vld [vmem:[%s0 + $0x8] sm:$0xf]
  %v20 = vld [vmem:[%s0 + $0xc] sm:$0xff]
  %v21 = vld [vmem:[%s0 + $0x14] sm:$0xf]
  %v22 = vld [vmem:[%s0 + $0x18] sm:$0xff]
  %v23 = vld [vmem:[%s0 + $0x20] sm:$0xf]
  %v24 = vld [vmem:[%s0 + $0x24] sm:$0xff]
  %v25 = vld [vmem:[%s0 + $0x2c] sm:$0xf]
  %v26 = vld [vmem:[%s0 + $0x30] sm:$0xff]
  %v27 = vld [vmem:[%s0 + $0x38] sm:$0xf]
  %v28 = vld [vmem:[%s0 + $0x3c] sm:$0xff]
  %v29 = vld [vmem:[%s0 + $0x44] sm:$0xf]
  %v30 = vld [vmem:[%s0 + $0x48] sm:$0xff]
  %v31 = vld [vmem:[%s0 + $0x50] sm:$0xf]
  %v32 = vld [vmem:[%s0 + $0x54] sm:$0xff]
  %v33 = vld [vmem:[%s0 + $0x5c] sm:$0xf]
  %v34 = vld [vmem:[%s0 + $0x60] sm:$0xff]
  %v35 = vld [vmem:[%s0 + $0x68] sm:$0xf]
  %v36 = vld [vmem:[%s0 + $0x6c] sm:$0xff]
  %v37 = vld [vmem:[%s0 + $0x74] sm:$0xf]
  %v38 = vld [vmem:[%s0 + $0x78] sm:$0xff]
  %v39 = vld [vmem:[%s0 + $0x80] sm:$0xf]
  %v40 = vld [vmem:[%s0 + $0x84] sm:$0xff]
  %v41 = vld [vmem:[%s0 + $0x8c] sm:$0xf]
  %v42 = vld [vmem:[%s0 + $0x90] sm:$0xff]
  %v43 = vld [vmem:[%s0 + $0x98] sm:$0xf]
  %v44 = vld [vmem:[%s0 + $0x9c] sm:$0xff]
  %v45 = vld [vmem:[%s0 + $0xa4] sm:$0xf]
  %v46 = vld [vmem:[%s0 + $0xa8] sm:$0xff]
  %v47 = vld [vmem:[%s0 + $0xb0] sm:$0xf]
  %v48 = vld [vmem:[%s0 + $0xb4] sm:$0xff]
  %v49 = vld [vmem:[%s0 + $0xbc] sm:$0xf]
  %v50 = vld [vmem:[%s1] sm:$0xf]
  %v51 = vld [vmem:[%s1 + $0x4] sm:$0xf]
  %v52 = vld [vmem:[%s1 + $0x8] sm:$0xf]
  %v53 = vld [vmem:[%s1 + $0xc] sm:$0xf]
  %v54 = vld [vmem:[%s1 + $0x10] sm:$0xf]
  %v55 = vld [vmem:[%s1 + $0x14] sm:$0xf]
  %v56 = vld [vmem:[%s1 + $0x18] sm:$0xf]
  %v57 = vld [vmem:[%s1 + $0x1c] sm:$0xf]
  %v58 = vld [vmem:[%s1 + $0x20] sm:$0xf]
  %v59 = vld [vmem:[%s1 + $0x24] sm:$0xf]
  %v60 = vld [vmem:[%s1 + $0x28] sm:$0xf]
  %v61 = vld [vmem:[%s1 + $0x2c] sm:$0xf]
  %v62 = vld [vmem:[%s1 + $0x30] sm:$0xf]
  %v63 = vld [vmem:[%s1 + $0x34] sm:$0xf]
  %v64 = vld [vmem:[%s1 + $0x38] sm:$0xf]
  %v65 = vld [vmem:[%s1 + $0x3c] sm:$0xf]
  %v66 = vld [vmem:[%s1 + $0x40] sm:$0xf]
  %v67 = vld [vmem:[%s1 + $0x44] sm:$0xf]
  %v68 = vld [vmem:[%s1 + $0x48] sm:$0xf]
  %v69 = vld [vmem:[%s1 + $0x4c] sm:$0xf]
  %v70 = vld [vmem:[%s1 + $0x50] sm:$0xf]
  %v71 = vld [vmem:[%s1 + $0x54] sm:$0xf]
  %v72 = vld [vmem:[%s1 + $0x58] sm:$0xf]
  %v73 = vld [vmem:[%s1 + $0x5c] sm:$0xf]
  %v74 = vld [vmem:[%s1 + $0x60] sm:$0xf]
  %v75 = vld [vmem:[%s1 + $0x64] sm:$0xf]
  %v76 = vld [vmem:[%s1 + $0x68] sm:$0xf]
  %v77 = vld [vmem:[%s1 + $0x6c] sm:$0xf]
  %v78 = vld [vmem:[%s1 + $0x70] sm:$0xf]
  %v79 = vld [vmem:[%s1 + $0x74] sm:$0xf]
  %v80 = vld [vmem:[%s1 + $0x78] sm:$0xf]
  %v81 = vld [vmem:[%s1 + $0x7c] sm:$0xf]
  %v82 = vld [vmem:[%s1 + $0x80] sm:$0xf]
  %v83 = vld [vmem:[%s1 + $0x84] sm:$0xf]
  %v84 = vld [vmem:[%s1 + $0x88] sm:$0xf]
  %v85 = vld [vmem:[%s1 + $0x8c] sm:$0xf]
  %v86 = vld [vmem:[%s1 + $0x90] sm:$0xf]
  %v87 = vld [vmem:[%s1 + $0x94] sm:$0xf]
  %v88 = vld [vmem:[%s1 + $0x98] sm:$0xf]
  %v89 = vld [vmem:[%s1 + $0x9c] sm:$0xf]
  %v90 = vld [vmem:[%s1 + $0xa0] sm:$0xf]
  %v91 = vld [vmem:[%s1 + $0xa4] sm:$0xf]
  %v92 = vld [vmem:[%s1 + $0xa8] sm:$0xf]
  %v93 = vld [vmem:[%s1 + $0xac] sm:$0xf]
  %v94 = vld [vmem:[%s1 + $0xb0] sm:$0xf]
  %v95 = vld [vmem:[%s1 + $0xb4] sm:$0xf]
  %v96 = vld [vmem:[%s1 + $0xb8] sm:$0xf]
  %v97 = vld [vmem:[%s1 + $0xbc] sm:$0xf]
  %v98 = vld [vmem:[%s2] sm:$0x1]
  %v100 = vlaneseq
  %v101 = vshrl.u32 %v100, 7
  %v102 = vsub.s32 0, %v101
  %v103 = vrot.slane %v98, %v102
  %v137 = vunpack.c.l.b16 %v18
  %v138 = vunpack.c.h.b16 %v18
  %v139 = vunpack.c.l.b16 %v19
  %v140 = vunpack.c.l.b16 %v20
  %v141 = vunpack.c.h.b16 %v20
  %v142 = vunpack.c.l.b16 %v21
  %v143 = vunpack.c.l.b16 %v22
  %v144 = vunpack.c.h.b16 %v22
  %v145 = vunpack.c.l.b16 %v23
  %v146 = vunpack.c.l.b16 %v24
  %v147 = vunpack.c.h.b16 %v24
  %v148 = vunpack.c.l.b16 %v25
  %v149 = vunpack.c.l.b16 %v26
  %v150 = vunpack.c.h.b16 %v26
  %v151 = vunpack.c.l.b16 %v27
  %v152 = vunpack.c.l.b16 %v28
  %v153 = vunpack.c.h.b16 %v28
  %v154 = vunpack.c.l.b16 %v29
  %v155 = vunpack.c.l.b16 %v30
  %v156 = vunpack.c.h.b16 %v30
  %v157 = vunpack.c.l.b16 %v31
  %v158 = vunpack.c.l.b16 %v32
  %v159 = vunpack.c.h.b16 %v32
  %v160 = vunpack.c.l.b16 %v33
  %v161 = vunpack.c.l.b16 %v34
  %v162 = vunpack.c.h.b16 %v34
  %v163 = vunpack.c.l.b16 %v35
  %v164 = vunpack.c.l.b16 %v36
  %v165 = vunpack.c.h.b16 %v36
  %v166 = vunpack.c.l.b16 %v37
  %v167 = vunpack.c.l.b16 %v38
  %v168 = vunpack.c.h.b16 %v38
  %v169 = vunpack.c.l.b16 %v39
  %v170 = vunpack.c.l.b16 %v40
  %v171 = vunpack.c.h.b16 %v40
  %v172 = vunpack.c.l.b16 %v41
  %v173 = vunpack.c.l.b16 %v42
  %v174 = vunpack.c.h.b16 %v42
  %v175 = vunpack.c.l.b16 %v43
  %v176 = vunpack.c.l.b16 %v44
  %v177 = vunpack.c.h.b16 %v44
  %v178 = vunpack.c.l.b16 %v45
  %v179 = vunpack.c.l.b16 %v46
  %v180 = vunpack.c.h.b16 %v46
  %v181 = vunpack.c.l.b16 %v47
  %v182 = vunpack.c.l.b16 %v48
  %v183 = vunpack.c.h.b16 %v48
  %v184 = vunpack.c.l.b16 %v49
  %v185 = vpack.c.b16 %v140, %v137
  %v186 = vpack.c.b16 %v141, %v138
  %v187 = vpack.c.b16 %v142, %v139
  %v188 = vpack.c.b16 %v146, %v143
  %v189 = vpack.c.b16 %v147, %v144
  %v190 = vpack.c.b16 %v148, %v145
  %v191 = vpack.c.b16 %v152, %v149
  %v192 = vpack.c.b16 %v153, %v150
  %v193 = vpack.c.b16 %v154, %v151
  %v194 = vpack.c.b16 %v158, %v155
  %v195 = vpack.c.b16 %v159, %v156
  %v196 = vpack.c.b16 %v160, %v157
  %v197 = vpack.c.b16 %v164, %v161
  %v198 = vpack.c.b16 %v165, %v162
  %v199 = vpack.c.b16 %v166, %v163
  %v200 = vpack.c.b16 %v170, %v167
  %v201 = vpack.c.b16 %v171, %v168
  %v202 = vpack.c.b16 %v172, %v169
  %v203 = vpack.c.b16 %v176, %v173
  %v204 = vpack.c.b16 %v177, %v174
  %v205 = vpack.c.b16 %v178, %v175
  %v206 = vpack.c.b16 %v182, %v179
  %v207 = vpack.c.b16 %v183, %v180
  %v208 = vpack.c.b16 %v184, %v181
  %v281 = vunpack.c.l.b16 %v50
  %v282 = vunpack.c.l.b16 %v51
  %v283 = vunpack.c.l.b16 %v52
  %v284 = vunpack.c.l.b16 %v53
  %v285 = vunpack.c.l.b16 %v54
  %v286 = vunpack.c.l.b16 %v55
  %v287 = vunpack.c.l.b16 %v56
  %v288 = vunpack.c.l.b16 %v57
  %v289 = vunpack.c.l.b16 %v58
  %v290 = vunpack.c.l.b16 %v59
  %v291 = vunpack.c.l.b16 %v60
  %v292 = vunpack.c.l.b16 %v61
  %v293 = vunpack.c.l.b16 %v62
  %v294 = vunpack.c.l.b16 %v63
  %v295 = vunpack.c.l.b16 %v64
  %v296 = vunpack.c.l.b16 %v65
  %v297 = vunpack.c.l.b16 %v66
  %v298 = vunpack.c.l.b16 %v67
  %v299 = vunpack.c.l.b16 %v68
  %v300 = vunpack.c.l.b16 %v69
  %v301 = vunpack.c.l.b16 %v70
  %v302 = vunpack.c.l.b16 %v71
  %v303 = vunpack.c.l.b16 %v72
  %v304 = vunpack.c.l.b16 %v73
  %v305 = vunpack.c.l.b16 %v74
  %v306 = vunpack.c.l.b16 %v75
  %v307 = vunpack.c.l.b16 %v76
  %v308 = vunpack.c.l.b16 %v77
  %v309 = vunpack.c.l.b16 %v78
  %v310 = vunpack.c.l.b16 %v79
  %v311 = vunpack.c.l.b16 %v80
  %v312 = vunpack.c.l.b16 %v81
  %v313 = vunpack.c.l.b16 %v82
  %v314 = vunpack.c.l.b16 %v83
  %v315 = vunpack.c.l.b16 %v84
  %v316 = vunpack.c.l.b16 %v85
  %v317 = vunpack.c.l.b16 %v86
  %v318 = vunpack.c.l.b16 %v87
  %v319 = vunpack.c.l.b16 %v88
  %v320 = vunpack.c.l.b16 %v89
  %v321 = vunpack.c.l.b16 %v90
  %v322 = vunpack.c.l.b16 %v91
  %v323 = vunpack.c.l.b16 %v92
  %v324 = vunpack.c.l.b16 %v93
  %v325 = vunpack.c.l.b16 %v94
  %v326 = vunpack.c.l.b16 %v95
  %v327 = vunpack.c.l.b16 %v96
  %v328 = vunpack.c.l.b16 %v97
  %v329 = vpack.c.b16 %v282, %v281
  %v330 = vpack.c.b16 %v284, %v283
  %v331 = vpack.c.b16 %v286, %v285
  %v332 = vpack.c.b16 %v288, %v287
  %v333 = vpack.c.b16 %v290, %v289
  %v334 = vpack.c.b16 %v292, %v291
  %v335 = vpack.c.b16 %v294, %v293
  %v336 = vpack.c.b16 %v296, %v295
  %v337 = vpack.c.b16 %v298, %v297
  %v338 = vpack.c.b16 %v300, %v299
  %v339 = vpack.c.b16 %v302, %v301
  %v340 = vpack.c.b16 %v304, %v303
  %v341 = vpack.c.b16 %v306, %v305
  %v342 = vpack.c.b16 %v308, %v307
  %v343 = vpack.c.b16 %v310, %v309
  %v344 = vpack.c.b16 %v312, %v311
  %v345 = vpack.c.b16 %v314, %v313
  %v346 = vpack.c.b16 %v316, %v315
  %v347 = vpack.c.b16 %v318, %v317
  %v348 = vpack.c.b16 %v320, %v319
  %v349 = vpack.c.b16 %v322, %v321
  %v350 = vpack.c.b16 %v324, %v323
  %v351 = vpack.c.b16 %v326, %v325
  %v352 = vpack.c.b16 %v328, %v327
  %377 = vmatprep.subr.bf16.mxu0 0
  %378 = vmatpush1.bf16.msra.mxu0 %v329
  %379 = vmatprep.subr.bf16.mxu0 0
  %380 = vmatpush1.bf16.msra.mxu0 %v330
  %381 = vmatprep.subr.bf16.mxu0 0
  %382 = vmatpush1.bf16.msra.mxu0 %v331
  %383 = vmatprep.subr.bf16.mxu0 0
  %384 = vmatpush1.bf16.msra.mxu0 %v332
  %385 = vmatprep.subr.bf16.mxu0 0
  %386 = vmatpush1.bf16.msra.mxu0 %v333
  %387 = vmatprep.subr.bf16.mxu0 0
  %388 = vmatpush1.bf16.msra.mxu0 %v334
  %389 = vmatprep.subr.bf16.mxu0 0
  %390 = vmatpush1.bf16.msra.mxu0 %v335
  %391 = vmatprep.subr.bf16.mxu0 0
  %392 = vmatpush1.bf16.msra.mxu0 %v336
  %393 = vmatprep.subr.bf16.mxu0 0
  %394 = vmatpush1.bf16.msra.mxu0 %v337
  %395 = vmatprep.subr.bf16.mxu0 0
  %396 = vmatpush1.bf16.msra.mxu0 %v338
  %397 = vmatprep.subr.bf16.mxu0 0
  %398 = vmatpush1.bf16.msra.mxu0 %v339
  %399 = vmatprep.subr.bf16.mxu0 0
  %400 = vmatpush1.bf16.msra.mxu0 %v340
  %401 = vmatprep.subr.bf16.mxu0 0
  %402 = vmatpush1.bf16.msra.mxu0 %v341
  %403 = vmatprep.subr.bf16.mxu0 0
  %404 = vmatpush1.bf16.msra.mxu0 %v342
  %405 = vmatprep.subr.bf16.mxu0 0
  %406 = vmatpush1.bf16.msra.mxu0 %v343
  %407 = vmatprep.subr.bf16.mxu0 0
  %408 = vmatpush1.bf16.msra.mxu0 %v344
  %409 = vmatprep.mubr.bf16.mxu0 %v186
  %410 = vmatmul.mubr.bf16.gmra.mrb[0].mxu0 %v185
  %v411 = vpop.f32.mrb[0].mxu0
  %v412 = vadd.f32 %v103, %v411
  %v413 = vpop.f32.mrb[0].mxu0
  %v414 = vpop.f32.mrb[0].mxu0
  %v415 = vadd.f32 %v103, %v414
  %v416 = vpop.f32.mrb[0].mxu0
  %417 = vmatprep.mubr.bf16.mxu0 %v189
  %418 = vmatmul.mubr.bf16.gmra.mrb[0].mxu0 %v188
  %v419 = vpop.f32.mrb[0].mxu0
  %v420 = vadd.f32 %v103, %v419
  %v421 = vpop.f32.mrb[0].mxu0
  %v422 = vpop.f32.mrb[0].mxu0
  %v423 = vadd.f32 %v103, %v422
  %v424 = vpop.f32.mrb[0].mxu0
  %425 = vmatprep.mubr.bf16.mxu0 %v192
  %426 = vmatmul.mubr.bf16.gmra.mrb[0].mxu0 %v191
  %v427 = vpop.f32.mrb[0].mxu0
  %v428 = vadd.f32 %v103, %v427
  %v429 = vpop.f32.mrb[0].mxu0
  %v430 = vpop.f32.mrb[0].mxu0
  %v431 = vadd.f32 %v103, %v430
  %v432 = vpop.f32.mrb[0].mxu0
  %433 = vmatprep.mubr.bf16.mxu0 %v195
  %434 = vmatmul.mubr.bf16.gmra.mrb[0].mxu0 %v194
  %v435 = vpop.f32.mrb[0].mxu0
  %v436 = vadd.f32 %v103, %v435
  %v437 = vpop.f32.mrb[0].mxu0
  %v438 = vpop.f32.mrb[0].mxu0
  %v439 = vadd.f32 %v103, %v438
  %v440 = vpop.f32.mrb[0].mxu0
  %441 = vmatprep.mubr.bf16.mxu0 %v198
  %442 = vmatmul.mubr.bf16.gmra.mrb[0].mxu0 %v197
  %v443 = vpop.f32.mrb[0].mxu0
  %v444 = vadd.f32 %v103, %v443
  %v445 = vpop.f32.mrb[0].mxu0
  %v446 = vpop.f32.mrb[0].mxu0
  %v447 = vadd.f32 %v103, %v446
  %v448 = vpop.f32.mrb[0].mxu0
  %449 = vmatprep.mubr.bf16.mxu0 %v201
  %450 = vmatmul.mubr.bf16.gmra.mrb[0].mxu0 %v200
  %v451 = vpop.f32.mrb[0].mxu0
  %v452 = vadd.f32 %v103, %v451
  %v453 = vpop.f32.mrb[0].mxu0
  %v454 = vpop.f32.mrb[0].mxu0
  %v455 = vadd.f32 %v103, %v454
  %v456 = vpop.f32.mrb[0].mxu0
  %457 = vmatprep.mubr.bf16.mxu0 %v204
  %458 = vmatmul.mubr.bf16.gmra.mrb[0].mxu0 %v203
  %v459 = vpop.f32.mrb[0].mxu0
  %v460 = vadd.f32 %v103, %v459
  %v461 = vpop.f32.mrb[0].mxu0
  %v462 = vpop.f32.mrb[0].mxu0
  %v463 = vadd.f32 %v103, %v462
  %v464 = vpop.f32.mrb[0].mxu0
  %465 = vmatprep.mubr.bf16.mxu0 %v207
  %466 = vmatmul.mubr.bf16.gmra.mrb[0].mxu0 %v206
  %v467 = vpop.f32.mrb[0].mxu0
  %v468 = vadd.f32 %v103, %v467
  %v469 = vpop.f32.mrb[0].mxu0
  %v470 = vpop.f32.mrb[0].mxu0
  %v471 = vadd.f32 %v103, %v470
  %v472 = vpop.f32.mrb[0].mxu0
  %473 = vdwg.mxu0
  %474 = vmatprep.subr.bf16.mxu0 0
  %475 = vmatpush1.bf16.msra.mxu0 %v345
  %476 = vmatprep.subr.bf16.mxu0 0
  %477 = vmatpush1.bf16.msra.mxu0 %v346
  %478 = vmatprep.subr.bf16.mxu0 0
  %479 = vmatpush1.bf16.msra.mxu0 %v347
  %480 = vmatprep.subr.bf16.mxu0 0
  %481 = vmatpush1.bf16.msra.mxu0 %v348
  %482 = vmatprep.subr.bf16.mxu0 0
  %483 = vmatpush1.bf16.msra.mxu0 %v349
  %484 = vmatprep.subr.bf16.mxu0 0
  %485 = vmatpush1.bf16.msra.mxu0 %v350
  %486 = vmatprep.subr.bf16.mxu0 0
  %487 = vmatpush1.bf16.msra.mxu0 %v351
  %488 = vmatprep.subr.bf16.mxu0 0
  %489 = vmatpush1.bf16.msra.mxu0 %v352
  %490 = vmatprep.subr.bf16.mxu0 0
  %491 = vmatpush1.bf16.msra.mxu0 0
  %492 = vmatprep.subr.bf16.mxu0 0
  %493 = vmatpush1.bf16.msra.mxu0 0
  %494 = vmatprep.subr.bf16.mxu0 0
  %495 = vmatpush1.bf16.msra.mxu0 0
  %496 = vmatprep.subr.bf16.mxu0 0
  %497 = vmatpush1.bf16.msra.mxu0 0
  %498 = vmatprep.subr.bf16.mxu0 0
  %499 = vmatpush1.bf16.msra.mxu0 0
  %500 = vmatprep.subr.bf16.mxu0 0
  %501 = vmatpush1.bf16.msra.mxu0 0
  %502 = vmatprep.subr.bf16.mxu0 0
  %503 = vmatpush1.bf16.msra.mxu0 0
  %504 = vmatprep.subr.bf16.mxu0 0
  %505 = vmatpush1.bf16.msra.mxu0 0
  %506 = vmatprep.mubr.bf16.mxu0 0
  %507 = vmatmul.mubr.bf16.gmra.mrb[0].mxu0 %v187
  %v508 = vpop.f32.mrb[0].mxu0
  %v509 = vadd.f32 %v412, %v508
  %v510 = vpop.f32.mrb[0].mxu0
  %v511 = vpop.f32.mrb[0].mxu0
  %v512 = vadd.f32 %v415, %v511
  %v513 = vpop.f32.mrb[0].mxu0
  %514 = vmatprep.mubr.bf16.mxu0 0
  %515 = vmatmul.mubr.bf16.gmra.mrb[0].mxu0 %v190
  %v516 = vpop.f32.mrb[0].mxu0
  %v517 = vadd.f32 %v420, %v516
  %v518 = vpop.f32.mrb[0].mxu0
  %v519 = vpop.f32.mrb[0].mxu0
  %v520 = vadd.f32 %v423, %v519
  %v521 = vpop.f32.mrb[0].mxu0
  %522 = vmatprep.mubr.bf16.mxu0 0
  %523 = vmatmul.mubr.bf16.gmra.mrb[0].mxu0 %v193
  %v524 = vpop.f32.mrb[0].mxu0
  %v525 = vadd.f32 %v428, %v524
  %v526 = vpop.f32.mrb[0].mxu0
  %v527 = vpop.f32.mrb[0].mxu0
  %v528 = vadd.f32 %v431, %v527
  %v529 = vpop.f32.mrb[0].mxu0
  %530 = vmatprep.mubr.bf16.mxu0 0
  %531 = vmatmul.mubr.bf16.gmra.mrb[0].mxu0 %v196
  %v532 = vpop.f32.mrb[0].mxu0
  %v533 = vadd.f32 %v436, %v532
  %v534 = vpop.f32.mrb[0].mxu0
  %v535 = vpop.f32.mrb[0].mxu0
  %v536 = vadd.f32 %v439, %v535
  %v537 = vpop.f32.mrb[0].mxu0
  %538 = vmatprep.mubr.bf16.mxu0 0
  %539 = vmatmul.mubr.bf16.gmra.mrb[0].mxu0 %v199
  %v540 = vpop.f32.mrb[0].mxu0
  %v541 = vadd.f32 %v444, %v540
  %v542 = vpop.f32.mrb[0].mxu0
  %v543 = vpop.f32.mrb[0].mxu0
  %v544 = vadd.f32 %v447, %v543
  %v545 = vpop.f32.mrb[0].mxu0
  %546 = vmatprep.mubr.bf16.mxu0 0
  %547 = vmatmul.mubr.bf16.gmra.mrb[0].mxu0 %v202
  %v548 = vpop.f32.mrb[0].mxu0
  %v549 = vadd.f32 %v452, %v548
  %v550 = vpop.f32.mrb[0].mxu0
  %v551 = vpop.f32.mrb[0].mxu0
  %v552 = vadd.f32 %v455, %v551
  %v553 = vpop.f32.mrb[0].mxu0
  %554 = vmatprep.mubr.bf16.mxu0 0
  %555 = vmatmul.mubr.bf16.gmra.mrb[0].mxu0 %v205
  %v556 = vpop.f32.mrb[0].mxu0
  %v557 = vadd.f32 %v460, %v556
  %v558 = vpop.f32.mrb[0].mxu0
  %v559 = vpop.f32.mrb[0].mxu0
  %v560 = vadd.f32 %v463, %v559
  %v561 = vpop.f32.mrb[0].mxu0
  %562 = vmatprep.mubr.bf16.mxu0 0
  %563 = vmatmul.mubr.bf16.gmra.mrb[0].mxu0 %v208
  %v564 = vpop.f32.mrb[0].mxu0
  %v565 = vadd.f32 %v468, %v564
  %v566 = vpop.f32.mrb[0].mxu0
  %v567 = vpop.f32.mrb[0].mxu0
  %v568 = vadd.f32 %v471, %v567
  %v569 = vpop.f32.mrb[0].mxu0
  %570 = vdwg.mxu0
  %v571 = vpack.c.bf16 %v512, %v509
  %v572 = vpack.c.bf16 %v520, %v517
  %v573 = vpack.c.bf16 %v528, %v525
  %v574 = vpack.c.bf16 %v536, %v533
  %v575 = vpack.c.bf16 %v544, %v541
  %v576 = vpack.c.bf16 %v552, %v549
  %v577 = vpack.c.bf16 %v560, %v557
  %v578 = vpack.c.bf16 %v568, %v565
  %v587 = vunpack.c.l.b16 %v571
  %v588 = vunpack.c.h.b16 %v571
  %v589 = vunpack.c.l.b16 %v572
  %v590 = vunpack.c.h.b16 %v572
  %v591 = vunpack.c.l.b16 %v573
  %v592 = vunpack.c.h.b16 %v573
  %v593 = vunpack.c.l.b16 %v574
  %v594 = vunpack.c.h.b16 %v574
  %v595 = vunpack.c.l.b16 %v575
  %v596 = vunpack.c.h.b16 %v575
  %v597 = vunpack.c.l.b16 %v576
  %v598 = vunpack.c.h.b16 %v576
  %v599 = vunpack.c.l.b16 %v577
  %v600 = vunpack.c.h.b16 %v577
  %v601 = vunpack.c.l.b16 %v578
  %v602 = vunpack.c.h.b16 %v578
  %v603 = vpack.c.b16 %v587, %v587
  %v604 = vpack.c.b16 %v588, %v588
  %v605 = vpack.c.b16 %v589, %v589
  %v606 = vpack.c.b16 %v590, %v590
  %v607 = vpack.c.b16 %v591, %v591
  %v608 = vpack.c.b16 %v592, %v592
  %v609 = vpack.c.b16 %v593, %v593
  %v610 = vpack.c.b16 %v594, %v594
  %v611 = vpack.c.b16 %v595, %v595
  %v612 = vpack.c.b16 %v596, %v596
  %v613 = vpack.c.b16 %v597, %v597
  %v614 = vpack.c.b16 %v598, %v598
  %v615 = vpack.c.b16 %v599, %v599
  %v616 = vpack.c.b16 %v600, %v600
  %v617 = vpack.c.b16 %v601, %v601
  %v618 = vpack.c.b16 %v602, %v602
  %635 = vst [vmem:[%s3] sm:$0xf] %v603
  %636 = vst [vmem:[%s3 + $0x4] sm:$0xf] %v604
  %637 = vst [vmem:[%s3 + $0x8] sm:$0xf] %v605
  %638 = vst [vmem:[%s3 + $0xc] sm:$0xf] %v606
  %639 = vst [vmem:[%s3 + $0x10] sm:$0xf] %v607
  %640 = vst [vmem:[%s3 + $0x14] sm:$0xf] %v608
  %641 = vst [vmem:[%s3 + $0x18] sm:$0xf] %v609
  %642 = vst [vmem:[%s3 + $0x1c] sm:$0xf] %v610
  %643 = vst [vmem:[%s3 + $0x20] sm:$0xf] %v611
  %644 = vst [vmem:[%s3 + $0x24] sm:$0xf] %v612
  %645 = vst [vmem:[%s3 + $0x28] sm:$0xf] %v613
  %646 = vst [vmem:[%s3 + $0x2c] sm:$0xf] %v614
  %647 = vst [vmem:[%s3 + $0x30] sm:$0xf] %v615
  %648 = vst [vmem:[%s3 + $0x34] sm:$0xf] %v616
  %649 = vst [vmem:[%s3 + $0x38] sm:$0xf] %v617
  %650 = vst [vmem:[%s3 + $0x3c] sm:$0xf] %v618
  %s651 = smul.u32 0, 128
  %v652 = vlaneseq
  %v653 = vshrl.u32 %v652, 7
  %v654 = vadd.s32 %v653, 8
  %v655 = vadd.s32 %v653, 16
  %v656 = vadd.s32 %v653, 24
  %v657 = vadd.s32 %v653, 32
  %v658 = vadd.s32 %v653, 40
  %v659 = vadd.s32 %v653, 48
  %v660 = vadd.s32 %v653, 56
  %v661 = vadd.s32 %v653, 64
  %v662 = vadd.s32 %v653, 72
  %v663 = vadd.s32 %v653, 80
  %v664 = vadd.s32 %v653, 88
  %v665 = vadd.s32 %v653, 96
  %v666 = vadd.s32 %v653, 104
  %v667 = vadd.s32 %v653, 112
  %v668 = vadd.s32 %v653, 120
  %v669 = vstv %s651
  %v670 = vadd.s32 %v669, %v653
  %v671 = vadd.s32 %v669, %v654
  %v672 = vadd.s32 %v669, %v655
  %v673 = vadd.s32 %v669, %v656
  %v674 = vadd.s32 %v669, %v657
  %v675 = vadd.s32 %v669, %v658
  %v676 = vadd.s32 %v669, %v659
  %v677 = vadd.s32 %v669, %v660
  %v678 = vadd.s32 %v669, %v661
  %v679 = vadd.s32 %v669, %v662
  %v680 = vadd.s32 %v669, %v663
  %v681 = vadd.s32 %v669, %v664
  %v682 = vadd.s32 %v669, %v665
  %v683 = vadd.s32 %v669, %v666
  %v684 = vadd.s32 %v669, %v667
  %v685 = vadd.s32 %v669, %v668
  %vm686 = vcmp.lt.s32.totalorder %v670, 16
  %vm687 = vcmp.lt.s32.totalorder %v671, 16
  %vm688 = vcmp.lt.s32.totalorder %v672, 16
  %vm689 = vcmp.lt.s32.totalorder %v673, 16
  %vm690 = vcmp.lt.s32.totalorder %v674, 16
  %vm691 = vcmp.lt.s32.totalorder %v675, 16
  %vm692 = vcmp.lt.s32.totalorder %v676, 16
  %vm693 = vcmp.lt.s32.totalorder %v677, 16
  %vm694 = vcmp.lt.s32.totalorder %v678, 16
  %vm695 = vcmp.lt.s32.totalorder %v679, 16
  %vm696 = vcmp.lt.s32.totalorder %v680, 16
  %vm697 = vcmp.lt.s32.totalorder %v681, 16
  %vm698 = vcmp.lt.s32.totalorder %v682, 16
  %vm699 = vcmp.lt.s32.totalorder %v683, 16
  %vm700 = vcmp.lt.s32.totalorder %v684, 16
  %vm701 = vcmp.lt.s32.totalorder %v685, 16
  %v702 = vsel %vm686, %v509, 0.0
  %v703 = vsel %vm687, %v512, 0.0
  %v704 = vsel %vm688, %v517, 0.0
  %v705 = vsel %vm689, %v520, 0.0
  %v706 = vsel %vm690, %v525, 0.0
  %v707 = vsel %vm691, %v528, 0.0
  %v708 = vsel %vm692, %v533, 0.0
  %v709 = vsel %vm693, %v536, 0.0
  %v710 = vsel %vm694, %v541, 0.0
  %v711 = vsel %vm695, %v544, 0.0
  %v712 = vsel %vm696, %v549, 0.0
  %v713 = vsel %vm697, %v552, 0.0
  %v714 = vsel %vm698, %v557, 0.0
  %v715 = vsel %vm699, %v560, 0.0
  %v716 = vsel %vm700, %v565, 0.0
  %v717 = vsel %vm701, %v568, 0.0
  %v718 = vadd.f32 %v702, %v703
  %v719 = vadd.f32 %v718, %v704
  %v720 = vadd.f32 %v719, %v705
  %v721 = vadd.f32 %v720, %v706
  %v722 = vadd.f32 %v721, %v707
  %v723 = vadd.f32 %v722, %v708
  %v724 = vadd.f32 %v723, %v709
  %v725 = vadd.f32 %v724, %v710
  %v726 = vadd.f32 %v725, %v711
  %v727 = vadd.f32 %v726, %v712
  %v728 = vadd.f32 %v727, %v713
  %v729 = vadd.f32 %v728, %v714
  %v730 = vadd.f32 %v729, %v715
  %v731 = vadd.f32 %v730, %v716
  %v732 = vadd.f32 %v731, %v717
  %v733 = vrot.slane %v732, 4
  %v734 = vadd.f32 %v732, %v733
  %v735 = vrot.slane %v734, 2
  %v736 = vadd.f32 %v734, %v735
  %v737 = vrot.slane %v736, 1
  %v738 = vadd.f32 %v736, %v737
  %739 = vst [vmem:[%s4] sm:$0x1] %v738
  %v740 = vmul.f32 %v702, %v702
  %v741 = vmul.f32 %v703, %v703
  %v742 = vmul.f32 %v704, %v704
  %v743 = vmul.f32 %v705, %v705
  %v744 = vmul.f32 %v706, %v706
  %v745 = vmul.f32 %v707, %v707
  %v746 = vmul.f32 %v708, %v708
  %v747 = vmul.f32 %v709, %v709
  %v748 = vmul.f32 %v710, %v710
  %v749 = vmul.f32 %v711, %v711
  %v750 = vmul.f32 %v712, %v712
  %v751 = vmul.f32 %v713, %v713
  %v752 = vmul.f32 %v714, %v714
  %v753 = vmul.f32 %v715, %v715
  %v754 = vmul.f32 %v716, %v716
  %v755 = vmul.f32 %v717, %v717
  %v756 = vadd.f32 %v740, %v741
  %v757 = vadd.f32 %v756, %v742
  %v758 = vadd.f32 %v757, %v743
  %v759 = vadd.f32 %v758, %v744
  %v760 = vadd.f32 %v759, %v745
  %v761 = vadd.f32 %v760, %v746
  %v762 = vadd.f32 %v761, %v747
  %v763 = vadd.f32 %v762, %v748
  %v764 = vadd.f32 %v763, %v749
  %v765 = vadd.f32 %v764, %v750
  %v766 = vadd.f32 %v765, %v751
  %v767 = vadd.f32 %v766, %v752
  %v768 = vadd.f32 %v767, %v753
  %v769 = vadd.f32 %v768, %v754
  %v770 = vadd.f32 %v769, %v755
  %v771 = vrot.slane %v770, 4
  %v772 = vadd.f32 %v770, %v771
  %v773 = vrot.slane %v772, 2
  %v774 = vadd.f32 %v772, %v773
  %v775 = vrot.slane %v774, 1
  %v776 = vadd.f32 %v774, %v775
  %777 = vst [vmem:[%s5] sm:$0x1] %v776
  // Predicated region
  $region14: #{forward.26} parent=0 // pred_check
    _
  $region15: #{forward.26} parent=0 // pred_check_branch
    %779 = sbr.rel (0) target = $region17
  $region16: #{forward.26} parent=0 // pred_region
    _
  $region17: #{forward.26} parent=0 // pred_fallthru
    _
  // Predicated region
  $region18: #{forward.26} parent=0 // pred_check
    _
  $region19: #{forward.26} parent=0 // pred_check_branch
    %781 = sbr.rel (0) target = $region21
  $region20: #{forward.26} parent=0 // pred_region
    _
  $region21: #{forward.26} parent=0 // pred_fallthru
    _
  // Predicated region
  $region22: #{forward.26} parent=0 // pred_check
    _
  $region23: #{forward.26} parent=0 // pred_check_branch
    %783 = sbr.rel (0) target = $region25
  $region24: #{forward.26} parent=0 // pred_region
    _
  $region25: #{forward.26} parent=0 // pred_fallthru
    _
  // Predicated region
  $region26: #{forward.26} parent=0 // pred_check
    _
  $region27: #{forward.26} parent=0 // pred_check_branch
    %785 = sbr.rel (0) target = $region29
  $region28: #{forward.26} parent=0 // pred_region
    _
  $region29: #{forward.26} parent=0 // pred_fallthru
    _
  // Predicated region
  $region30: #{forward.26} parent=0 // pred_check
    _
  $region31: #{forward.26} parent=0 // pred_check_branch
    %787 = sbr.rel (0) target = $region33
  $region32: #{forward.26} parent=0 // pred_region
    _
  $region33: #{forward.26} parent=0 // pred_fallthru
    _
  // Predicated region
  $region34: #{forward.26} parent=0 // pred_check
    _
  $region35: #{forward.26} parent=0 // pred_check_branch
    %789 = sbr.rel (0) target = $region37
  $region36: #{forward.26} parent=0 // pred_region
    _
  $region37: #{forward.26} parent=0 // pred_fallthru
    _

</llo_original>
